<compile_context>
chip_gen: v7x
topology: tpu7x:2x2x1
jax: 0.10.0
libtpu: 0.0.40
codegen_flags: <defaults>
</compile_context>

<pallas_src>
import jax
import jax.numpy as jnp
from jax.experimental import pallas as pl
from jax.experimental.pallas import tpu as pltpu


def pointnet_encoder_kernel(x_ref, w1_ref, b1_ref, w2_ref, b2_ref,
                            w3_ref, b3_ref, o_ref, acc_ref):
    """One grid step: bb batch elements x bn points, channels-first.

    x_ref:   (bb, Cp, bn) f32  -- points are the lane-dense last dim
    w*_ref:  (out, in) bf16    -- (64, Cp), (128, 64), (feat, 128)
    b*_ref:  (out, 1) f32
    o_ref:   (bb, feat) f32
    acc_ref: (bb, feat, 128) f32 VMEM partial-max accumulator
    """
    nt = pl.program_id(1)                      # point-tile (reduction) index
    bb, _, bn = x_ref.shape

    @pl.when(nt == 0)
    def _():
        # Activations are post-ReLU (>= 0), so 0 is a valid identity for max.
        acc_ref[...] = jnp.zeros_like(acc_ref)

    # Hoisted once per grid step (outside the batch loop): weights and the
    # lane-broadcast biases (JAX does not CSE broadcast_in_dim inside loops).
    w1 = w1_ref[...]                           # (64, Cp)   bf16
    w2 = w2_ref[...]                           # (128, 64)  bf16
    w3 = w3_ref[...]                           # (feat,128) bf16
    b1 = jnp.broadcast_to(b1_ref[...], (w1.shape[0], bn))   # f32
    b2 = jnp.broadcast_to(b2_ref[...], (w2.shape[0], bn))
    b3 = jnp.broadcast_to(b3_ref[...], (w3.shape[0], bn))
    n_lane_groups = bn // 128

    @pl.loop(0, bb)
    def _(b):
        xb = x_ref[b].astype(jnp.bfloat16)     # (Cp, bn)
        # Shared per-point MLP in (features x points) orientation: all three
        # 1x1 convs are MXU matmuls with f32 accumulation; bias/ReLU in f32.
        h = jnp.dot(w1, xb, preferred_element_type=jnp.float32) + b1
        h = jnp.maximum(h, 0.0)
        h = jnp.dot(w2, h.astype(jnp.bfloat16),
                    preferred_element_type=jnp.float32) + b2
        h = jnp.maximum(h, 0.0)
        h = jnp.dot(w3, h.astype(jnp.bfloat16),
                    preferred_element_type=jnp.float32) + b3
        h = jnp.maximum(h, 0.0)                # (feat, bn) f32

        # Deferred max-pool: elementwise vmax of vreg-aligned 128-lane groups
        # (VPU only); the cross-lane XLU reduce happens once at the end.
        part = h[:, 0:128]
        for j in range(1, n_lane_groups):
            part = jnp.maximum(part, h[:, j * 128:(j + 1) * 128])
        acc_ref[b] = jnp.maximum(acc_ref[b], part)

    @pl.when(nt == pl.num_programs(1) - 1)
    def _():
        # Single cross-lane reduce per batch tile -> lane-dense (bb, feat) store.
        o_ref[...] = jnp.max(acc_ref[...], axis=-1).astype(o_ref.dtype)


def _round_up(v, m):
    return (v + m - 1) // m * m


def pointnet_encoder(x, params, *, block_b=8, block_n=1024):
    """PointNetEncoder forward. x: [B, N, C] f32 -> [B, feat_dim] f32."""
    w1, b1, w2, b2, w3, b3 = params            # w: (out, in) f32, b: (out, 1) f32
    B, N, C = x.shape
    h1 = w1.shape[0]
    h2 = w2.shape[0]
    feat = w3.shape[0]

    # Channels-first layout (Conv1d native): points become the lane-dense last
    # dim so the x DMA tiles are contiguous and ~40x smaller in VMEM.
    xcf = jnp.transpose(x, (0, 2, 1))          # (B, C, N)

    # Tile sizing: bb batch elems x bn points per step (default 8192 points,
    # ~400 MFLOP) amortizes the fixed per-step pipeline cost; keep grid[0] >= 2
    # when possible so v7x's two TensorCores both get batch tiles.
    bb = max(1, min(block_b, B))
    bn = _round_up(min(block_n, _round_up(N, 128)), 128)
    cp = _round_up(C, 8)                       # align the tiny contraction dim
    b_pad = _round_up(B, bb)
    n_pad = _round_up(N, bn)
    if (b_pad, cp, n_pad) != (B, C, N):
        # Edge-replicated points are max-invariant; padded channels hit zero
        # weight columns; extra batch rows are sliced off below.
        xcf = jnp.pad(xcf, ((0, b_pad - B), (0, cp - C), (0, n_pad - N)),
                      mode="edge")

    # bf16 MXU operands (accumulation stays f32 inside the kernel).
    w1p = jnp.pad(w1, ((0, 0), (0, cp - C))).astype(jnp.bfloat16)
    w2b = w2.astype(jnp.bfloat16)
    w3b = w3.astype(jnp.bfloat16)

    grid = (b_pad // bb, n_pad // bn)

    out = pl.pallas_call(
        pointnet_encoder_kernel,
        out_shape=jax.ShapeDtypeStruct((b_pad, feat), jnp.float32),
        grid_spec=pltpu.PrefetchScalarGridSpec(
            num_scalar_prefetch=0,
            grid=grid,
            in_specs=[
                pl.BlockSpec((bb, cp, bn), lambda b, n: (b, 0, n)),   # points
                pl.BlockSpec((h1, cp), lambda b, n: (0, 0)),          # W1 (64, Cp)
                pl.BlockSpec((h1, 1), lambda b, n: (0, 0)),           # b1
                pl.BlockSpec((h2, h1), lambda b, n: (0, 0)),          # W2 (128, 64)
                pl.BlockSpec((h2, 1), lambda b, n: (0, 0)),           # b2
                pl.BlockSpec((feat, h2), lambda b, n: (0, 0)),        # W3 (feat, 128)
                pl.BlockSpec((feat, 1), lambda b, n: (0, 0)),         # b3
            ],
            out_specs=pl.BlockSpec((bb, feat), lambda b, n: (b, 0)),
            scratch_shapes=[pltpu.VMEM((bb, feat, 128), jnp.float32)],
        ),
        compiler_params=pltpu.CompilerParams(
            dimension_semantics=("parallel", "arbitrary"),
            # Explicit budget: actual use is ~6 MiB at bb=8, bn=1024, so this is
            # comfortably inside v7x's 64 MiB VMEM and raises v5e's 16 MiB default.
            vmem_limit_bytes=32 * 1024 * 1024,
        ),
    )(xcf, w1p, b1, w2b, b2, w3b, b3)

    return out[:B]


def init_params(key, in_channels=3, feat_dim=128):
    """Deterministic synthetic parameters matching the PyTorch module's shapes.

    Conv1d(cin, cout, kernel_size=1) weight is [cout, cin, 1]; we store the
    squeezed [cout, cin] (out, in) form plus bias as [cout, 1].
    """
    dims = [(in_channels, 64), (64, 128), (128, feat_dim)]
    params = []
    for cin, cout in dims:
        kw, kb, key = jax.random.split(key, 3)
        bound = cin ** -0.5                    # PyTorch Conv1d default init range
        w = jax.random.uniform(kw, (cout, cin), jnp.float32, -bound, bound)
        b = jax.random.uniform(kb, (cout, 1), jnp.float32, -bound, bound)
        params += [w, b]
    return tuple(params)


def pointnet_encoder_ref(x, params):
    """Plain-JAX reference of the PyTorch forward; emulates the kernel's bf16
    MXU-operand rounding (f32 accumulation) so the comparison stays tight."""
    w1, b1, w2, b2, w3, b3 = params
    bf = jnp.bfloat16
    h = jnp.dot(x.astype(bf), w1.T.astype(bf),
                preferred_element_type=jnp.float32) + b1[:, 0]
    h = jnp.maximum(h, 0.0)
    h = jnp.dot(h.astype(bf), w2.T.astype(bf),
                preferred_element_type=jnp.float32) + b2[:, 0]
    h = jnp.maximum(h, 0.0)
    h = jnp.dot(h.astype(bf), w3.T.astype(bf),
                preferred_element_type=jnp.float32) + b3[:, 0]
    h = jnp.maximum(h, 0.0)
    return jnp.max(h, axis=1)


if __name__ == "__main__":
    key = jax.random.PRNGKey(0)
    k_x, k_p = jax.random.split(key)

    B, N, C, FEAT = 16, 2048, 3, 128           # grid (2, 2): 2 batch tiles, 2 point tiles
    x = jax.random.normal(k_x, (B, N, C), dtype=jnp.float32)
    params = init_params(k_p, in_channels=C, feat_dim=FEAT)

    out = jax.block_until_ready(pointnet_encoder(x, params))
    ref = pointnet_encoder_ref(x, params)
    assert out.shape == (B, FEAT), out.shape
    assert jnp.allclose(out, ref, atol=5e-3, rtol=5e-3), \
        float(jnp.max(jnp.abs(out - ref)))

    # Ragged shapes (B, N not multiples of the tile sizes) exercise the padding path.
    B2, N2 = 5, 300
    x2 = jax.random.normal(jax.random.PRNGKey(1), (B2, N2, C), dtype=jnp.float32)
    out2 = jax.block_until_ready(pointnet_encoder(x2, params))
    ref2 = pointnet_encoder_ref(x2, params)
    assert out2.shape == (B2, FEAT), out2.shape
    assert jnp.allclose(out2, ref2, atol=5e-3, rtol=5e-3), \
        float(jnp.max(jnp.abs(out2 - ref2)))

    print("KERNEL_OK")
</pallas_src>

<mosaic_0001>
module attributes {stable_mosaic.version = 11 : i64} {
  func.func @pointnet_encoder_kernel(%arg0: i32, %arg1: i32, %arg2: memref<8x8x1024xf32, #tpu.memory_space<vmem>>, %arg3: memref<64x8xbf16, #tpu.memory_space<vmem>>, %arg4: memref<64x1xf32, #tpu.memory_space<vmem>>, %arg5: memref<128x64xbf16, #tpu.memory_space<vmem>>, %arg6: memref<128x1xf32, #tpu.memory_space<vmem>>, %arg7: memref<128x128xbf16, #tpu.memory_space<vmem>>, %arg8: memref<128x1xf32, #tpu.memory_space<vmem>>, %arg9: memref<8x128xf32, #tpu.memory_space<vmem>>, %arg10: memref<8x128x128xf32, #tpu.memory_space<vmem>>) attributes {dimension_semantics = [#tpu.dimension_semantics<parallel>, #tpu.dimension_semantics<arbitrary>], iteration_bounds = array<i64: 2, 2>, scalar_prefetch = 0 : i64, scratch_operands = 1 : i64, tpu.core_type = #tpu.core_type<tc>, window_params = [{transform_indices = @transform_0, window_bounds = array<i64: 8, 8, 1024>}, {pipeline_mode = #tpu.pipeline_mode<synchronous>, transform_indices = @transform_1, window_bounds = array<i64: 64, 8>}, {pipeline_mode = #tpu.pipeline_mode<synchronous>, transform_indices = @transform_2, window_bounds = array<i64: 64, 1>}, {pipeline_mode = #tpu.pipeline_mode<synchronous>, transform_indices = @transform_3, window_bounds = array<i64: 128, 64>}, {pipeline_mode = #tpu.pipeline_mode<synchronous>, transform_indices = @transform_4, window_bounds = array<i64: 128, 1>}, {pipeline_mode = #tpu.pipeline_mode<synchronous>, transform_indices = @transform_5, window_bounds = array<i64: 128, 128>}, {pipeline_mode = #tpu.pipeline_mode<synchronous>, transform_indices = @transform_6, window_bounds = array<i64: 128, 1>}, {transform_indices = @transform_7, window_bounds = array<i64: 8, 128>}]} {
    %c0_i32 = arith.constant 0 : i32
    %0 = arith.cmpi eq, %arg1, %c0_i32 : i32
    %1 = arith.extui %0 : i1 to i32
    %c0_i32_0 = arith.constant 0 : i32
    %2 = arith.cmpi ne, %1, %c0_i32_0 : i32
    scf.if %2 {
      %cst = arith.constant 0.000000e+00 : f32
      %19 = vector.broadcast %cst : f32 to vector<8x128x128xf32>
      %c0_16 = arith.constant 0 : index
      %c0_17 = arith.constant 0 : index
      %c0_18 = arith.constant 0 : index
      %20 = vector.load %arg10[%c0_16, %c0_17, %c0_18] : memref<8x128x128xf32, #tpu.memory_space<vmem>>, vector<8x128x128xf32>
      tpu.vector_store %arg10[%c0_16, %c0_17, %c0_18], %19 {strides = array<i32>} : memref<8x128x128xf32, #tpu.memory_space<vmem>>, vector<8x128x128xf32>,
    } else {
    }
    %c0 = arith.constant 0 : index
    %c0_1 = arith.constant 0 : index
    %3 = vector.load %arg3[%c0, %c0_1] : memref<64x8xbf16, #tpu.memory_space<vmem>>, vector<64x8xbf16>
    %c0_2 = arith.constant 0 : index
    %c0_3 = arith.constant 0 : index
    %4 = vector.load %arg5[%c0_2, %c0_3] : memref<128x64xbf16, #tpu.memory_space<vmem>>, vector<128x64xbf16>
    %c0_4 = arith.constant 0 : index
    %c0_5 = arith.constant 0 : index
    %5 = vector.load %arg7[%c0_4, %c0_5] : memref<128x128xbf16, #tpu.memory_space<vmem>>, vector<128x128xbf16>
    %c0_6 = arith.constant 0 : index
    %c0_7 = arith.constant 0 : index
    %6 = vector.load %arg4[%c0_6, %c0_7] : memref<64x1xf32, #tpu.memory_space<vmem>>, vector<64x1xf32>
    %7 = vector.shape_cast %6 : vector<64x1xf32> to vector<64x1xf32>
    %8 = vector.broadcast %7 : vector<64x1xf32> to vector<64x1024xf32>
    %c0_8 = arith.constant 0 : index
    %c0_9 = arith.constant 0 : index
    %9 = vector.load %arg6[%c0_8, %c0_9] : memref<128x1xf32, #tpu.memory_space<vmem>>, vector<128x1xf32>
    %10 = vector.shape_cast %9 : vector<128x1xf32> to vector<128x1xf32>
    %11 = vector.broadcast %10 : vector<128x1xf32> to vector<128x1024xf32>
    %c0_10 = arith.constant 0 : index
    %c0_11 = arith.constant 0 : index
    %12 = vector.load %arg8[%c0_10, %c0_11] : memref<128x1xf32, #tpu.memory_space<vmem>>, vector<128x1xf32>
    %13 = vector.shape_cast %12 : vector<128x1xf32> to vector<128x1xf32>
    %14 = vector.broadcast %13 : vector<128x1xf32> to vector<128x1024xf32>
    %c0_i32_12 = arith.constant 0 : i32
    %c8_i32 = arith.constant 8 : i32
    %15 = arith.addi %c0_i32_12, %c8_i32 : i32
    %c1_i32 = arith.constant 1 : i32
    scf.for %arg11 = %c0_i32_12 to %15 step %c1_i32  : i32 {
      %c1_i32_16 = arith.constant 1 : i32
      %19 = arith.muli %arg11, %c1_i32_16 : i32
      %c0_i32_17 = arith.constant 0 : i32
      %20 = arith.addi %c0_i32_17, %19 : i32
      %21 = arith.index_cast %20 : i32 to index
      %c0_18 = arith.constant 0 : index
      %c0_19 = arith.constant 0 : index
      %22 = vector.load %arg2[%21, %c0_18, %c0_19] : memref<8x8x1024xf32, #tpu.memory_space<vmem>>, vector<1x8x1024xf32>
      %23 = vector.shape_cast %22 : vector<1x8x1024xf32> to vector<8x1024xf32>
      %24 = arith.truncf %23 : vector<8x1024xf32> to vector<8x1024xbf16>
      %cst = arith.constant dense<0.000000e+00> : vector<64x1024xf32>
      %25 = tpu.matmul %3, %24, %cst {dimension_numbers = #tpu.dot_dimension_numbers<[1], [0], [0], [1], [0, 0, 1, 1], [], []>} : vector<64x8xbf16>, vector<8x1024xbf16>, vector<64x1024xf32> -> vector<64x1024xf32>
      %26 = arith.addf %25, %8 : vector<64x1024xf32>
      %cst_20 = arith.constant 0.000000e+00 : f32
      %27 = vector.broadcast %cst_20 : f32 to vector<64x1024xf32>
      %28 = arith.maximumf %26, %27 : vector<64x1024xf32>
      %29 = arith.truncf %28 : vector<64x1024xf32> to vector<64x1024xbf16>
      %cst_21 = arith.constant dense<0.000000e+00> : vector<128x1024xf32>
      %30 = tpu.matmul %4, %29, %cst_21 {dimension_numbers = #tpu.dot_dimension_numbers<[1], [0], [0], [1], [0, 0, 1, 1], [], []>} : vector<128x64xbf16>, vector<64x1024xbf16>, vector<128x1024xf32> -> vector<128x1024xf32>
      %31 = arith.addf %30, %11 : vector<128x1024xf32>
      %cst_22 = arith.constant 0.000000e+00 : f32
      %32 = vector.broadcast %cst_22 : f32 to vector<128x1024xf32>
      %33 = arith.maximumf %31, %32 : vector<128x1024xf32>
      %34 = arith.truncf %33 : vector<128x1024xf32> to vector<128x1024xbf16>
      %cst_23 = arith.constant dense<0.000000e+00> : vector<128x1024xf32>
      %35 = tpu.matmul %5, %34, %cst_23 {dimension_numbers = #tpu.dot_dimension_numbers<[1], [0], [0], [1], [0, 0, 1, 1], [], []>} : vector<128x128xbf16>, vector<128x1024xbf16>, vector<128x1024xf32> -> vector<128x1024xf32>
      %36 = arith.addf %35, %14 : vector<128x1024xf32>
      %cst_24 = arith.constant 0.000000e+00 : f32
      %37 = vector.broadcast %cst_24 : f32 to vector<128x1024xf32>
      %38 = arith.maximumf %36, %37 : vector<128x1024xf32>
      %39 = vector.extract_strided_slice %38 {offsets = [0, 0], sizes = [128, 128], strides = [1, 1]} : vector<128x1024xf32> to vector<128x128xf32>
      %40 = vector.extract_strided_slice %38 {offsets = [0, 128], sizes = [128, 128], strides = [1, 1]} : vector<128x1024xf32> to vector<128x128xf32>
      %41 = arith.maximumf %39, %40 : vector<128x128xf32>
      %42 = vector.extract_strided_slice %38 {offsets = [0, 256], sizes = [128, 128], strides = [1, 1]} : vector<128x1024xf32> to vector<128x128xf32>
      %43 = arith.maximumf %41, %42 : vector<128x128xf32>
      %44 = vector.extract_strided_slice %38 {offsets = [0, 384], sizes = [128, 128], strides = [1, 1]} : vector<128x1024xf32> to vector<128x128xf32>
      %45 = arith.maximumf %43, %44 : vector<128x128xf32>
      %46 = vector.extract_strided_slice %38 {offsets = [0, 512], sizes = [128, 128], strides = [1, 1]} : vector<128x1024xf32> to vector<128x128xf32>
      %47 = arith.maximumf %45, %46 : vector<128x128xf32>
      %48 = vector.extract_strided_slice %38 {offsets = [0, 640], sizes = [128, 128], strides = [1, 1]} : vector<128x1024xf32> to vector<128x128xf32>
      %49 = arith.maximumf %47, %48 : vector<128x128xf32>
      %50 = vector.extract_strided_slice %38 {offsets = [0, 768], sizes = [128, 128], strides = [1, 1]} : vector<128x1024xf32> to vector<128x128xf32>
      %51 = arith.maximumf %49, %50 : vector<128x128xf32>
      %52 = vector.extract_strided_slice %38 {offsets = [0, 896], sizes = [128, 128], strides = [1, 1]} : vector<128x1024xf32> to vector<128x128xf32>
      %53 = arith.maximumf %51, %52 : vector<128x128xf32>
      %54 = arith.index_cast %20 : i32 to index
      %c0_25 = arith.constant 0 : index
      %c0_26 = arith.constant 0 : index
      %55 = vector.load %arg10[%54, %c0_25, %c0_26] : memref<8x128x128xf32, #tpu.memory_space<vmem>>, vector<1x128x128xf32>
      %56 = vector.shape_cast %55 : vector<1x128x128xf32> to vector<128x128xf32>
      %57 = arith.maximumf %56, %53 : vector<128x128xf32>
      %58 = arith.index_cast %20 : i32 to index
      %c0_27 = arith.constant 0 : index
      %c0_28 = arith.constant 0 : index
      %59 = vector.load %arg10[%58, %c0_27, %c0_28] : memref<8x128x128xf32, #tpu.memory_space<vmem>>, vector<1x128x128xf32>
      %60 = vector.shape_cast %59 : vector<1x128x128xf32> to vector<128x128xf32>
      %61 = vector.shape_cast %57 : vector<128x128xf32> to vector<1x128x128xf32>
      tpu.vector_store %arg10[%58, %c0_27, %c0_28], %61 {strides = array<i32>} : memref<8x128x128xf32, #tpu.memory_space<vmem>>, vector<1x128x128xf32>,
    }
    %c8_i32_13 = arith.constant 8 : i32
    %c1_i32_14 = arith.constant 1 : i32
    %16 = arith.cmpi eq, %arg1, %c1_i32_14 : i32
    %17 = arith.extui %16 : i1 to i32
    %c0_i32_15 = arith.constant 0 : i32
    %18 = arith.cmpi ne, %17, %c0_i32_15 : i32
    scf.if %18 {
      %c0_16 = arith.constant 0 : index
      %c0_17 = arith.constant 0 : index
      %c0_18 = arith.constant 0 : index
      %19 = vector.load %arg10[%c0_16, %c0_17, %c0_18] : memref<8x128x128xf32, #tpu.memory_space<vmem>>, vector<8x128x128xf32>
      %cst = arith.constant dense<0xFF800000> : vector<8x128xf32>
      %20 = vector.multi_reduction <maximumf>, %19, %cst [2] : vector<8x128x128xf32> to vector<8x128xf32>
      %c0_19 = arith.constant 0 : index
      %c0_20 = arith.constant 0 : index
      %21 = vector.load %arg9[%c0_19, %c0_20] : memref<8x128xf32, #tpu.memory_space<vmem>>, vector<8x128xf32>
      tpu.vector_store %arg9[%c0_19, %c0_20], %20 {strides = array<i32>} : memref<8x128xf32, #tpu.memory_space<vmem>>, vector<8x128xf32>,
    } else {
    }
    return
  }
  func.func @transform_0(%arg0: i32, %arg1: i32) -> (i32, i32, i32) {
    %c0_i32 = arith.constant 0 : i32
    %c0_i32_0 = arith.constant 0 : i32
    return %arg0, %c0_i32, %arg1 : i32, i32, i32
  }
  func.func @transform_1(%arg0: i32, %arg1: i32) -> (i32, i32) {
    %c0_i32 = arith.constant 0 : i32
    %c0_i32_0 = arith.constant 0 : i32
    %c0_i32_1 = arith.constant 0 : i32
    return %c0_i32, %c0_i32_0 : i32, i32
  }
  func.func @transform_2(%arg0: i32, %arg1: i32) -> (i32, i32) {
    %c0_i32 = arith.constant 0 : i32
    %c0_i32_0 = arith.constant 0 : i32
    %c0_i32_1 = arith.constant 0 : i32
    return %c0_i32, %c0_i32_0 : i32, i32
  }
  func.func @transform_3(%arg0: i32, %arg1: i32) -> (i32, i32) {
    %c0_i32 = arith.constant 0 : i32
    %c0_i32_0 = arith.constant 0 : i32
    %c0_i32_1 = arith.constant 0 : i32
    return %c0_i32, %c0_i32_0 : i32, i32
  }
  func.func @transform_4(%arg0: i32, %arg1: i32) -> (i32, i32) {
    %c0_i32 = arith.constant 0 : i32
    %c0_i32_0 = arith.constant 0 : i32
    %c0_i32_1 = arith.constant 0 : i32
    return %c0_i32, %c0_i32_0 : i32, i32
  }
  func.func @transform_5(%arg0: i32, %arg1: i32) -> (i32, i32) {
    %c0_i32 = arith.constant 0 : i32
    %c0_i32_0 = arith.constant 0 : i32
    %c0_i32_1 = arith.constant 0 : i32
    return %c0_i32, %c0_i32_0 : i32, i32
  }
  func.func @transform_6(%arg0: i32, %arg1: i32) -> (i32, i32) {
    %c0_i32 = arith.constant 0 : i32
    %c0_i32_0 = arith.constant 0 : i32
    %c0_i32_1 = arith.constant 0 : i32
    return %c0_i32, %c0_i32_0 : i32, i32
  }
  func.func @transform_7(%arg0: i32, %arg1: i32) -> (i32, i32) {
    %c0_i32 = arith.constant 0 : i32
    %c0_i32_0 = arith.constant 0 : i32
    return %arg0, %c0_i32 : i32, i32
  }
}

</mosaic_0001>

<llo_original>
// kernel: tpu_custom_call.1
$region0: #{tpu_custom_call.1}
  #allocation0 [shape = 'u32[]', space=smem, size = 0x4, offset = 0x4, fixed_abs, tag = 'smem constant byte address 0x4 - core index']
  #allocation1 [shape = 'u32[144,128]{1,0:T(1,128)}', space=vmem, size = 0x12000, scoped, tag = 'internal scratch']
  #allocation2 [shape = 'f32[8,128,128]{2,1,0:T(8,128)}', space=vmem, size = 0x80000, scoped, tag = 'scratch operand']
  %s0 = inlined_call_operand.hbm [shape: f32[16,8,2048], index: 0, kind: input, shape index: {}]
  %s1 = inlined_call_operand.vmem [shape: bf16[64,8], index: 1, kind: input, shape index: {}]
  %s2 = inlined_call_operand.vmem [shape: f32[64,1], index: 2, kind: input, shape index: {}]
  %s3 = inlined_call_operand.vmem [shape: bf16[128,64], index: 3, kind: input, shape index: {}]
  %s4 = inlined_call_operand.vmem [shape: f32[128,1], index: 4, kind: input, shape index: {}]
  %s5 = inlined_call_operand.vmem [shape: bf16[128,128], index: 5, kind: input, shape index: {}]
  %s6 = inlined_call_operand.vmem [shape: f32[128,1], index: 6, kind: input, shape index: {}]
  %s7 = inlined_call_operand.hbm [shape: f32[16,128], index: 7, kind: output, shape index: {}]
  %s8 = sld [smem:[#allocation0]]
  $region80: #{tpu_custom_call.1} parent=0
    _
  %s10 = ssub.s32 1, %s8
  %s11 = scalar_select 0, %s10, %s8
  $region1: #{tpu_custom_call.1} parent=0
    #allocation3 [shape = 'u8[524288]{0}', space=vmem, size = 0x80000, scoped, tag = 'input window, operand 0']
    #allocation4 [shape = 's32[2]{0}', space=sflag, size = 0x8, scoped, tag = 'scoped memory for tpu_custom_call.1']
    #allocation5 [shape = 's32[2]{0}', space=sflag, size = 0x8, scoped, tag = 'scoped memory for tpu_custom_call.1']
    #allocation6 [shape = 'u8[8192]{0}', space=vmem, size = 0x2000, scoped, tag = 'output window, operand 0']
    %12 = vsyncpa [#allocation4], 0
    %s13 = scalar_lea.sflag [#allocation4], 1
    %14 = vsyncpa %s13, 0
    %15 = vsyncpa [#allocation5], 0
    %s16 = scalar_lea.sflag [#allocation5], 1
    %17 = vsyncpa %s16, 0
    loop: start=0, step=1, limit=6
    $region2: #{tpu_custom_call.1} parent=1 // loop_pre_header
      _
    $region3: #{tpu_custom_call.1} parent=1 // loop_header
      %s19 = sphi 0, %s23
      %p20 = scmp.ge.s32.totalorder %s19, 6
      %s26 = sphi 0, %s38
      %s27 = sphi 0, %s34
      %s28 = sphi 0, %s26
      %s29 = sphi 0, %s27
      %s30 = sphi 0, %s28
      %s31 = sphi 0, %s29
      %s43 = sphi 0, %s45
      %s46 = sphi 0, %s43
      %s47 = sphi 0, %s46
      %s63 = sphi 0, %s47
      %s67 = sphi 0, %s67
      %s69 = sphi 0, %s67
      %s70 = sphi 0, %s69
      %s84 = sphi 0, %s70
      %s88 = sphi 0, %s88
      %s90 = sphi 0, %s88
      %s91 = sphi 0, %s90
      %s105 = sphi 0, %s91
      %s109 = sphi 0, %s109
      %s111 = sphi 0, %s109
      %s112 = sphi 0, %s111
      %s126 = sphi 0, %s112
      %s130 = sphi 0, %s130
      %s132 = sphi 0, %s130
      %s133 = sphi 0, %s132
      %s147 = sphi 0, %s133
      %s151 = sphi 0, %s151
      %s153 = sphi 0, %s151
      %s154 = sphi 0, %s153
      %s168 = sphi 0, %s154
      %s172 = sphi 0, %s172
      %s174 = sphi 0, %s172
      %s175 = sphi 0, %s174
      %s189 = sphi 0, %s175
      %s195 = sphi 0, %s197
      %s198 = sphi 0, %s195
      %s199 = sphi 0, %s198
      %s215 = sphi 0, %s199
    $region4: #{tpu_custom_call.1} parent=1 // loop_header_branch
      %22 = sbr.rel (%p20) target = $region8
    $region5: #{tpu_custom_call.1} parent=1 // loop_body
      %s24 = ssub.s32 %s19, 1
      %s25 = ssub.s32 %s19, 2
      %s32 = sadd.s32 1, %s27
      %p33 = scmp.ge.s32.totalorder %s32, 2
      %s34 = scalar_select %p33, 0, %s32
      %s35 = sadd.s32 1, %s26
      %s36 = scalar_select %p33, %s35, %s26
      %p37 = scmp.ge.s32.totalorder %s36, 2
      %s38 = scalar_select %p37, 0, %s36
      %s39 = ssub.s32 %s26, %s38
      %s40 = ssub.s32 %s27, %s34
      %s41 = sor.u32 %s39, %s40
      %p42 = scmp.eq.s32.totalorder %s41, 0
      %s44 = sadd.s32 %s43, 1
      %s45 = scalar_select %p42, %s43, %s44
      %p48 = pneg %p42
      %p49 = scmp.eq.s32.totalorder %s19, 3
      %p50 = por %p48, %p49
      %p51 = scmp.ne.s32.totalorder %s43, %s46
      %p52 = scmp.eq.s32.totalorder %s19, 0
      %p53 = por %p51, %p52
      %p54 = scmp.ne.s32.totalorder %s43, %s46
      %p55 = scmp.eq.s32.totalorder %s24, 3
      %p56 = por %p54, %p55
      %p57 = scmp.ne.s32.totalorder %s46, %s47
      %p58 = scmp.eq.s32.totalorder %s24, 0
      %p59 = por %p57, %p58
      %p60 = scmp.ne.s32.totalorder %s46, %s47
      %p61 = scmp.eq.s32.totalorder %s25, 3
      %p62 = por %p60, %p61
      %p64 = scmp.ne.s32.totalorder %s47, %s63
      %p65 = scmp.eq.s32.totalorder %s25, 0
      %p66 = por %p64, %p65
      %s68 = sadd.s32 %s67, 1
      %p71 = scmp.eq.s32.totalorder %s19, 3
      %p72 = scmp.ne.s32.totalorder %s67, %s69
      %p73 = scmp.eq.s32.totalorder %s19, 0
      %p74 = por %p72, %p73
      %p75 = scmp.ne.s32.totalorder %s67, %s69
      %p76 = scmp.eq.s32.totalorder %s24, 3
      %p77 = por %p75, %p76
      %p78 = scmp.ne.s32.totalorder %s69, %s70
      %p79 = scmp.eq.s32.totalorder %s24, 0
      %p80 = por %p78, %p79
      %p81 = scmp.ne.s32.totalorder %s69, %s70
      %p82 = scmp.eq.s32.totalorder %s25, 3
      %p83 = por %p81, %p82
      %p85 = scmp.ne.s32.totalorder %s70, %s84
      %p86 = scmp.eq.s32.totalorder %s25, 0
      %p87 = por %p85, %p86
      %s89 = sadd.s32 %s88, 1
      %p92 = scmp.eq.s32.totalorder %s19, 3
      %p93 = scmp.ne.s32.totalorder %s88, %s90
      %p94 = scmp.eq.s32.totalorder %s19, 0
      %p95 = por %p93, %p94
      %p96 = scmp.ne.s32.totalorder %s88, %s90
      %p97 = scmp.eq.s32.totalorder %s24, 3
      %p98 = por %p96, %p97
      %p99 = scmp.ne.s32.totalorder %s90, %s91
      %p100 = scmp.eq.s32.totalorder %s24, 0
      %p101 = por %p99, %p100
      %p102 = scmp.ne.s32.totalorder %s90, %s91
      %p103 = scmp.eq.s32.totalorder %s25, 3
      %p104 = por %p102, %p103
      %p106 = scmp.ne.s32.totalorder %s91, %s105
      %p107 = scmp.eq.s32.totalorder %s25, 0
      %p108 = por %p106, %p107
      %s110 = sadd.s32 %s109, 1
      %p113 = scmp.eq.s32.totalorder %s19, 3
      %p114 = scmp.ne.s32.totalorder %s109, %s111
      %p115 = scmp.eq.s32.totalorder %s19, 0
      %p116 = por %p114, %p115
      %p117 = scmp.ne.s32.totalorder %s109, %s111
      %p118 = scmp.eq.s32.totalorder %s24, 3
      %p119 = por %p117, %p118
      %p120 = scmp.ne.s32.totalorder %s111, %s112
      %p121 = scmp.eq.s32.totalorder %s24, 0
      %p122 = por %p120, %p121
      %p123 = scmp.ne.s32.totalorder %s111, %s112
      %p124 = scmp.eq.s32.totalorder %s25, 3
      %p125 = por %p123, %p124
      %p127 = scmp.ne.s32.totalorder %s112, %s126
      %p128 = scmp.eq.s32.totalorder %s25, 0
      %p129 = por %p127, %p128
      %s131 = sadd.s32 %s130, 1
      %p134 = scmp.eq.s32.totalorder %s19, 3
      %p135 = scmp.ne.s32.totalorder %s130, %s132
      %p136 = scmp.eq.s32.totalorder %s19, 0
      %p137 = por %p135, %p136
      %p138 = scmp.ne.s32.totalorder %s130, %s132
      %p139 = scmp.eq.s32.totalorder %s24, 3
      %p140 = por %p138, %p139
      %p141 = scmp.ne.s32.totalorder %s132, %s133
      %p142 = scmp.eq.s32.totalorder %s24, 0
      %p143 = por %p141, %p142
      %p144 = scmp.ne.s32.totalorder %s132, %s133
      %p145 = scmp.eq.s32.totalorder %s25, 3
      %p146 = por %p144, %p145
      %p148 = scmp.ne.s32.totalorder %s133, %s147
      %p149 = scmp.eq.s32.totalorder %s25, 0
      %p150 = por %p148, %p149
      %s152 = sadd.s32 %s151, 1
      %p155 = scmp.eq.s32.totalorder %s19, 3
      %p156 = scmp.ne.s32.totalorder %s151, %s153
      %p157 = scmp.eq.s32.totalorder %s19, 0
      %p158 = por %p156, %p157
      %p159 = scmp.ne.s32.totalorder %s151, %s153
      %p160 = scmp.eq.s32.totalorder %s24, 3
      %p161 = por %p159, %p160
      %p162 = scmp.ne.s32.totalorder %s153, %s154
      %p163 = scmp.eq.s32.totalorder %s24, 0
      %p164 = por %p162, %p163
      %p165 = scmp.ne.s32.totalorder %s153, %s154
      %p166 = scmp.eq.s32.totalorder %s25, 3
      %p167 = por %p165, %p166
      %p169 = scmp.ne.s32.totalorder %s154, %s168
      %p170 = scmp.eq.s32.totalorder %s25, 0
      %p171 = por %p169, %p170
      %s173 = sadd.s32 %s172, 1
      %p176 = scmp.eq.s32.totalorder %s19, 3
      %p177 = scmp.ne.s32.totalorder %s172, %s174
      %p178 = scmp.eq.s32.totalorder %s19, 0
      %p179 = por %p177, %p178
      %p180 = scmp.ne.s32.totalorder %s172, %s174
      %p181 = scmp.eq.s32.totalorder %s24, 3
      %p182 = por %p180, %p181
      %p183 = scmp.ne.s32.totalorder %s174, %s175
      %p184 = scmp.eq.s32.totalorder %s24, 0
      %p185 = por %p183, %p184
      %p186 = scmp.ne.s32.totalorder %s174, %s175
      %p187 = scmp.eq.s32.totalorder %s25, 3
      %p188 = por %p186, %p187
      %p190 = scmp.ne.s32.totalorder %s175, %s189
      %p191 = scmp.eq.s32.totalorder %s25, 0
      %p192 = por %p190, %p191
      %s193 = ssub.s32 %s26, %s38
      %p194 = scmp.eq.s32.totalorder %s193, 0
      %s196 = sadd.s32 %s195, 1
      %s197 = scalar_select %p194, %s195, %s196
      %p200 = pneg %p194
      %p201 = scmp.eq.s32.totalorder %s19, 3
      %p202 = por %p200, %p201
      %p203 = scmp.ne.s32.totalorder %s195, %s198
      %p204 = scmp.eq.s32.totalorder %s19, 0
      %p205 = por %p203, %p204
      %p206 = scmp.ne.s32.totalorder %s195, %s198
      %p207 = scmp.eq.s32.totalorder %s24, 3
      %p208 = por %p206, %p207
      %p209 = scmp.ne.s32.totalorder %s198, %s199
      %p210 = scmp.eq.s32.totalorder %s24, 0
      %p211 = por %p209, %p210
      %p212 = scmp.ne.s32.totalorder %s198, %s199
      %p213 = scmp.eq.s32.totalorder %s25, 3
      %p214 = por %p212, %p213
      %p216 = scmp.ne.s32.totalorder %s199, %s215
      %p217 = scmp.eq.s32.totalorder %s25, 0
      %p218 = por %p216, %p217
      %p219 = scmp.le.s32.totalorder 1, %s19
      %p220 = scmp.lt.s32.totalorder %s19, 5
      %p221 = pnand %p219, %p220
      %p222 = pneg %p221
      // Predicated region
      $region9: #{tpu_custom_call.1} parent=5 // pred_check
        _
      $region10: #{tpu_custom_call.1} parent=5 // pred_check_branch
        %224 = sbr.rel (%p221) target = $region12
      $region11: #{tpu_custom_call.1} parent=5 // pred_region
        %s225 = ssub.s32 %s19, 1
        // Predicated region
        $region13: #{tpu_custom_call.1} parent=11 // pred_check
          %p226 = pneg %p80
        $region14: #{tpu_custom_call.1} parent=11 // pred_check_branch
          %228 = sbr.rel (%p226) target = $region16
        $region15: #{tpu_custom_call.1} parent=11 // pred_region
          _
        $region16: #{tpu_custom_call.1} parent=11 // pred_fallthru
          _
        // Predicated region
        $region17: #{tpu_custom_call.1} parent=11 // pred_check
          %p229 = pneg %p101
        $region18: #{tpu_custom_call.1} parent=11 // pred_check_branch
          %231 = sbr.rel (%p229) target = $region20
        $region19: #{tpu_custom_call.1} parent=11 // pred_region
          _
        $region20: #{tpu_custom_call.1} parent=11 // pred_fallthru
          _
        // Predicated region
        $region21: #{tpu_custom_call.1} parent=11 // pred_check
          %p232 = pneg %p122
        $region22: #{tpu_custom_call.1} parent=11 // pred_check_branch
          %234 = sbr.rel (%p232) target = $region24
        $region23: #{tpu_custom_call.1} parent=11 // pred_region
          _
        $region24: #{tpu_custom_call.1} parent=11 // pred_fallthru
          _
        // Predicated region
        $region25: #{tpu_custom_call.1} parent=11 // pred_check
          %p235 = pneg %p143
        $region26: #{tpu_custom_call.1} parent=11 // pred_check_branch
          %237 = sbr.rel (%p235) target = $region28
        $region27: #{tpu_custom_call.1} parent=11 // pred_region
          _
        $region28: #{tpu_custom_call.1} parent=11 // pred_fallthru
          _
        // Predicated region
        $region29: #{tpu_custom_call.1} parent=11 // pred_check
          %p238 = pneg %p164
        $region30: #{tpu_custom_call.1} parent=11 // pred_check_branch
          %240 = sbr.rel (%p238) target = $region32
        $region31: #{tpu_custom_call.1} parent=11 // pred_region
          _
        $region32: #{tpu_custom_call.1} parent=11 // pred_fallthru
          _
        // Predicated region
        $region33: #{tpu_custom_call.1} parent=11 // pred_check
          %p241 = pneg %p185
        $region34: #{tpu_custom_call.1} parent=11 // pred_check_branch
          %243 = sbr.rel (%p241) target = $region36
        $region35: #{tpu_custom_call.1} parent=11 // pred_region
          _
        $region36: #{tpu_custom_call.1} parent=11 // pred_fallthru
          _
      $region12: #{tpu_custom_call.1} parent=5 // pred_fallthru
        _
      %p244 = scmp.lt.s32.totalorder %s19, 4
      // Predicated region
      $region37: #{tpu_custom_call.1} parent=5 // pred_check
        %p245 = pneg %p244
      $region38: #{tpu_custom_call.1} parent=5 // pred_check_branch
        %247 = sbr.rel (%p245) target = $region40
      $region39: #{tpu_custom_call.1} parent=5 // pred_region
        // Predicated region
        $region41: #{tpu_custom_call.1} parent=39 // pred_check
          %p248 = pneg %p53
        $region42: #{tpu_custom_call.1} parent=39 // pred_check_branch
          %250 = sbr.rel (%p248) target = $region44
        $region43: #{tpu_custom_call.1} parent=39 // pred_region
          %s251 = sand.u32 %s43, 1
          %s252 = scalar_lea.sflag [#allocation4], %s251
          %s253 = sand.u32 %s43, 1
          %s254 = smul.addr %s253, 512
          %s255 = scalar_lea.vmem [#allocation3], %s254
          %s256 = smul.u32 8, %s26
          %s257 = smul.u32 8, %s27
          %s259 = ssub.s32 8192, 8192
          %260 = vsyncadd %s252, %s259
          %s261 = smul.addr %s256, 16
          %s262 = sadd.s32 %s257, %s261
          %s263 = smul.addr %s262, 128
          %s264 = scalar_lea.hbm %s0, %s263
          %s265 = sshll.u32 %s255, 4
          %s266 = int_to_ptr.vmem [resolvable:$true] %s265
          %271 = dma.hbm_to_vmem [thread:$0]  %s264, 8192, %s266, %s252, 2048, 1024, 64
        $region44: #{tpu_custom_call.1} parent=39 // pred_fallthru
          _
      $region40: #{tpu_custom_call.1} parent=5 // pred_fallthru
        _
      %p272 = scmp.le.s32.totalorder 1, %s19
      %p273 = scmp.lt.s32.totalorder %s19, 5
      %p274 = pnand %p272, %p273
      %p275 = pneg %p274
      // Predicated region
      $region45: #{tpu_custom_call.1} parent=5 // pred_check
        _
      $region46: #{tpu_custom_call.1} parent=5 // pred_check_branch
        %277 = sbr.rel (%p274) target = $region48
      $region47: #{tpu_custom_call.1} parent=5 // pred_region
        %s278 = ssub.s32 %s19, 1
        %s279 = sand.u32 %s46, 1
        %s280 = scalar_lea.sflag [#allocation4], %s279
        %s281 = sand.u32 %s46, 1
        %s282 = smul.addr %s281, 512
        %s283 = scalar_lea.vmem [#allocation3], %s282
        // Predicated region
        $region49: #{tpu_custom_call.1} parent=47 // pred_check
          %p284 = pneg %p59
        $region50: #{tpu_custom_call.1} parent=47 // pred_check_branch
          %286 = sbr.rel (%p284) target = $region52
        $region51: #{tpu_custom_call.1} parent=47 // pred_region
          %287 = dma.done %s280, 8192
        $region52: #{tpu_custom_call.1} parent=47 // pred_fallthru
          _
        %s288 = sand.u32 %s46, 1
        %s289 = scalar_lea.sflag [#allocation4], %s288
        %s290 = sand.u32 %s46, 1
        %s291 = smul.addr %s290, 512
        %s292 = scalar_lea.vmem [#allocation3], %s291
        %p293 = pneg %p59
        %p294 = pneg %p56
        %p295 = pneg %p80
        %p296 = pneg %p77
        %p297 = pneg %p101
        %p298 = pneg %p98
        %p299 = pneg %p122
        %p300 = pneg %p119
        %p301 = pneg %p143
        %p302 = pneg %p140
        %p303 = pneg %p164
        %p304 = pneg %p161
        %p305 = pneg %p185
        %p306 = pneg %p182
        %p307 = pneg %p211
        %p308 = pneg %p208
        %s309 = sand.u32 %s198, 1
        %s310 = scalar_lea.sflag [#allocation5], %s309
        %s311 = sand.u32 %s198, 1
        %s312 = smul.addr %s311, 8
        %s313 = scalar_lea.vmem [#allocation6], %s312
        %s314 = smul.u32 8, %s28
        %s315 = smul.u32 8, %s29
        %p317 = scmp.eq.s32.totalorder %s29, 0
        // Predicated region
        $region53: #{tpu_custom_call.1} parent=47 // pred_check
          %p318 = pneg %p317
        $region54: #{tpu_custom_call.1} parent=47 // pred_check_branch
          %320 = sbr.rel (%p318) target = $region56
        $region55: #{tpu_custom_call.1} parent=47 // pred_region
          %321 = vst [vmem:[#allocation2] sm:$0xff] 0.0
          %322 = vst [vmem:[#allocation2 + $0x8] sm:$0xff] 0.0
          %323 = vst [vmem:[#allocation2 + $0x10] sm:$0xff] 0.0
          %324 = vst [vmem:[#allocation2 + $0x18] sm:$0xff] 0.0
          %325 = vst [vmem:[#allocation2 + $0x20] sm:$0xff] 0.0
          %326 = vst [vmem:[#allocation2 + $0x28] sm:$0xff] 0.0
          %327 = vst [vmem:[#allocation2 + $0x30] sm:$0xff] 0.0
          %328 = vst [vmem:[#allocation2 + $0x38] sm:$0xff] 0.0
          %329 = vst [vmem:[#allocation2 + $0x40] sm:$0xff] 0.0
          %330 = vst [vmem:[#allocation2 + $0x48] sm:$0xff] 0.0
          %331 = vst [vmem:[#allocation2 + $0x50] sm:$0xff] 0.0
          %332 = vst [vmem:[#allocation2 + $0x58] sm:$0xff] 0.0
          %333 = vst [vmem:[#allocation2 + $0x60] sm:$0xff] 0.0
          %334 = vst [vmem:[#allocation2 + $0x68] sm:$0xff] 0.0
          %335 = vst [vmem:[#allocation2 + $0x70] sm:$0xff] 0.0
          %336 = vst [vmem:[#allocation2 + $0x78] sm:$0xff] 0.0
          %337 = vst [vmem:[#allocation2 + $0x80] sm:$0xff] 0.0
          %338 = vst [vmem:[#allocation2 + $0x88] sm:$0xff] 0.0
          %339 = vst [vmem:[#allocation2 + $0x90] sm:$0xff] 0.0
          %340 = vst [vmem:[#allocation2 + $0x98] sm:$0xff] 0.0
          %341 = vst [vmem:[#allocation2 + $0xa0] sm:$0xff] 0.0
          %342 = vst [vmem:[#allocation2 + $0xa8] sm:$0xff] 0.0
          %343 = vst [vmem:[#allocation2 + $0xb0] sm:$0xff] 0.0
          %344 = vst [vmem:[#allocation2 + $0xb8] sm:$0xff] 0.0
          %345 = vst [vmem:[#allocation2 + $0xc0] sm:$0xff] 0.0
          %346 = vst [vmem:[#allocation2 + $0xc8] sm:$0xff] 0.0
          %347 = vst [vmem:[#allocation2 + $0xd0] sm:$0xff] 0.0
          %348 = vst [vmem:[#allocation2 + $0xd8] sm:$0xff] 0.0
          %349 = vst [vmem:[#allocation2 + $0xe0] sm:$0xff] 0.0
          %350 = vst [vmem:[#allocation2 + $0xe8] sm:$0xff] 0.0
          %351 = vst [vmem:[#allocation2 + $0xf0] sm:$0xff] 0.0
          %352 = vst [vmem:[#allocation2 + $0xf8] sm:$0xff] 0.0
          %353 = vst [vmem:[#allocation2 + $0x100] sm:$0xff] 0.0
          %354 = vst [vmem:[#allocation2 + $0x108] sm:$0xff] 0.0
          %355 = vst [vmem:[#allocation2 + $0x110] sm:$0xff] 0.0
          %356 = vst [vmem:[#allocation2 + $0x118] sm:$0xff] 0.0
          %357 = vst [vmem:[#allocation2 + $0x120] sm:$0xff] 0.0
          %358 = vst [vmem:[#allocation2 + $0x128] sm:$0xff] 0.0
          %359 = vst [vmem:[#allocation2 + $0x130] sm:$0xff] 0.0
          %360 = vst [vmem:[#allocation2 + $0x138] sm:$0xff] 0.0
          %361 = vst [vmem:[#allocation2 + $0x140] sm:$0xff] 0.0
          %362 = vst [vmem:[#allocation2 + $0x148] sm:$0xff] 0.0
          %363 = vst [vmem:[#allocation2 + $0x150] sm:$0xff] 0.0
          %364 = vst [vmem:[#allocation2 + $0x158] sm:$0xff] 0.0
          %365 = vst [vmem:[#allocation2 + $0x160] sm:$0xff] 0.0
          %366 = vst [vmem:[#allocation2 + $0x168] sm:$0xff] 0.0
          %367 = vst [vmem:[#allocation2 + $0x170] sm:$0xff] 0.0
          %368 = vst [vmem:[#allocation2 + $0x178] sm:$0xff] 0.0
          %369 = vst [vmem:[#allocation2 + $0x180] sm:$0xff] 0.0
          %370 = vst [vmem:[#allocation2 + $0x188] sm:$0xff] 0.0
          %371 = vst [vmem:[#allocation2 + $0x190] sm:$0xff] 0.0
          %372 = vst [vmem:[#allocation2 + $0x198] sm:$0xff] 0.0
          %373 = vst [vmem:[#allocation2 + $0x1a0] sm:$0xff] 0.0
          %374 = vst [vmem:[#allocation2 + $0x1a8] sm:$0xff] 0.0
          %375 = vst [vmem:[#allocation2 + $0x1b0] sm:$0xff] 0.0
          %376 = vst [vmem:[#allocation2 + $0x1b8] sm:$0xff] 0.0
          %377 = vst [vmem:[#allocation2 + $0x1c0] sm:$0xff] 0.0
          %378 = vst [vmem:[#allocation2 + $0x1c8] sm:$0xff] 0.0
          %379 = vst [vmem:[#allocation2 + $0x1d0] sm:$0xff] 0.0
          %380 = vst [vmem:[#allocation2 + $0x1d8] sm:$0xff] 0.0
          %381 = vst [vmem:[#allocation2 + $0x1e0] sm:$0xff] 0.0
          %382 = vst [vmem:[#allocation2 + $0x1e8] sm:$0xff] 0.0
          %383 = vst [vmem:[#allocation2 + $0x1f0] sm:$0xff] 0.0
          %384 = vst [vmem:[#allocation2 + $0x1f8] sm:$0xff] 0.0
          %385 = vst [vmem:[#allocation2 + $0x200] sm:$0xff] 0.0
          %386 = vst [vmem:[#allocation2 + $0x208] sm:$0xff] 0.0
          %387 = vst [vmem:[#allocation2 + $0x210] sm:$0xff] 0.0
          %388 = vst [vmem:[#allocation2 + $0x218] sm:$0xff] 0.0
          %389 = vst [vmem:[#allocation2 + $0x220] sm:$0xff] 0.0
          %390 = vst [vmem:[#allocation2 + $0x228] sm:$0xff] 0.0
          %391 = vst [vmem:[#allocation2 + $0x230] sm:$0xff] 0.0
          %392 = vst [vmem:[#allocation2 + $0x238] sm:$0xff] 0.0
          %393 = vst [vmem:[#allocation2 + $0x240] sm:$0xff] 0.0
          %394 = vst [vmem:[#allocation2 + $0x248] sm:$0xff] 0.0
          %395 = vst [vmem:[#allocation2 + $0x250] sm:$0xff] 0.0
          %396 = vst [vmem:[#allocation2 + $0x258] sm:$0xff] 0.0
          %397 = vst [vmem:[#allocation2 + $0x260] sm:$0xff] 0.0
          %398 = vst [vmem:[#allocation2 + $0x268] sm:$0xff] 0.0
          %399 = vst [vmem:[#allocation2 + $0x270] sm:$0xff] 0.0
          %400 = vst [vmem:[#allocation2 + $0x278] sm:$0xff] 0.0
          %401 = vst [vmem:[#allocation2 + $0x280] sm:$0xff] 0.0
          %402 = vst [vmem:[#allocation2 + $0x288] sm:$0xff] 0.0
          %403 = vst [vmem:[#allocation2 + $0x290] sm:$0xff] 0.0
          %404 = vst [vmem:[#allocation2 + $0x298] sm:$0xff] 0.0
          %405 = vst [vmem:[#allocation2 + $0x2a0] sm:$0xff] 0.0
          %406 = vst [vmem:[#allocation2 + $0x2a8] sm:$0xff] 0.0
          %407 = vst [vmem:[#allocation2 + $0x2b0] sm:$0xff] 0.0
          %408 = vst [vmem:[#allocation2 + $0x2b8] sm:$0xff] 0.0
          %409 = vst [vmem:[#allocation2 + $0x2c0] sm:$0xff] 0.0
          %410 = vst [vmem:[#allocation2 + $0x2c8] sm:$0xff] 0.0
          %411 = vst [vmem:[#allocation2 + $0x2d0] sm:$0xff] 0.0
          %412 = vst [vmem:[#allocation2 + $0x2d8] sm:$0xff] 0.0
          %413 = vst [vmem:[#allocation2 + $0x2e0] sm:$0xff] 0.0
          %414 = vst [vmem:[#allocation2 + $0x2e8] sm:$0xff] 0.0
          %415 = vst [vmem:[#allocation2 + $0x2f0] sm:$0xff] 0.0
          %416 = vst [vmem:[#allocation2 + $0x2f8] sm:$0xff] 0.0
          %417 = vst [vmem:[#allocation2 + $0x300] sm:$0xff] 0.0
          %418 = vst [vmem:[#allocation2 + $0x308] sm:$0xff] 0.0
          %419 = vst [vmem:[#allocation2 + $0x310] sm:$0xff] 0.0
          %420 = vst [vmem:[#allocation2 + $0x318] sm:$0xff] 0.0
          %421 = vst [vmem:[#allocation2 + $0x320] sm:$0xff] 0.0
          %422 = vst [vmem:[#allocation2 + $0x328] sm:$0xff] 0.0
          %423 = vst [vmem:[#allocation2 + $0x330] sm:$0xff] 0.0
          %424 = vst [vmem:[#allocation2 + $0x338] sm:$0xff] 0.0
          %425 = vst [vmem:[#allocation2 + $0x340] sm:$0xff] 0.0
          %426 = vst [vmem:[#allocation2 + $0x348] sm:$0xff] 0.0
          %427 = vst [vmem:[#allocation2 + $0x350] sm:$0xff] 0.0
          %428 = vst [vmem:[#allocation2 + $0x358] sm:$0xff] 0.0
          %429 = vst [vmem:[#allocation2 + $0x360] sm:$0xff] 0.0
          %430 = vst [vmem:[#allocation2 + $0x368] sm:$0xff] 0.0
          %431 = vst [vmem:[#allocation2 + $0x370] sm:$0xff] 0.0
          %432 = vst [vmem:[#allocation2 + $0x378] sm:$0xff] 0.0
          %433 = vst [vmem:[#allocation2 + $0x380] sm:$0xff] 0.0
          %434 = vst [vmem:[#allocation2 + $0x388] sm:$0xff] 0.0
          %435 = vst [vmem:[#allocation2 + $0x390] sm:$0xff] 0.0
          %436 = vst [vmem:[#allocation2 + $0x398] sm:$0xff] 0.0
          %437 = vst [vmem:[#allocation2 + $0x3a0] sm:$0xff] 0.0
          %438 = vst [vmem:[#allocation2 + $0x3a8] sm:$0xff] 0.0
          %439 = vst [vmem:[#allocation2 + $0x3b0] sm:$0xff] 0.0
          %440 = vst [vmem:[#allocation2 + $0x3b8] sm:$0xff] 0.0
          %441 = vst [vmem:[#allocation2 + $0x3c0] sm:$0xff] 0.0
          %442 = vst [vmem:[#allocation2 + $0x3c8] sm:$0xff] 0.0
          %443 = vst [vmem:[#allocation2 + $0x3d0] sm:$0xff] 0.0
          %444 = vst [vmem:[#allocation2 + $0x3d8] sm:$0xff] 0.0
          %445 = vst [vmem:[#allocation2 + $0x3e0] sm:$0xff] 0.0
          %446 = vst [vmem:[#allocation2 + $0x3e8] sm:$0xff] 0.0
          %447 = vst [vmem:[#allocation2 + $0x3f0] sm:$0xff] 0.0
          %448 = vst [vmem:[#allocation2 + $0x3f8] sm:$0xff] 0.0
        $region56: #{tpu_custom_call.1} parent=47 // pred_fallthru
          _
        %v449 = vld [vmem:[%s1] sm:$0xf]
        %v450 = vld [vmem:[%s1 + $0x4] sm:$0xf]
        %v451 = vld [vmem:[%s1 + $0x8] sm:$0xf]
        %v452 = vld [vmem:[%s1 + $0xc] sm:$0xf]
        %v453 = vld [vmem:[%s1 + $0x10] sm:$0xf]
        %v454 = vld [vmem:[%s1 + $0x14] sm:$0xf]
        %v455 = vld [vmem:[%s1 + $0x18] sm:$0xf]
        %v456 = vld [vmem:[%s1 + $0x1c] sm:$0xf]
        %v457 = vld [vmem:[%s3] sm:$0xf]
        %v458 = vld [vmem:[%s3 + $0x4] sm:$0xf]
        %v459 = vld [vmem:[%s3 + $0x8] sm:$0xf]
        %v460 = vld [vmem:[%s3 + $0xc] sm:$0xf]
        %v461 = vld [vmem:[%s3 + $0x10] sm:$0xf]
        %v462 = vld [vmem:[%s3 + $0x14] sm:$0xf]
        %v463 = vld [vmem:[%s3 + $0x18] sm:$0xf]
        %v464 = vld [vmem:[%s3 + $0x1c] sm:$0xf]
        %v465 = vld [vmem:[%s3 + $0x20] sm:$0xf]
        %v466 = vld [vmem:[%s3 + $0x24] sm:$0xf]
        %v467 = vld [vmem:[%s3 + $0x28] sm:$0xf]
        %v468 = vld [vmem:[%s3 + $0x2c] sm:$0xf]
        %v469 = vld [vmem:[%s3 + $0x30] sm:$0xf]
        %v470 = vld [vmem:[%s3 + $0x34] sm:$0xf]
        %v471 = vld [vmem:[%s3 + $0x38] sm:$0xf]
        %v472 = vld [vmem:[%s3 + $0x3c] sm:$0xf]
        %v473 = vld [vmem:[%s5] sm:$0xf]
        %v474 = vld [vmem:[%s5 + $0x4] sm:$0xf]
        %v475 = vld [vmem:[%s5 + $0x8] sm:$0xf]
        %v476 = vld [vmem:[%s5 + $0xc] sm:$0xf]
        %v477 = vld [vmem:[%s5 + $0x10] sm:$0xf]
        %v478 = vld [vmem:[%s5 + $0x14] sm:$0xf]
        %v479 = vld [vmem:[%s5 + $0x18] sm:$0xf]
        %v480 = vld [vmem:[%s5 + $0x1c] sm:$0xf]
        %v481 = vld [vmem:[%s5 + $0x20] sm:$0xf]
        %v482 = vld [vmem:[%s5 + $0x24] sm:$0xf]
        %v483 = vld [vmem:[%s5 + $0x28] sm:$0xf]
        %v484 = vld [vmem:[%s5 + $0x2c] sm:$0xf]
        %v485 = vld [vmem:[%s5 + $0x30] sm:$0xf]
        %v486 = vld [vmem:[%s5 + $0x34] sm:$0xf]
        %v487 = vld [vmem:[%s5 + $0x38] sm:$0xf]
        %v488 = vld [vmem:[%s5 + $0x3c] sm:$0xf]
        %v489 = vld [vmem:[%s2] sm:$0xff]
        %v490 = vld [vmem:[%s2 + $0x8] sm:$0xff]
        %v491 = vld [vmem:[%s2 + $0x10] sm:$0xff]
        %v492 = vld [vmem:[%s2 + $0x18] sm:$0xff]
        %v493 = vld [vmem:[%s2 + $0x20] sm:$0xff]
        %v494 = vld [vmem:[%s2 + $0x28] sm:$0xff]
        %v495 = vld [vmem:[%s2 + $0x30] sm:$0xff]
        %v496 = vld [vmem:[%s2 + $0x38] sm:$0xff]
        %498 = vset.pattern.permute.xlu0 0
        %499 = vperm.xlu0 %498, %v489
        %v500 = vpop.permute.xlu0 %499
        %503 = vset.pattern.permute.xlu0 0
        %504 = vperm.xlu0 %503, %v490
        %v505 = vpop.permute.xlu0 %504
        %508 = vset.pattern.permute.xlu0 0
        %509 = vperm.xlu0 %508, %v491
        %v510 = vpop.permute.xlu0 %509
        %513 = vset.pattern.permute.xlu0 0
        %514 = vperm.xlu0 %513, %v492
        %v515 = vpop.permute.xlu0 %514
        %518 = vset.pattern.permute.xlu0 0
        %519 = vperm.xlu0 %518, %v493
        %v520 = vpop.permute.xlu0 %519
        %523 = vset.pattern.permute.xlu0 0
        %524 = vperm.xlu0 %523, %v494
        %v525 = vpop.permute.xlu0 %524
        %528 = vset.pattern.permute.xlu0 0
        %529 = vperm.xlu0 %528, %v495
        %v530 = vpop.permute.xlu0 %529
        %533 = vset.pattern.permute.xlu0 0
        %534 = vperm.xlu0 %533, %v496
        %v535 = vpop.permute.xlu0 %534
        %v537 = vld [vmem:[%s4] sm:$0xff]
        %v538 = vld [vmem:[%s4 + $0x8] sm:$0xff]
        %v539 = vld [vmem:[%s4 + $0x10] sm:$0xff]
        %v540 = vld [vmem:[%s4 + $0x18] sm:$0xff]
        %v541 = vld [vmem:[%s4 + $0x20] sm:$0xff]
        %v542 = vld [vmem:[%s4 + $0x28] sm:$0xff]
        %v543 = vld [vmem:[%s4 + $0x30] sm:$0xff]
        %v544 = vld [vmem:[%s4 + $0x38] sm:$0xff]
        %v545 = vld [vmem:[%s4 + $0x40] sm:$0xff]
        %v546 = vld [vmem:[%s4 + $0x48] sm:$0xff]
        %v547 = vld [vmem:[%s4 + $0x50] sm:$0xff]
        %v548 = vld [vmem:[%s4 + $0x58] sm:$0xff]
        %v549 = vld [vmem:[%s4 + $0x60] sm:$0xff]
        %v550 = vld [vmem:[%s4 + $0x68] sm:$0xff]
        %v551 = vld [vmem:[%s4 + $0x70] sm:$0xff]
        %v552 = vld [vmem:[%s4 + $0x78] sm:$0xff]
        %554 = vset.pattern.permute.xlu0 0
        %555 = vperm.xlu0 %554, %v537
        %v556 = vpop.permute.xlu0 %555
        %559 = vset.pattern.permute.xlu0 0
        %560 = vperm.xlu0 %559, %v538
        %v561 = vpop.permute.xlu0 %560
        %564 = vset.pattern.permute.xlu0 0
        %565 = vperm.xlu0 %564, %v539
        %v566 = vpop.permute.xlu0 %565
        %569 = vset.pattern.permute.xlu0 0
        %570 = vperm.xlu0 %569, %v540
        %v571 = vpop.permute.xlu0 %570
        %574 = vset.pattern.permute.xlu0 0
        %575 = vperm.xlu0 %574, %v541
        %v576 = vpop.permute.xlu0 %575
        %579 = vset.pattern.permute.xlu0 0
        %580 = vperm.xlu0 %579, %v542
        %v581 = vpop.permute.xlu0 %580
        %584 = vset.pattern.permute.xlu0 0
        %585 = vperm.xlu0 %584, %v543
        %v586 = vpop.permute.xlu0 %585
        %589 = vset.pattern.permute.xlu0 0
        %590 = vperm.xlu0 %589, %v544
        %v591 = vpop.permute.xlu0 %590
        %594 = vset.pattern.permute.xlu0 0
        %595 = vperm.xlu0 %594, %v545
        %v596 = vpop.permute.xlu0 %595
        %599 = vset.pattern.permute.xlu0 0
        %600 = vperm.xlu0 %599, %v546
        %v601 = vpop.permute.xlu0 %600
        %604 = vset.pattern.permute.xlu0 0
        %605 = vperm.xlu0 %604, %v547
        %v606 = vpop.permute.xlu0 %605
        %609 = vset.pattern.permute.xlu0 0
        %610 = vperm.xlu0 %609, %v548
        %v611 = vpop.permute.xlu0 %610
        %614 = vset.pattern.permute.xlu0 0
        %615 = vperm.xlu0 %614, %v549
        %v616 = vpop.permute.xlu0 %615
        %619 = vset.pattern.permute.xlu0 0
        %620 = vperm.xlu0 %619, %v550
        %v621 = vpop.permute.xlu0 %620
        %624 = vset.pattern.permute.xlu0 0
        %625 = vperm.xlu0 %624, %v551
        %v626 = vpop.permute.xlu0 %625
        %629 = vset.pattern.permute.xlu0 0
        %630 = vperm.xlu0 %629, %v552
        %v631 = vpop.permute.xlu0 %630
        %v633 = vld [vmem:[%s6] sm:$0xff]
        %v634 = vld [vmem:[%s6 + $0x8] sm:$0xff]
        %v635 = vld [vmem:[%s6 + $0x10] sm:$0xff]
        %v636 = vld [vmem:[%s6 + $0x18] sm:$0xff]
        %v637 = vld [vmem:[%s6 + $0x20] sm:$0xff]
        %v638 = vld [vmem:[%s6 + $0x28] sm:$0xff]
        %v639 = vld [vmem:[%s6 + $0x30] sm:$0xff]
        %v640 = vld [vmem:[%s6 + $0x38] sm:$0xff]
        %v641 = vld [vmem:[%s6 + $0x40] sm:$0xff]
        %v642 = vld [vmem:[%s6 + $0x48] sm:$0xff]
        %v643 = vld [vmem:[%s6 + $0x50] sm:$0xff]
        %v644 = vld [vmem:[%s6 + $0x58] sm:$0xff]
        %v645 = vld [vmem:[%s6 + $0x60] sm:$0xff]
        %v646 = vld [vmem:[%s6 + $0x68] sm:$0xff]
        %v647 = vld [vmem:[%s6 + $0x70] sm:$0xff]
        %v648 = vld [vmem:[%s6 + $0x78] sm:$0xff]
        %650 = vset.pattern.permute.xlu0 0
        %651 = vperm.xlu0 %650, %v633
        %v652 = vpop.permute.xlu0 %651
        %655 = vset.pattern.permute.xlu0 0
        %656 = vperm.xlu0 %655, %v634
        %v657 = vpop.permute.xlu0 %656
        %660 = vset.pattern.permute.xlu0 0
        %661 = vperm.xlu0 %660, %v635
        %v662 = vpop.permute.xlu0 %661
        %665 = vset.pattern.permute.xlu0 0
        %666 = vperm.xlu0 %665, %v636
        %v667 = vpop.permute.xlu0 %666
        %670 = vset.pattern.permute.xlu0 0
        %671 = vperm.xlu0 %670, %v637
        %v672 = vpop.permute.xlu0 %671
        %675 = vset.pattern.permute.xlu0 0
        %676 = vperm.xlu0 %675, %v638
        %v677 = vpop.permute.xlu0 %676
        %680 = vset.pattern.permute.xlu0 0
        %681 = vperm.xlu0 %680, %v639
        %v682 = vpop.permute.xlu0 %681
        %685 = vset.pattern.permute.xlu0 0
        %686 = vperm.xlu0 %685, %v640
        %v687 = vpop.permute.xlu0 %686
        %690 = vset.pattern.permute.xlu0 0
        %691 = vperm.xlu0 %690, %v641
        %v692 = vpop.permute.xlu0 %691
        %695 = vset.pattern.permute.xlu0 0
        %696 = vperm.xlu0 %695, %v642
        %v697 = vpop.permute.xlu0 %696
        %700 = vset.pattern.permute.xlu0 0
        %701 = vperm.xlu0 %700, %v643
        %v702 = vpop.permute.xlu0 %701
        %705 = vset.pattern.permute.xlu0 0
        %706 = vperm.xlu0 %705, %v644
        %v707 = vpop.permute.xlu0 %706
        %710 = vset.pattern.permute.xlu0 0
        %711 = vperm.xlu0 %710, %v645
        %v712 = vpop.permute.xlu0 %711
        %715 = vset.pattern.permute.xlu0 0
        %716 = vperm.xlu0 %715, %v646
        %v717 = vpop.permute.xlu0 %716
        %720 = vset.pattern.permute.xlu0 0
        %721 = vperm.xlu0 %720, %v647
        %v722 = vpop.permute.xlu0 %721
        %725 = vset.pattern.permute.xlu0 0
        %726 = vperm.xlu0 %725, %v648
        %v727 = vpop.permute.xlu0 %726
        loop: start=0, step=1, limit=8
        $region57: #{tpu_custom_call.1} parent=47 // loop_pre_header
          _
        $region58: #{tpu_custom_call.1} parent=47 // loop_header
          %s730 = sphi 0, %s734
          %p731 = scmp.ge.s32.totalorder %s730, 8
        $region59: #{tpu_custom_call.1} parent=47 // loop_header_branch
          %733 = sbr.rel (%p731) target = $region63
        $region60: #{tpu_custom_call.1} parent=47 // loop_body
          %s735 = smul.u32 %s730, 8
          %s736 = smul.addr %s735, 8
          %s737 = scalar_lea.vmem %s283, %s736 [#allocation3]
          %v738 = vld [vmem:[%s737] sm:$0xff]
          %v739 = vld [vmem:[%s737 + $0x8] sm:$0xff]
          %v740 = vld [vmem:[%s737 + $0x10] sm:$0xff]
          %v741 = vld [vmem:[%s737 + $0x18] sm:$0xff]
          %v742 = vld [vmem:[%s737 + $0x20] sm:$0xff]
          %v743 = vld [vmem:[%s737 + $0x28] sm:$0xff]
          %v744 = vld [vmem:[%s737 + $0x30] sm:$0xff]
          %v745 = vld [vmem:[%s737 + $0x38] sm:$0xff]
          %v746 = vpack.c.bf16 %v738, %v738
          %v747 = vpack.c.bf16 %v739, %v739
          %v748 = vpack.c.bf16 %v740, %v740
          %v749 = vpack.c.bf16 %v741, %v741
          %v750 = vpack.c.bf16 %v742, %v742
          %v751 = vpack.c.bf16 %v743, %v743
          %v752 = vpack.c.bf16 %v744, %v744
          %v753 = vpack.c.bf16 %v745, %v745
          %v762 = vunpack.c.l.b16 %v449
          %v763 = vunpack.c.l.b16 %v450
          %v764 = vunpack.c.l.b16 %v451
          %v765 = vunpack.c.l.b16 %v452
          %v766 = vunpack.c.l.b16 %v453
          %v767 = vunpack.c.l.b16 %v454
          %v768 = vunpack.c.l.b16 %v455
          %v769 = vunpack.c.l.b16 %v456
          %v770 = vpack.c.b16 %v763, %v762
          %v771 = vpack.c.b16 %v765, %v764
          %v772 = vpack.c.b16 %v767, %v766
          %v773 = vpack.c.b16 %v769, %v768
          %vm774 = vcmask 64512
          %v776 = vsel %vm774, %v770, 0
          %v779 = vsel %vm774, %v771, 0
          %v782 = vsel %vm774, %v772, 0
          %v785 = vsel %vm774, %v773, 0
          %vm787 = vcmask 1043456
          %v789 = vsel %vm787, %v746, 0
          %v792 = vsel %vm787, %v747, 0
          %v795 = vsel %vm787, %v748, 0
          %v798 = vsel %vm787, %v749, 0
          %v801 = vsel %vm787, %v750, 0
          %v804 = vsel %vm787, %v751, 0
          %v807 = vsel %vm787, %v752, 0
          %v810 = vsel %vm787, %v753, 0
          %812 = vmatprep.subr.bf16.mxu0 %v792
          %813 = vmatpush1.bf16.msra.mxu0 %v789
          %814 = vmatprep.subr.bf16.mxu0 0
          %815 = vmatpush1.bf16.msra.mxu0 0
          %816 = vmatprep.subr.bf16.mxu0 0
          %817 = vmatpush1.bf16.msra.mxu0 0
          %818 = vmatprep.subr.bf16.mxu0 0
          %819 = vmatpush1.bf16.msra.mxu0 0
          %820 = vmatprep.subr.bf16.mxu0 0
          %821 = vmatpush1.bf16.msra.mxu0 0
          %822 = vmatprep.subr.bf16.mxu0 0
          %823 = vmatpush1.bf16.msra.mxu0 0
          %824 = vmatprep.subr.bf16.mxu0 0
          %825 = vmatpush1.bf16.msra.mxu0 0
          %826 = vmatprep.subr.bf16.mxu0 0
          %827 = vmatpush1.bf16.msra.mxu0 0
          %828 = vmatprep.subr.bf16.mxu0 0
          %829 = vmatpush1.bf16.msra.mxu0 0
          %830 = vmatprep.subr.bf16.mxu0 0
          %831 = vmatpush1.bf16.msra.mxu0 0
          %832 = vmatprep.subr.bf16.mxu0 0
          %833 = vmatpush1.bf16.msra.mxu0 0
          %834 = vmatprep.subr.bf16.mxu0 0
          %835 = vmatpush1.bf16.msra.mxu0 0
          %836 = vmatprep.subr.bf16.mxu0 0
          %837 = vmatpush1.bf16.msra.mxu0 0
          %838 = vmatprep.subr.bf16.mxu0 0
          %839 = vmatpush1.bf16.msra.mxu0 0
          %840 = vmatprep.subr.bf16.mxu0 0
          %841 = vmatpush1.bf16.msra.mxu0 0
          %842 = vmatprep.subr.bf16.mxu0 0
          %843 = vmatpush1.bf16.msra.mxu0 0
          %844 = vmatprep.mubr.bf16.mxu0 0
          %845 = vmatmul.mubr.bf16.gmra.mrb[0].mxu0 %v776
          %v846 = vpop.f32.mrb[0].mxu0
          %v847 = vadd.f32 %v500, %v846
          %v848 = vpop.f32.mrb[0].mxu0
          %v849 = vadd.f32 %v500, %v848
          %v850 = vpop.f32.mrb[0].mxu0
          %v851 = vadd.f32 %v505, %v850
          %v852 = vpop.f32.mrb[0].mxu0
          %v853 = vadd.f32 %v505, %v852
          %854 = vmatprep.mubr.bf16.mxu0 0
          %855 = vmatmul.mubr.bf16.gmra.mrb[0].mxu0 %v779
          %v856 = vpop.f32.mrb[0].mxu0
          %v857 = vadd.f32 %v510, %v856
          %v858 = vpop.f32.mrb[0].mxu0
          %v859 = vadd.f32 %v510, %v858
          %v860 = vpop.f32.mrb[0].mxu0
          %v861 = vadd.f32 %v515, %v860
          %v862 = vpop.f32.mrb[0].mxu0
          %v863 = vadd.f32 %v515, %v862
          %864 = vmatprep.mubr.bf16.mxu0 0
          %865 = vmatmul.mubr.bf16.gmra.mrb[0].mxu0 %v782
          %v866 = vpop.f32.mrb[0].mxu0
          %v867 = vadd.f32 %v520, %v866
          %v868 = vpop.f32.mrb[0].mxu0
          %v869 = vadd.f32 %v520, %v868
          %v870 = vpop.f32.mrb[0].mxu0
          %v871 = vadd.f32 %v525, %v870
          %v872 = vpop.f32.mrb[0].mxu0
          %v873 = vadd.f32 %v525, %v872
          %874 = vmatprep.mubr.bf16.mxu0 0
          %875 = vmatmul.mubr.bf16.gmra.mrb[0].mxu0 %v785
          %v876 = vpop.f32.mrb[0].mxu0
          %v877 = vadd.f32 %v530, %v876
          %v878 = vpop.f32.mrb[0].mxu0
          %v879 = vadd.f32 %v530, %v878
          %v880 = vpop.f32.mrb[0].mxu0
          %v881 = vadd.f32 %v535, %v880
          %v882 = vpop.f32.mrb[0].mxu0
          %v883 = vadd.f32 %v535, %v882
          %884 = vdwg.mxu0
          %885 = vmatprep.subr.bf16.mxu0 %v798
          %886 = vmatpush1.bf16.msra.mxu0 %v795
          %887 = vmatprep.subr.bf16.mxu0 0
          %888 = vmatpush1.bf16.msra.mxu0 0
          %889 = vmatprep.subr.bf16.mxu0 0
          %890 = vmatpush1.bf16.msra.mxu0 0
          %891 = vmatprep.subr.bf16.mxu0 0
          %892 = vmatpush1.bf16.msra.mxu0 0
          %893 = vmatprep.subr.bf16.mxu0 0
          %894 = vmatpush1.bf16.msra.mxu0 0
          %895 = vmatprep.subr.bf16.mxu0 0
          %896 = vmatpush1.bf16.msra.mxu0 0
          %897 = vmatprep.subr.bf16.mxu0 0
          %898 = vmatpush1.bf16.msra.mxu0 0
          %899 = vmatprep.subr.bf16.mxu0 0
          %900 = vmatpush1.bf16.msra.mxu0 0
          %901 = vmatprep.subr.bf16.mxu0 0
          %902 = vmatpush1.bf16.msra.mxu0 0
          %903 = vmatprep.subr.bf16.mxu0 0
          %904 = vmatpush1.bf16.msra.mxu0 0
          %905 = vmatprep.subr.bf16.mxu0 0
          %906 = vmatpush1.bf16.msra.mxu0 0
          %907 = vmatprep.subr.bf16.mxu0 0
          %908 = vmatpush1.bf16.msra.mxu0 0
          %909 = vmatprep.subr.bf16.mxu0 0
          %910 = vmatpush1.bf16.msra.mxu0 0
          %911 = vmatprep.subr.bf16.mxu0 0
          %912 = vmatpush1.bf16.msra.mxu0 0
          %913 = vmatprep.subr.bf16.mxu0 0
          %914 = vmatpush1.bf16.msra.mxu0 0
          %915 = vmatprep.subr.bf16.mxu0 0
          %916 = vmatpush1.bf16.msra.mxu0 0
          %917 = vmatprep.mubr.bf16.mxu0 0
          %918 = vmatmul.mubr.bf16.gmra.mrb[0].mxu0 %v776
          %v919 = vpop.f32.mrb[0].mxu0
          %v920 = vadd.f32 %v500, %v919
          %v921 = vpop.f32.mrb[0].mxu0
          %v922 = vadd.f32 %v500, %v921
          %v923 = vpop.f32.mrb[0].mxu0
          %v924 = vadd.f32 %v505, %v923
          %v925 = vpop.f32.mrb[0].mxu0
          %v926 = vadd.f32 %v505, %v925
          %927 = vmatprep.mubr.bf16.mxu0 0
          %928 = vmatmul.mubr.bf16.gmra.mrb[0].mxu0 %v779
          %v929 = vpop.f32.mrb[0].mxu0
          %v930 = vadd.f32 %v510, %v929
          %v931 = vpop.f32.mrb[0].mxu0
          %v932 = vadd.f32 %v510, %v931
          %v933 = vpop.f32.mrb[0].mxu0
          %v934 = vadd.f32 %v515, %v933
          %v935 = vpop.f32.mrb[0].mxu0
          %v936 = vadd.f32 %v515, %v935
          %937 = vmatprep.mubr.bf16.mxu0 0
          %938 = vmatmul.mubr.bf16.gmra.mrb[0].mxu0 %v782
          %v939 = vpop.f32.mrb[0].mxu0
          %v940 = vadd.f32 %v520, %v939
          %v941 = vpop.f32.mrb[0].mxu0
          %v942 = vadd.f32 %v520, %v941
          %v943 = vpop.f32.mrb[0].mxu0
          %v944 = vadd.f32 %v525, %v943
          %v945 = vpop.f32.mrb[0].mxu0
          %v946 = vadd.f32 %v525, %v945
          %947 = vmatprep.mubr.bf16.mxu0 0
          %948 = vmatmul.mubr.bf16.gmra.mrb[0].mxu0 %v785
          %v949 = vpop.f32.mrb[0].mxu0
          %v950 = vadd.f32 %v530, %v949
          %v951 = vpop.f32.mrb[0].mxu0
          %v952 = vadd.f32 %v530, %v951
          %v953 = vpop.f32.mrb[0].mxu0
          %v954 = vadd.f32 %v535, %v953
          %v955 = vpop.f32.mrb[0].mxu0
          %v956 = vadd.f32 %v535, %v955
          %957 = vdwg.mxu0
          %958 = vmatprep.subr.bf16.mxu0 %v804
          %959 = vmatpush1.bf16.msra.mxu0 %v801
          %960 = vmatprep.subr.bf16.mxu0 0
          %961 = vmatpush1.bf16.msra.mxu0 0
          %962 = vmatprep.subr.bf16.mxu0 0
          %963 = vmatpush1.bf16.msra.mxu0 0
          %964 = vmatprep.subr.bf16.mxu0 0
          %965 = vmatpush1.bf16.msra.mxu0 0
          %966 = vmatprep.subr.bf16.mxu0 0
          %967 = vmatpush1.bf16.msra.mxu0 0
          %968 = vmatprep.subr.bf16.mxu0 0
          %969 = vmatpush1.bf16.msra.mxu0 0
          %970 = vmatprep.subr.bf16.mxu0 0
          %971 = vmatpush1.bf16.msra.mxu0 0
          %972 = vmatprep.subr.bf16.mxu0 0
          %973 = vmatpush1.bf16.msra.mxu0 0
          %974 = vmatprep.subr.bf16.mxu0 0
          %975 = vmatpush1.bf16.msra.mxu0 0
          %976 = vmatprep.subr.bf16.mxu0 0
          %977 = vmatpush1.bf16.msra.mxu0 0
          %978 = vmatprep.subr.bf16.mxu0 0
          %979 = vmatpush1.bf16.msra.mxu0 0
          %980 = vmatprep.subr.bf16.mxu0 0
          %981 = vmatpush1.bf16.msra.mxu0 0
          %982 = vmatprep.subr.bf16.mxu0 0
          %983 = vmatpush1.bf16.msra.mxu0 0
          %984 = vmatprep.subr.bf16.mxu0 0
          %985 = vmatpush1.bf16.msra.mxu0 0
          %986 = vmatprep.subr.bf16.mxu0 0
          %987 = vmatpush1.bf16.msra.mxu0 0
          %988 = vmatprep.subr.bf16.mxu0 0
          %989 = vmatpush1.bf16.msra.mxu0 0
          %990 = vmatprep.mubr.bf16.mxu0 0
          %991 = vmatmul.mubr.bf16.gmra.mrb[0].mxu0 %v776
          %v992 = vpop.f32.mrb[0].mxu0
          %v993 = vadd.f32 %v500, %v992
          %v994 = vpop.f32.mrb[0].mxu0
          %v995 = vadd.f32 %v500, %v994
          %v996 = vpop.f32.mrb[0].mxu0
          %v997 = vadd.f32 %v505, %v996
          %v998 = vpop.f32.mrb[0].mxu0
          %v999 = vadd.f32 %v505, %v998
          %1000 = vmatprep.mubr.bf16.mxu0 0
          %1001 = vmatmul.mubr.bf16.gmra.mrb[0].mxu0 %v779
          %v1002 = vpop.f32.mrb[0].mxu0
          %v1003 = vadd.f32 %v510, %v1002
          %v1004 = vpop.f32.mrb[0].mxu0
          %v1005 = vadd.f32 %v510, %v1004
          %v1006 = vpop.f32.mrb[0].mxu0
          %v1007 = vadd.f32 %v515, %v1006
          %v1008 = vpop.f32.mrb[0].mxu0
          %v1009 = vadd.f32 %v515, %v1008
          %1010 = vmatprep.mubr.bf16.mxu0 0
          %1011 = vmatmul.mubr.bf16.gmra.mrb[0].mxu0 %v782
          %v1012 = vpop.f32.mrb[0].mxu0
          %v1013 = vadd.f32 %v520, %v1012
          %v1014 = vpop.f32.mrb[0].mxu0
          %v1015 = vadd.f32 %v520, %v1014
          %v1016 = vpop.f32.mrb[0].mxu0
          %v1017 = vadd.f32 %v525, %v1016
          %v1018 = vpop.f32.mrb[0].mxu0
          %v1019 = vadd.f32 %v525, %v1018
          %1020 = vmatprep.mubr.bf16.mxu0 0
          %1021 = vmatmul.mubr.bf16.gmra.mrb[0].mxu0 %v785
          %v1022 = vpop.f32.mrb[0].mxu0
          %v1023 = vadd.f32 %v530, %v1022
          %v1024 = vpop.f32.mrb[0].mxu0
          %v1025 = vadd.f32 %v530, %v1024
          %v1026 = vpop.f32.mrb[0].mxu0
          %v1027 = vadd.f32 %v535, %v1026
          %v1028 = vpop.f32.mrb[0].mxu0
          %v1029 = vadd.f32 %v535, %v1028
          %1030 = vdwg.mxu0
          %1031 = vmatprep.subr.bf16.mxu0 %v810
          %1032 = vmatpush1.bf16.msra.mxu0 %v807
          %1033 = vmatprep.subr.bf16.mxu0 0
          %1034 = vmatpush1.bf16.msra.mxu0 0
          %1035 = vmatprep.subr.bf16.mxu0 0
          %1036 = vmatpush1.bf16.msra.mxu0 0
          %1037 = vmatprep.subr.bf16.mxu0 0
          %1038 = vmatpush1.bf16.msra.mxu0 0
          %1039 = vmatprep.subr.bf16.mxu0 0
          %1040 = vmatpush1.bf16.msra.mxu0 0
          %1041 = vmatprep.subr.bf16.mxu0 0
          %1042 = vmatpush1.bf16.msra.mxu0 0
          %1043 = vmatprep.subr.bf16.mxu0 0
          %1044 = vmatpush1.bf16.msra.mxu0 0
          %1045 = vmatprep.subr.bf16.mxu0 0
          %1046 = vmatpush1.bf16.msra.mxu0 0
          %1047 = vmatprep.subr.bf16.mxu0 0
          %1048 = vmatpush1.bf16.msra.mxu0 0
          %1049 = vmatprep.subr.bf16.mxu0 0
          %1050 = vmatpush1.bf16.msra.mxu0 0
          %1051 = vmatprep.subr.bf16.mxu0 0
          %1052 = vmatpush1.bf16.msra.mxu0 0
          %1053 = vmatprep.subr.bf16.mxu0 0
          %1054 = vmatpush1.bf16.msra.mxu0 0
          %1055 = vmatprep.subr.bf16.mxu0 0
          %1056 = vmatpush1.bf16.msra.mxu0 0
          %1057 = vmatprep.subr.bf16.mxu0 0
          %1058 = vmatpush1.bf16.msra.mxu0 0
          %1059 = vmatprep.subr.bf16.mxu0 0
          %1060 = vmatpush1.bf16.msra.mxu0 0
          %1061 = vmatprep.subr.bf16.mxu0 0
          %1062 = vmatpush1.bf16.msra.mxu0 0
          %1063 = vmatprep.mubr.bf16.mxu0 0
          %1064 = vmatmul.mubr.bf16.gmra.mrb[0].mxu0 %v776
          %v1065 = vpop.f32.mrb[0].mxu0
          %v1066 = vadd.f32 %v500, %v1065
          %v1067 = vpop.f32.mrb[0].mxu0
          %v1068 = vadd.f32 %v500, %v1067
          %v1069 = vpop.f32.mrb[0].mxu0
          %v1070 = vadd.f32 %v505, %v1069
          %v1071 = vpop.f32.mrb[0].mxu0
          %v1072 = vadd.f32 %v505, %v1071
          %1073 = vmatprep.mubr.bf16.mxu0 0
          %1074 = vmatmul.mubr.bf16.gmra.mrb[0].mxu0 %v779
          %v1075 = vpop.f32.mrb[0].mxu0
          %v1076 = vadd.f32 %v510, %v1075
          %v1077 = vpop.f32.mrb[0].mxu0
          %v1078 = vadd.f32 %v510, %v1077
          %v1079 = vpop.f32.mrb[0].mxu0
          %v1080 = vadd.f32 %v515, %v1079
          %v1081 = vpop.f32.mrb[0].mxu0
          %v1082 = vadd.f32 %v515, %v1081
          %1083 = vmatprep.mubr.bf16.mxu0 0
          %1084 = vmatmul.mubr.bf16.gmra.mrb[0].mxu0 %v782
          %v1085 = vpop.f32.mrb[0].mxu0
          %v1086 = vadd.f32 %v520, %v1085
          %v1087 = vpop.f32.mrb[0].mxu0
          %v1088 = vadd.f32 %v520, %v1087
          %v1089 = vpop.f32.mrb[0].mxu0
          %v1090 = vadd.f32 %v525, %v1089
          %v1091 = vpop.f32.mrb[0].mxu0
          %v1092 = vadd.f32 %v525, %v1091
          %1093 = vmatprep.mubr.bf16.mxu0 0
          %1094 = vmatmul.mubr.bf16.gmra.mrb[0].mxu0 %v785
          %v1095 = vpop.f32.mrb[0].mxu0
          %v1096 = vadd.f32 %v530, %v1095
          %v1097 = vpop.f32.mrb[0].mxu0
          %v1098 = vadd.f32 %v530, %v1097
          %v1099 = vpop.f32.mrb[0].mxu0
          %v1100 = vadd.f32 %v535, %v1099
          %v1101 = vpop.f32.mrb[0].mxu0
          %v1102 = vadd.f32 %v535, %v1101
          %1103 = vdwg.mxu0
          %v1104 = vmax.f32 %v847, 0.0
          %v1105 = vmax.f32 %v849, 0.0
          %v1106 = vmax.f32 %v920, 0.0
          %v1107 = vmax.f32 %v922, 0.0
          %v1108 = vmax.f32 %v993, 0.0
          %v1109 = vmax.f32 %v995, 0.0
          %v1110 = vmax.f32 %v1066, 0.0
          %v1111 = vmax.f32 %v1068, 0.0
          %v1112 = vmax.f32 %v851, 0.0
          %v1113 = vmax.f32 %v853, 0.0
          %v1114 = vmax.f32 %v924, 0.0
          %v1115 = vmax.f32 %v926, 0.0
          %v1116 = vmax.f32 %v997, 0.0
          %v1117 = vmax.f32 %v999, 0.0
          %v1118 = vmax.f32 %v1070, 0.0
          %v1119 = vmax.f32 %v1072, 0.0
          %v1120 = vmax.f32 %v857, 0.0
          %v1121 = vmax.f32 %v859, 0.0
          %v1122 = vmax.f32 %v930, 0.0
          %v1123 = vmax.f32 %v932, 0.0
          %v1124 = vmax.f32 %v1003, 0.0
          %v1125 = vmax.f32 %v1005, 0.0
          %v1126 = vmax.f32 %v1076, 0.0
          %v1127 = vmax.f32 %v1078, 0.0
          %v1128 = vmax.f32 %v861, 0.0
          %v1129 = vmax.f32 %v863, 0.0
          %v1130 = vmax.f32 %v934, 0.0
          %v1131 = vmax.f32 %v936, 0.0
          %v1132 = vmax.f32 %v1007, 0.0
          %v1133 = vmax.f32 %v1009, 0.0
          %v1134 = vmax.f32 %v1080, 0.0
          %v1135 = vmax.f32 %v1082, 0.0
          %v1136 = vmax.f32 %v867, 0.0
          %v1137 = vmax.f32 %v869, 0.0
          %v1138 = vmax.f32 %v940, 0.0
          %v1139 = vmax.f32 %v942, 0.0
          %v1140 = vmax.f32 %v1013, 0.0
          %v1141 = vmax.f32 %v1015, 0.0
          %v1142 = vmax.f32 %v1086, 0.0
          %v1143 = vmax.f32 %v1088, 0.0
          %v1144 = vmax.f32 %v871, 0.0
          %v1145 = vmax.f32 %v873, 0.0
          %v1146 = vmax.f32 %v944, 0.0
          %v1147 = vmax.f32 %v946, 0.0
          %v1148 = vmax.f32 %v1017, 0.0
          %v1149 = vmax.f32 %v1019, 0.0
          %v1150 = vmax.f32 %v1090, 0.0
          %v1151 = vmax.f32 %v1092, 0.0
          %v1152 = vmax.f32 %v877, 0.0
          %v1153 = vmax.f32 %v879, 0.0
          %v1154 = vmax.f32 %v950, 0.0
          %v1155 = vmax.f32 %v952, 0.0
          %v1156 = vmax.f32 %v1023, 0.0
          %v1157 = vmax.f32 %v1025, 0.0
          %v1158 = vmax.f32 %v1096, 0.0
          %v1159 = vmax.f32 %v1098, 0.0
          %v1160 = vmax.f32 %v881, 0.0
          %v1161 = vmax.f32 %v883, 0.0
          %v1162 = vmax.f32 %v954, 0.0
          %v1163 = vmax.f32 %v956, 0.0
          %v1164 = vmax.f32 %v1027, 0.0
          %v1165 = vmax.f32 %v1029, 0.0
          %v1166 = vmax.f32 %v1100, 0.0
          %v1167 = vmax.f32 %v1102, 0.0
          %v1168 = vpack.c.bf16 %v1112, %v1104
          %v1169 = vpack.c.bf16 %v1113, %v1105
          %v1170 = vpack.c.bf16 %v1114, %v1106
          %v1171 = vpack.c.bf16 %v1115, %v1107
          %v1172 = vpack.c.bf16 %v1116, %v1108
          %v1173 = vpack.c.bf16 %v1117, %v1109
          %v1174 = vpack.c.bf16 %v1118, %v1110
          %v1175 = vpack.c.bf16 %v1119, %v1111
          %v1176 = vpack.c.bf16 %v1128, %v1120
          %v1177 = vpack.c.bf16 %v1129, %v1121
          %v1178 = vpack.c.bf16 %v1130, %v1122
          %v1179 = vpack.c.bf16 %v1131, %v1123
          %v1180 = vpack.c.bf16 %v1132, %v1124
          %v1181 = vpack.c.bf16 %v1133, %v1125
          %v1182 = vpack.c.bf16 %v1134, %v1126
          %v1183 = vpack.c.bf16 %v1135, %v1127
          %v1184 = vpack.c.bf16 %v1144, %v1136
          %v1185 = vpack.c.bf16 %v1145, %v1137
          %v1186 = vpack.c.bf16 %v1146, %v1138
          %v1187 = vpack.c.bf16 %v1147, %v1139
          %v1188 = vpack.c.bf16 %v1148, %v1140
          %v1189 = vpack.c.bf16 %v1149, %v1141
          %v1190 = vpack.c.bf16 %v1150, %v1142
          %v1191 = vpack.c.bf16 %v1151, %v1143
          %v1192 = vpack.c.bf16 %v1160, %v1152
          %v1193 = vpack.c.bf16 %v1161, %v1153
          %v1194 = vpack.c.bf16 %v1162, %v1154
          %v1195 = vpack.c.bf16 %v1163, %v1155
          %v1196 = vpack.c.bf16 %v1164, %v1156
          %v1197 = vpack.c.bf16 %v1165, %v1157
          %v1198 = vpack.c.bf16 %v1166, %v1158
          %v1199 = vpack.c.bf16 %v1167, %v1159
          %v1216 = vunpack.c.l.b16 %v457
          %v1217 = vunpack.c.l.b16 %v458
          %v1218 = vunpack.c.l.b16 %v459
          %v1219 = vunpack.c.l.b16 %v460
          %v1220 = vunpack.c.l.b16 %v461
          %v1221 = vunpack.c.l.b16 %v462
          %v1222 = vunpack.c.l.b16 %v463
          %v1223 = vunpack.c.l.b16 %v464
          %v1224 = vunpack.c.l.b16 %v465
          %v1225 = vunpack.c.l.b16 %v466
          %v1226 = vunpack.c.l.b16 %v467
          %v1227 = vunpack.c.l.b16 %v468
          %v1228 = vunpack.c.l.b16 %v469
          %v1229 = vunpack.c.l.b16 %v470
          %v1230 = vunpack.c.l.b16 %v471
          %v1231 = vunpack.c.l.b16 %v472
          %v1232 = vpack.c.b16 %v1217, %v1216
          %v1233 = vpack.c.b16 %v1219, %v1218
          %v1234 = vpack.c.b16 %v1221, %v1220
          %v1235 = vpack.c.b16 %v1223, %v1222
          %v1236 = vpack.c.b16 %v1225, %v1224
          %v1237 = vpack.c.b16 %v1227, %v1226
          %v1238 = vpack.c.b16 %v1229, %v1228
          %v1239 = vpack.c.b16 %v1231, %v1230
          %vm1240 = vcmask 523264
          %v1242 = vsel %vm1240, %v1232, 0
          %v1245 = vsel %vm1240, %v1233, 0
          %v1248 = vsel %vm1240, %v1234, 0
          %v1251 = vsel %vm1240, %v1235, 0
          %v1254 = vsel %vm1240, %v1236, 0
          %v1257 = vsel %vm1240, %v1237, 0
          %v1260 = vsel %vm1240, %v1238, 0
          %v1263 = vsel %vm1240, %v1239, 0
          %1265 = vmatprep.subr.bf16.mxu0 %v1169
          %1266 = vmatpush1.bf16.msra.mxu0 %v1168
          %1267 = vmatprep.subr.bf16.mxu0 %v1177
          %1268 = vmatpush1.bf16.msra.mxu0 %v1176
          %1269 = vmatprep.subr.bf16.mxu0 %v1185
          %1270 = vmatpush1.bf16.msra.mxu0 %v1184
          %1271 = vmatprep.subr.bf16.mxu0 %v1193
          %1272 = vmatpush1.bf16.msra.mxu0 %v1192
          %1273 = vmatprep.subr.bf16.mxu0 0
          %1274 = vmatpush1.bf16.msra.mxu0 0
          %1275 = vmatprep.subr.bf16.mxu0 0
          %1276 = vmatpush1.bf16.msra.mxu0 0
          %1277 = vmatprep.subr.bf16.mxu0 0
          %1278 = vmatpush1.bf16.msra.mxu0 0
          %1279 = vmatprep.subr.bf16.mxu0 0
          %1280 = vmatpush1.bf16.msra.mxu0 0
          %1281 = vmatprep.subr.bf16.mxu0 0
          %1282 = vmatpush1.bf16.msra.mxu0 0
          %1283 = vmatprep.subr.bf16.mxu0 0
          %1284 = vmatpush1.bf16.msra.mxu0 0
          %1285 = vmatprep.subr.bf16.mxu0 0
          %1286 = vmatpush1.bf16.msra.mxu0 0
          %1287 = vmatprep.subr.bf16.mxu0 0
          %1288 = vmatpush1.bf16.msra.mxu0 0
          %1289 = vmatprep.subr.bf16.mxu0 0
          %1290 = vmatpush1.bf16.msra.mxu0 0
          %1291 = vmatprep.subr.bf16.mxu0 0
          %1292 = vmatpush1.bf16.msra.mxu0 0
          %1293 = vmatprep.subr.bf16.mxu0 0
          %1294 = vmatpush1.bf16.msra.mxu0 0
          %1295 = vmatprep.subr.bf16.mxu0 0
          %1296 = vmatpush1.bf16.msra.mxu0 0
          %1297 = vmatprep.mubr.bf16.mxu0 0
          %1298 = vmatmul.mubr.bf16.gmra.mrb[0].mxu0 %v1242
          %v1299 = vpop.f32.mrb[0].mxu0
          %v1300 = vadd.f32 %v556, %v1299
          %v1301 = vpop.f32.mrb[0].mxu0
          %v1302 = vadd.f32 %v556, %v1301
          %v1303 = vpop.f32.mrb[0].mxu0
          %v1304 = vadd.f32 %v561, %v1303
          %v1305 = vpop.f32.mrb[0].mxu0
          %v1306 = vadd.f32 %v561, %v1305
          %1307 = vmatprep.mubr.bf16.mxu0 0
          %1308 = vmatmul.mubr.bf16.gmra.mrb[0].mxu0 %v1245
          %v1309 = vpop.f32.mrb[0].mxu0
          %v1310 = vadd.f32 %v566, %v1309
          %v1311 = vpop.f32.mrb[0].mxu0
          %v1312 = vadd.f32 %v566, %v1311
          %v1313 = vpop.f32.mrb[0].mxu0
          %v1314 = vadd.f32 %v571, %v1313
          %v1315 = vpop.f32.mrb[0].mxu0
          %v1316 = vadd.f32 %v571, %v1315
          %1317 = vmatprep.mubr.bf16.mxu0 0
          %1318 = vmatmul.mubr.bf16.gmra.mrb[0].mxu0 %v1248
          %v1319 = vpop.f32.mrb[0].mxu0
          %v1320 = vadd.f32 %v576, %v1319
          %v1321 = vpop.f32.mrb[0].mxu0
          %v1322 = vadd.f32 %v576, %v1321
          %v1323 = vpop.f32.mrb[0].mxu0
          %v1324 = vadd.f32 %v581, %v1323
          %v1325 = vpop.f32.mrb[0].mxu0
          %v1326 = vadd.f32 %v581, %v1325
          %1327 = vmatprep.mubr.bf16.mxu0 0
          %1328 = vmatmul.mubr.bf16.gmra.mrb[0].mxu0 %v1251
          %v1329 = vpop.f32.mrb[0].mxu0
          %v1330 = vadd.f32 %v586, %v1329
          %v1331 = vpop.f32.mrb[0].mxu0
          %v1332 = vadd.f32 %v586, %v1331
          %v1333 = vpop.f32.mrb[0].mxu0
          %v1334 = vadd.f32 %v591, %v1333
          %v1335 = vpop.f32.mrb[0].mxu0
          %v1336 = vadd.f32 %v591, %v1335
          %1337 = vmatprep.mubr.bf16.mxu0 0
          %1338 = vmatmul.mubr.bf16.gmra.mrb[0].mxu0 %v1254
          %v1339 = vpop.f32.mrb[0].mxu0
          %v1340 = vadd.f32 %v596, %v1339
          %v1341 = vpop.f32.mrb[0].mxu0
          %v1342 = vadd.f32 %v596, %v1341
          %v1343 = vpop.f32.mrb[0].mxu0
          %v1344 = vadd.f32 %v601, %v1343
          %v1345 = vpop.f32.mrb[0].mxu0
          %v1346 = vadd.f32 %v601, %v1345
          %1347 = vmatprep.mubr.bf16.mxu0 0
          %1348 = vmatmul.mubr.bf16.gmra.mrb[0].mxu0 %v1257
          %v1349 = vpop.f32.mrb[0].mxu0
          %v1350 = vadd.f32 %v606, %v1349
          %v1351 = vpop.f32.mrb[0].mxu0
          %v1352 = vadd.f32 %v606, %v1351
          %v1353 = vpop.f32.mrb[0].mxu0
          %v1354 = vadd.f32 %v611, %v1353
          %v1355 = vpop.f32.mrb[0].mxu0
          %v1356 = vadd.f32 %v611, %v1355
          %1357 = vmatprep.mubr.bf16.mxu0 0
          %1358 = vmatmul.mubr.bf16.gmra.mrb[0].mxu0 %v1260
          %v1359 = vpop.f32.mrb[0].mxu0
          %v1360 = vadd.f32 %v616, %v1359
          %v1361 = vpop.f32.mrb[0].mxu0
          %v1362 = vadd.f32 %v616, %v1361
          %v1363 = vpop.f32.mrb[0].mxu0
          %v1364 = vadd.f32 %v621, %v1363
          %v1365 = vpop.f32.mrb[0].mxu0
          %v1366 = vadd.f32 %v621, %v1365
          %1367 = vmatprep.mubr.bf16.mxu0 0
          %1368 = vmatmul.mubr.bf16.gmra.mrb[0].mxu0 %v1263
          %v1369 = vpop.f32.mrb[0].mxu0
          %v1370 = vadd.f32 %v626, %v1369
          %v1371 = vpop.f32.mrb[0].mxu0
          %v1372 = vadd.f32 %v626, %v1371
          %v1373 = vpop.f32.mrb[0].mxu0
          %v1374 = vadd.f32 %v631, %v1373
          %v1375 = vpop.f32.mrb[0].mxu0
          %v1376 = vadd.f32 %v631, %v1375
          %1377 = vdwg.mxu0
          %1378 = vmatprep.subr.bf16.mxu0 %v1171
          %1379 = vmatpush1.bf16.msra.mxu0 %v1170
          %1380 = vmatprep.subr.bf16.mxu0 %v1179
          %1381 = vmatpush1.bf16.msra.mxu0 %v1178
          %1382 = vmatprep.subr.bf16.mxu0 %v1187
          %1383 = vmatpush1.bf16.msra.mxu0 %v1186
          %1384 = vmatprep.subr.bf16.mxu0 %v1195
          %1385 = vmatpush1.bf16.msra.mxu0 %v1194
          %1386 = vmatprep.subr.bf16.mxu0 0
          %1387 = vmatpush1.bf16.msra.mxu0 0
          %1388 = vmatprep.subr.bf16.mxu0 0
          %1389 = vmatpush1.bf16.msra.mxu0 0
          %1390 = vmatprep.subr.bf16.mxu0 0
          %1391 = vmatpush1.bf16.msra.mxu0 0
          %1392 = vmatprep.subr.bf16.mxu0 0
          %1393 = vmatpush1.bf16.msra.mxu0 0
          %1394 = vmatprep.subr.bf16.mxu0 0
          %1395 = vmatpush1.bf16.msra.mxu0 0
          %1396 = vmatprep.subr.bf16.mxu0 0
          %1397 = vmatpush1.bf16.msra.mxu0 0
          %1398 = vmatprep.subr.bf16.mxu0 0
          %1399 = vmatpush1.bf16.msra.mxu0 0
          %1400 = vmatprep.subr.bf16.mxu0 0
          %1401 = vmatpush1.bf16.msra.mxu0 0
          %1402 = vmatprep.subr.bf16.mxu0 0
          %1403 = vmatpush1.bf16.msra.mxu0 0
          %1404 = vmatprep.subr.bf16.mxu0 0
          %1405 = vmatpush1.bf16.msra.mxu0 0
          %1406 = vmatprep.subr.bf16.mxu0 0
          %1407 = vmatpush1.bf16.msra.mxu0 0
          %1408 = vmatprep.subr.bf16.mxu0 0
          %1409 = vmatpush1.bf16.msra.mxu0 0
          %1410 = vmatprep.mubr.bf16.mxu0 0
          %1411 = vmatmul.mubr.bf16.gmra.mrb[0].mxu0 %v1242
          %v1412 = vpop.f32.mrb[0].mxu0
          %v1413 = vadd.f32 %v556, %v1412
          %v1414 = vpop.f32.mrb[0].mxu0
          %v1415 = vadd.f32 %v556, %v1414
          %v1416 = vpop.f32.mrb[0].mxu0
          %v1417 = vadd.f32 %v561, %v1416
          %v1418 = vpop.f32.mrb[0].mxu0
          %v1419 = vadd.f32 %v561, %v1418
          %1420 = vmatprep.mubr.bf16.mxu0 0
          %1421 = vmatmul.mubr.bf16.gmra.mrb[0].mxu0 %v1245
          %v1422 = vpop.f32.mrb[0].mxu0
          %v1423 = vadd.f32 %v566, %v1422
          %v1424 = vpop.f32.mrb[0].mxu0
          %v1425 = vadd.f32 %v566, %v1424
          %v1426 = vpop.f32.mrb[0].mxu0
          %v1427 = vadd.f32 %v571, %v1426
          %v1428 = vpop.f32.mrb[0].mxu0
          %v1429 = vadd.f32 %v571, %v1428
          %1430 = vmatprep.mubr.bf16.mxu0 0
          %1431 = vmatmul.mubr.bf16.gmra.mrb[0].mxu0 %v1248
          %v1432 = vpop.f32.mrb[0].mxu0
          %v1433 = vadd.f32 %v576, %v1432
          %v1434 = vpop.f32.mrb[0].mxu0
          %v1435 = vadd.f32 %v576, %v1434
          %v1436 = vpop.f32.mrb[0].mxu0
          %v1437 = vadd.f32 %v581, %v1436
          %v1438 = vpop.f32.mrb[0].mxu0
          %v1439 = vadd.f32 %v581, %v1438
          %1440 = vmatprep.mubr.bf16.mxu0 0
          %1441 = vmatmul.mubr.bf16.gmra.mrb[0].mxu0 %v1251
          %v1442 = vpop.f32.mrb[0].mxu0
          %v1443 = vadd.f32 %v586, %v1442
          %v1444 = vpop.f32.mrb[0].mxu0
          %v1445 = vadd.f32 %v586, %v1444
          %v1446 = vpop.f32.mrb[0].mxu0
          %v1447 = vadd.f32 %v591, %v1446
          %v1448 = vpop.f32.mrb[0].mxu0
          %v1449 = vadd.f32 %v591, %v1448
          %1450 = vmatprep.mubr.bf16.mxu0 0
          %1451 = vmatmul.mubr.bf16.gmra.mrb[0].mxu0 %v1254
          %v1452 = vpop.f32.mrb[0].mxu0
          %v1453 = vadd.f32 %v596, %v1452
          %v1454 = vpop.f32.mrb[0].mxu0
          %v1455 = vadd.f32 %v596, %v1454
          %v1456 = vpop.f32.mrb[0].mxu0
          %v1457 = vadd.f32 %v601, %v1456
          %v1458 = vpop.f32.mrb[0].mxu0
          %v1459 = vadd.f32 %v601, %v1458
          %1460 = vmatprep.mubr.bf16.mxu0 0
          %1461 = vmatmul.mubr.bf16.gmra.mrb[0].mxu0 %v1257
          %v1462 = vpop.f32.mrb[0].mxu0
          %v1463 = vadd.f32 %v606, %v1462
          %v1464 = vpop.f32.mrb[0].mxu0
          %v1465 = vadd.f32 %v606, %v1464
          %v1466 = vpop.f32.mrb[0].mxu0
          %v1467 = vadd.f32 %v611, %v1466
          %v1468 = vpop.f32.mrb[0].mxu0
          %v1469 = vadd.f32 %v611, %v1468
          %1470 = vmatprep.mubr.bf16.mxu0 0
          %1471 = vmatmul.mubr.bf16.gmra.mrb[0].mxu0 %v1260
          %v1472 = vpop.f32.mrb[0].mxu0
          %v1473 = vadd.f32 %v616, %v1472
          %v1474 = vpop.f32.mrb[0].mxu0
          %v1475 = vadd.f32 %v616, %v1474
          %v1476 = vpop.f32.mrb[0].mxu0
          %v1477 = vadd.f32 %v621, %v1476
          %v1478 = vpop.f32.mrb[0].mxu0
          %v1479 = vadd.f32 %v621, %v1478
          %1480 = vmatprep.mubr.bf16.mxu0 0
          %1481 = vmatmul.mubr.bf16.gmra.mrb[0].mxu0 %v1263
          %v1482 = vpop.f32.mrb[0].mxu0
          %v1483 = vadd.f32 %v626, %v1482
          %v1484 = vpop.f32.mrb[0].mxu0
          %v1485 = vadd.f32 %v626, %v1484
          %v1486 = vpop.f32.mrb[0].mxu0
          %v1487 = vadd.f32 %v631, %v1486
          %v1488 = vpop.f32.mrb[0].mxu0
          %v1489 = vadd.f32 %v631, %v1488
          %1490 = vdwg.mxu0
          %1491 = vmatprep.subr.bf16.mxu0 %v1173
          %1492 = vmatpush1.bf16.msra.mxu0 %v1172
          %1493 = vmatprep.subr.bf16.mxu0 %v1181
          %1494 = vmatpush1.bf16.msra.mxu0 %v1180
          %1495 = vmatprep.subr.bf16.mxu0 %v1189
          %1496 = vmatpush1.bf16.msra.mxu0 %v1188
          %1497 = vmatprep.subr.bf16.mxu0 %v1197
          %1498 = vmatpush1.bf16.msra.mxu0 %v1196
          %1499 = vmatprep.subr.bf16.mxu0 0
          %1500 = vmatpush1.bf16.msra.mxu0 0
          %1501 = vmatprep.subr.bf16.mxu0 0
          %1502 = vmatpush1.bf16.msra.mxu0 0
          %1503 = vmatprep.subr.bf16.mxu0 0
          %1504 = vmatpush1.bf16.msra.mxu0 0
          %1505 = vmatprep.subr.bf16.mxu0 0
          %1506 = vmatpush1.bf16.msra.mxu0 0
          %1507 = vmatprep.subr.bf16.mxu0 0
          %1508 = vmatpush1.bf16.msra.mxu0 0
          %1509 = vmatprep.subr.bf16.mxu0 0
          %1510 = vmatpush1.bf16.msra.mxu0 0
          %1511 = vmatprep.subr.bf16.mxu0 0
          %1512 = vmatpush1.bf16.msra.mxu0 0
          %1513 = vmatprep.subr.bf16.mxu0 0
          %1514 = vmatpush1.bf16.msra.mxu0 0
          %1515 = vmatprep.subr.bf16.mxu0 0
          %1516 = vmatpush1.bf16.msra.mxu0 0
          %1517 = vmatprep.subr.bf16.mxu0 0
          %1518 = vmatpush1.bf16.msra.mxu0 0
          %1519 = vmatprep.subr.bf16.mxu0 0
          %1520 = vmatpush1.bf16.msra.mxu0 0
          %1521 = vmatprep.subr.bf16.mxu0 0
          %1522 = vmatpush1.bf16.msra.mxu0 0
          %1523 = vmatprep.mubr.bf16.mxu0 0
          %1524 = vmatmul.mubr.bf16.gmra.mrb[0].mxu0 %v1242
          %v1525 = vpop.f32.mrb[0].mxu0
          %v1526 = vadd.f32 %v556, %v1525
          %v1527 = vpop.f32.mrb[0].mxu0
          %v1528 = vadd.f32 %v556, %v1527
          %v1529 = vpop.f32.mrb[0].mxu0
          %v1530 = vadd.f32 %v561, %v1529
          %v1531 = vpop.f32.mrb[0].mxu0
          %v1532 = vadd.f32 %v561, %v1531
          %1533 = vmatprep.mubr.bf16.mxu0 0
          %1534 = vmatmul.mubr.bf16.gmra.mrb[0].mxu0 %v1245
          %v1535 = vpop.f32.mrb[0].mxu0
          %v1536 = vadd.f32 %v566, %v1535
          %v1537 = vpop.f32.mrb[0].mxu0
          %v1538 = vadd.f32 %v566, %v1537
          %v1539 = vpop.f32.mrb[0].mxu0
          %v1540 = vadd.f32 %v571, %v1539
          %v1541 = vpop.f32.mrb[0].mxu0
          %v1542 = vadd.f32 %v571, %v1541
          %1543 = vmatprep.mubr.bf16.mxu0 0
          %1544 = vmatmul.mubr.bf16.gmra.mrb[0].mxu0 %v1248
          %v1545 = vpop.f32.mrb[0].mxu0
          %v1546 = vadd.f32 %v576, %v1545
          %v1547 = vpop.f32.mrb[0].mxu0
          %v1548 = vadd.f32 %v576, %v1547
          %v1549 = vpop.f32.mrb[0].mxu0
          %v1550 = vadd.f32 %v581, %v1549
          %v1551 = vpop.f32.mrb[0].mxu0
          %v1552 = vadd.f32 %v581, %v1551
          %1553 = vmatprep.mubr.bf16.mxu0 0
          %1554 = vmatmul.mubr.bf16.gmra.mrb[0].mxu0 %v1251
          %v1555 = vpop.f32.mrb[0].mxu0
          %v1556 = vadd.f32 %v586, %v1555
          %v1557 = vpop.f32.mrb[0].mxu0
          %v1558 = vadd.f32 %v586, %v1557
          %v1559 = vpop.f32.mrb[0].mxu0
          %v1560 = vadd.f32 %v591, %v1559
          %v1561 = vpop.f32.mrb[0].mxu0
          %v1562 = vadd.f32 %v591, %v1561
          %1563 = vmatprep.mubr.bf16.mxu0 0
          %1564 = vmatmul.mubr.bf16.gmra.mrb[0].mxu0 %v1254
          %v1565 = vpop.f32.mrb[0].mxu0
          %v1566 = vadd.f32 %v596, %v1565
          %v1567 = vpop.f32.mrb[0].mxu0
          %v1568 = vadd.f32 %v596, %v1567
          %v1569 = vpop.f32.mrb[0].mxu0
          %v1570 = vadd.f32 %v601, %v1569
          %v1571 = vpop.f32.mrb[0].mxu0
          %v1572 = vadd.f32 %v601, %v1571
          %1573 = vmatprep.mubr.bf16.mxu0 0
          %1574 = vmatmul.mubr.bf16.gmra.mrb[0].mxu0 %v1257
          %v1575 = vpop.f32.mrb[0].mxu0
          %v1576 = vadd.f32 %v606, %v1575
          %v1577 = vpop.f32.mrb[0].mxu0
          %v1578 = vadd.f32 %v606, %v1577
          %v1579 = vpop.f32.mrb[0].mxu0
          %v1580 = vadd.f32 %v611, %v1579
          %v1581 = vpop.f32.mrb[0].mxu0
          %v1582 = vadd.f32 %v611, %v1581
          %1583 = vmatprep.mubr.bf16.mxu0 0
          %1584 = vmatmul.mubr.bf16.gmra.mrb[0].mxu0 %v1260
          %v1585 = vpop.f32.mrb[0].mxu0
          %v1586 = vadd.f32 %v616, %v1585
          %v1587 = vpop.f32.mrb[0].mxu0
          %v1588 = vadd.f32 %v616, %v1587
          %v1589 = vpop.f32.mrb[0].mxu0
          %v1590 = vadd.f32 %v621, %v1589
          %v1591 = vpop.f32.mrb[0].mxu0
          %v1592 = vadd.f32 %v621, %v1591
          %1593 = vmatprep.mubr.bf16.mxu0 0
          %1594 = vmatmul.mubr.bf16.gmra.mrb[0].mxu0 %v1263
          %v1595 = vpop.f32.mrb[0].mxu0
          %v1596 = vadd.f32 %v626, %v1595
          %v1597 = vpop.f32.mrb[0].mxu0
          %v1598 = vadd.f32 %v626, %v1597
          %v1599 = vpop.f32.mrb[0].mxu0
          %v1600 = vadd.f32 %v631, %v1599
          %v1601 = vpop.f32.mrb[0].mxu0
          %v1602 = vadd.f32 %v631, %v1601
          %1603 = vdwg.mxu0
          %1604 = vmatprep.subr.bf16.mxu0 %v1175
          %1605 = vmatpush1.bf16.msra.mxu0 %v1174
          %1606 = vmatprep.subr.bf16.mxu0 %v1183
          %1607 = vmatpush1.bf16.msra.mxu0 %v1182
          %1608 = vmatprep.subr.bf16.mxu0 %v1191
          %1609 = vmatpush1.bf16.msra.mxu0 %v1190
          %1610 = vmatprep.subr.bf16.mxu0 %v1199
          %1611 = vmatpush1.bf16.msra.mxu0 %v1198
          %1612 = vmatprep.subr.bf16.mxu0 0
          %1613 = vmatpush1.bf16.msra.mxu0 0
          %1614 = vmatprep.subr.bf16.mxu0 0
          %1615 = vmatpush1.bf16.msra.mxu0 0
          %1616 = vmatprep.subr.bf16.mxu0 0
          %1617 = vmatpush1.bf16.msra.mxu0 0
          %1618 = vmatprep.subr.bf16.mxu0 0
          %1619 = vmatpush1.bf16.msra.mxu0 0
          %1620 = vmatprep.subr.bf16.mxu0 0
          %1621 = vmatpush1.bf16.msra.mxu0 0
          %1622 = vmatprep.subr.bf16.mxu0 0
          %1623 = vmatpush1.bf16.msra.mxu0 0
          %1624 = vmatprep.subr.bf16.mxu0 0
          %1625 = vmatpush1.bf16.msra.mxu0 0
          %1626 = vmatprep.subr.bf16.mxu0 0
          %1627 = vmatpush1.bf16.msra.mxu0 0
          %1628 = vmatprep.subr.bf16.mxu0 0
          %1629 = vmatpush1.bf16.msra.mxu0 0
          %1630 = vmatprep.subr.bf16.mxu0 0
          %1631 = vmatpush1.bf16.msra.mxu0 0
          %1632 = vmatprep.subr.bf16.mxu0 0
          %1633 = vmatpush1.bf16.msra.mxu0 0
          %1634 = vmatprep.subr.bf16.mxu0 0
          %1635 = vmatpush1.bf16.msra.mxu0 0
          %1636 = vmatprep.mubr.bf16.mxu0 0
          %1637 = vmatmul.mubr.bf16.gmra.mrb[0].mxu0 %v1242
          %v1638 = vpop.f32.mrb[0].mxu0
          %v1639 = vadd.f32 %v556, %v1638
          %v1640 = vpop.f32.mrb[0].mxu0
          %v1641 = vadd.f32 %v556, %v1640
          %v1642 = vpop.f32.mrb[0].mxu0
          %v1643 = vadd.f32 %v561, %v1642
          %v1644 = vpop.f32.mrb[0].mxu0
          %v1645 = vadd.f32 %v561, %v1644
          %1646 = vmatprep.mubr.bf16.mxu0 0
          %1647 = vmatmul.mubr.bf16.gmra.mrb[0].mxu0 %v1245
          %v1648 = vpop.f32.mrb[0].mxu0
          %v1649 = vadd.f32 %v566, %v1648
          %v1650 = vpop.f32.mrb[0].mxu0
          %v1651 = vadd.f32 %v566, %v1650
          %v1652 = vpop.f32.mrb[0].mxu0
          %v1653 = vadd.f32 %v571, %v1652
          %v1654 = vpop.f32.mrb[0].mxu0
          %v1655 = vadd.f32 %v571, %v1654
          %1656 = vmatprep.mubr.bf16.mxu0 0
          %1657 = vmatmul.mubr.bf16.gmra.mrb[0].mxu0 %v1248
          %v1658 = vpop.f32.mrb[0].mxu0
          %v1659 = vadd.f32 %v576, %v1658
          %v1660 = vpop.f32.mrb[0].mxu0
          %v1661 = vadd.f32 %v576, %v1660
          %v1662 = vpop.f32.mrb[0].mxu0
          %v1663 = vadd.f32 %v581, %v1662
          %v1664 = vpop.f32.mrb[0].mxu0
          %v1665 = vadd.f32 %v581, %v1664
          %1666 = vmatprep.mubr.bf16.mxu0 0
          %1667 = vmatmul.mubr.bf16.gmra.mrb[0].mxu0 %v1251
          %v1668 = vpop.f32.mrb[0].mxu0
          %v1669 = vadd.f32 %v586, %v1668
          %v1670 = vpop.f32.mrb[0].mxu0
          %v1671 = vadd.f32 %v586, %v1670
          %v1672 = vpop.f32.mrb[0].mxu0
          %v1673 = vadd.f32 %v591, %v1672
          %v1674 = vpop.f32.mrb[0].mxu0
          %v1675 = vadd.f32 %v591, %v1674
          %1676 = vmatprep.mubr.bf16.mxu0 0
          %1677 = vmatmul.mubr.bf16.gmra.mrb[0].mxu0 %v1254
          %v1678 = vpop.f32.mrb[0].mxu0
          %v1679 = vadd.f32 %v596, %v1678
          %v1680 = vpop.f32.mrb[0].mxu0
          %v1681 = vadd.f32 %v596, %v1680
          %v1682 = vpop.f32.mrb[0].mxu0
          %v1683 = vadd.f32 %v601, %v1682
          %v1684 = vpop.f32.mrb[0].mxu0
          %v1685 = vadd.f32 %v601, %v1684
          %1686 = vmatprep.mubr.bf16.mxu0 0
          %1687 = vmatmul.mubr.bf16.gmra.mrb[0].mxu0 %v1257
          %v1688 = vpop.f32.mrb[0].mxu0
          %v1689 = vadd.f32 %v606, %v1688
          %v1690 = vpop.f32.mrb[0].mxu0
          %v1691 = vadd.f32 %v606, %v1690
          %v1692 = vpop.f32.mrb[0].mxu0
          %v1693 = vadd.f32 %v611, %v1692
          %v1694 = vpop.f32.mrb[0].mxu0
          %v1695 = vadd.f32 %v611, %v1694
          %1696 = vmatprep.mubr.bf16.mxu0 0
          %1697 = vmatmul.mubr.bf16.gmra.mrb[0].mxu0 %v1260
          %v1698 = vpop.f32.mrb[0].mxu0
          %v1699 = vadd.f32 %v616, %v1698
          %v1700 = vpop.f32.mrb[0].mxu0
          %v1701 = vadd.f32 %v616, %v1700
          %v1702 = vpop.f32.mrb[0].mxu0
          %v1703 = vadd.f32 %v621, %v1702
          %v1704 = vpop.f32.mrb[0].mxu0
          %v1705 = vadd.f32 %v621, %v1704
          %1706 = vmatprep.mubr.bf16.mxu0 0
          %1707 = vmatmul.mubr.bf16.gmra.mrb[0].mxu0 %v1263
          %v1708 = vpop.f32.mrb[0].mxu0
          %v1709 = vadd.f32 %v626, %v1708
          %v1710 = vpop.f32.mrb[0].mxu0
          %v1711 = vadd.f32 %v626, %v1710
          %v1712 = vpop.f32.mrb[0].mxu0
          %v1713 = vadd.f32 %v631, %v1712
          %v1714 = vpop.f32.mrb[0].mxu0
          %v1715 = vadd.f32 %v631, %v1714
          %1716 = vdwg.mxu0
          %v1717 = vmax.f32 %v1300, 0.0
          %v1718 = vmax.f32 %v1302, 0.0
          %v1719 = vmax.f32 %v1413, 0.0
          %v1720 = vmax.f32 %v1415, 0.0
          %v1721 = vmax.f32 %v1526, 0.0
          %v1722 = vmax.f32 %v1528, 0.0
          %v1723 = vmax.f32 %v1639, 0.0
          %v1724 = vmax.f32 %v1641, 0.0
          %v1725 = vmax.f32 %v1304, 0.0
          %v1726 = vmax.f32 %v1306, 0.0
          %v1727 = vmax.f32 %v1417, 0.0
          %v1728 = vmax.f32 %v1419, 0.0
          %v1729 = vmax.f32 %v1530, 0.0
          %v1730 = vmax.f32 %v1532, 0.0
          %v1731 = vmax.f32 %v1643, 0.0
          %v1732 = vmax.f32 %v1645, 0.0
          %v1733 = vmax.f32 %v1310, 0.0
          %v1734 = vmax.f32 %v1312, 0.0
          %v1735 = vmax.f32 %v1423, 0.0
          %v1736 = vmax.f32 %v1425, 0.0
          %v1737 = vmax.f32 %v1536, 0.0
          %v1738 = vmax.f32 %v1538, 0.0
          %v1739 = vmax.f32 %v1649, 0.0
          %v1740 = vmax.f32 %v1651, 0.0
          %v1741 = vmax.f32 %v1314, 0.0
          %v1742 = vmax.f32 %v1316, 0.0
          %v1743 = vmax.f32 %v1427, 0.0
          %v1744 = vmax.f32 %v1429, 0.0
          %v1745 = vmax.f32 %v1540, 0.0
          %v1746 = vmax.f32 %v1542, 0.0
          %v1747 = vmax.f32 %v1653, 0.0
          %v1748 = vmax.f32 %v1655, 0.0
          %v1749 = vmax.f32 %v1320, 0.0
          %v1750 = vmax.f32 %v1322, 0.0
          %v1751 = vmax.f32 %v1433, 0.0
          %v1752 = vmax.f32 %v1435, 0.0
          %v1753 = vmax.f32 %v1546, 0.0
          %v1754 = vmax.f32 %v1548, 0.0
          %v1755 = vmax.f32 %v1659, 0.0
          %v1756 = vmax.f32 %v1661, 0.0
          %v1757 = vmax.f32 %v1324, 0.0
          %v1758 = vmax.f32 %v1326, 0.0
          %v1759 = vmax.f32 %v1437, 0.0
          %v1760 = vmax.f32 %v1439, 0.0
          %v1761 = vmax.f32 %v1550, 0.0
          %v1762 = vmax.f32 %v1552, 0.0
          %v1763 = vmax.f32 %v1663, 0.0
          %v1764 = vmax.f32 %v1665, 0.0
          %v1765 = vmax.f32 %v1330, 0.0
          %v1766 = vmax.f32 %v1332, 0.0
          %v1767 = vmax.f32 %v1443, 0.0
          %v1768 = vmax.f32 %v1445, 0.0
          %v1769 = vmax.f32 %v1556, 0.0
          %v1770 = vmax.f32 %v1558, 0.0
          %v1771 = vmax.f32 %v1669, 0.0
          %v1772 = vmax.f32 %v1671, 0.0
          %v1773 = vmax.f32 %v1334, 0.0
          %v1774 = vmax.f32 %v1336, 0.0
          %v1775 = vmax.f32 %v1447, 0.0
          %v1776 = vmax.f32 %v1449, 0.0
          %v1777 = vmax.f32 %v1560, 0.0
          %v1778 = vmax.f32 %v1562, 0.0
          %v1779 = vmax.f32 %v1673, 0.0
          %v1780 = vmax.f32 %v1675, 0.0
          %v1781 = vmax.f32 %v1340, 0.0
          %v1782 = vmax.f32 %v1342, 0.0
          %v1783 = vmax.f32 %v1453, 0.0
          %v1784 = vmax.f32 %v1455, 0.0
          %v1785 = vmax.f32 %v1566, 0.0
          %v1786 = vmax.f32 %v1568, 0.0
          %v1787 = vmax.f32 %v1679, 0.0
          %v1788 = vmax.f32 %v1681, 0.0
          %v1789 = vmax.f32 %v1344, 0.0
          %v1790 = vmax.f32 %v1346, 0.0
          %v1791 = vmax.f32 %v1457, 0.0
          %v1792 = vmax.f32 %v1459, 0.0
          %v1793 = vmax.f32 %v1570, 0.0
          %v1794 = vmax.f32 %v1572, 0.0
          %v1795 = vmax.f32 %v1683, 0.0
          %v1796 = vmax.f32 %v1685, 0.0
          %v1797 = vmax.f32 %v1350, 0.0
          %v1798 = vmax.f32 %v1352, 0.0
          %v1799 = vmax.f32 %v1463, 0.0
          %v1800 = vmax.f32 %v1465, 0.0
          %v1801 = vmax.f32 %v1576, 0.0
          %v1802 = vmax.f32 %v1578, 0.0
          %v1803 = vmax.f32 %v1689, 0.0
          %v1804 = vmax.f32 %v1691, 0.0
          %v1805 = vmax.f32 %v1354, 0.0
          %v1806 = vmax.f32 %v1356, 0.0
          %v1807 = vmax.f32 %v1467, 0.0
          %v1808 = vmax.f32 %v1469, 0.0
          %v1809 = vmax.f32 %v1580, 0.0
          %v1810 = vmax.f32 %v1582, 0.0
          %v1811 = vmax.f32 %v1693, 0.0
          %v1812 = vmax.f32 %v1695, 0.0
          %v1813 = vmax.f32 %v1360, 0.0
          %v1814 = vmax.f32 %v1362, 0.0
          %v1815 = vmax.f32 %v1473, 0.0
          %v1816 = vmax.f32 %v1475, 0.0
          %v1817 = vmax.f32 %v1586, 0.0
          %v1818 = vmax.f32 %v1588, 0.0
          %v1819 = vmax.f32 %v1699, 0.0
          %v1820 = vmax.f32 %v1701, 0.0
          %v1821 = vmax.f32 %v1364, 0.0
          %v1822 = vmax.f32 %v1366, 0.0
          %v1823 = vmax.f32 %v1477, 0.0
          %v1824 = vmax.f32 %v1479, 0.0
          %v1825 = vmax.f32 %v1590, 0.0
          %v1826 = vmax.f32 %v1592, 0.0
          %v1827 = vmax.f32 %v1703, 0.0
          %v1828 = vmax.f32 %v1705, 0.0
          %v1829 = vmax.f32 %v1370, 0.0
          %v1830 = vmax.f32 %v1372, 0.0
          %v1831 = vmax.f32 %v1483, 0.0
          %v1832 = vmax.f32 %v1485, 0.0
          %v1833 = vmax.f32 %v1596, 0.0
          %v1834 = vmax.f32 %v1598, 0.0
          %v1835 = vmax.f32 %v1709, 0.0
          %v1836 = vmax.f32 %v1711, 0.0
          %v1837 = vmax.f32 %v1374, 0.0
          %v1838 = vmax.f32 %v1376, 0.0
          %v1839 = vmax.f32 %v1487, 0.0
          %v1840 = vmax.f32 %v1489, 0.0
          %v1841 = vmax.f32 %v1600, 0.0
          %v1842 = vmax.f32 %v1602, 0.0
          %v1843 = vmax.f32 %v1713, 0.0
          %v1844 = vmax.f32 %v1715, 0.0
          %v1845 = vpack.c.bf16 %v1725, %v1717
          %v1846 = vpack.c.bf16 %v1726, %v1718
          %v1847 = vpack.c.bf16 %v1727, %v1719
          %v1848 = vpack.c.bf16 %v1728, %v1720
          %v1849 = vpack.c.bf16 %v1729, %v1721
          %v1850 = vpack.c.bf16 %v1730, %v1722
          %v1851 = vpack.c.bf16 %v1731, %v1723
          %v1852 = vpack.c.bf16 %v1732, %v1724
          %v1853 = vpack.c.bf16 %v1741, %v1733
          %v1854 = vpack.c.bf16 %v1742, %v1734
          %v1855 = vpack.c.bf16 %v1743, %v1735
          %v1856 = vpack.c.bf16 %v1744, %v1736
          %v1857 = vpack.c.bf16 %v1745, %v1737
          %v1858 = vpack.c.bf16 %v1746, %v1738
          %v1859 = vpack.c.bf16 %v1747, %v1739
          %v1860 = vpack.c.bf16 %v1748, %v1740
          %v1861 = vpack.c.bf16 %v1757, %v1749
          %v1862 = vpack.c.bf16 %v1758, %v1750
          %v1863 = vpack.c.bf16 %v1759, %v1751
          %v1864 = vpack.c.bf16 %v1760, %v1752
          %v1865 = vpack.c.bf16 %v1761, %v1753
          %v1866 = vpack.c.bf16 %v1762, %v1754
          %v1867 = vpack.c.bf16 %v1763, %v1755
          %v1868 = vpack.c.bf16 %v1764, %v1756
          %v1869 = vpack.c.bf16 %v1773, %v1765
          %v1870 = vpack.c.bf16 %v1774, %v1766
          %v1871 = vpack.c.bf16 %v1775, %v1767
          %v1872 = vpack.c.bf16 %v1776, %v1768
          %v1873 = vpack.c.bf16 %v1777, %v1769
          %v1874 = vpack.c.bf16 %v1778, %v1770
          %v1875 = vpack.c.bf16 %v1779, %v1771
          %v1876 = vpack.c.bf16 %v1780, %v1772
          %v1877 = vpack.c.bf16 %v1789, %v1781
          %v1878 = vpack.c.bf16 %v1790, %v1782
          %v1879 = vpack.c.bf16 %v1791, %v1783
          %v1880 = vpack.c.bf16 %v1792, %v1784
          %v1881 = vpack.c.bf16 %v1793, %v1785
          %v1882 = vpack.c.bf16 %v1794, %v1786
          %v1883 = vpack.c.bf16 %v1795, %v1787
          %v1884 = vpack.c.bf16 %v1796, %v1788
          %v1885 = vpack.c.bf16 %v1805, %v1797
          %v1886 = vpack.c.bf16 %v1806, %v1798
          %v1887 = vpack.c.bf16 %v1807, %v1799
          %v1888 = vpack.c.bf16 %v1808, %v1800
          %v1889 = vpack.c.bf16 %v1809, %v1801
          %v1890 = vpack.c.bf16 %v1810, %v1802
          %v1891 = vpack.c.bf16 %v1811, %v1803
          %v1892 = vpack.c.bf16 %v1812, %v1804
          %v1893 = vpack.c.bf16 %v1821, %v1813
          %v1894 = vpack.c.bf16 %v1822, %v1814
          %v1895 = vpack.c.bf16 %v1823, %v1815
          %v1896 = vpack.c.bf16 %v1824, %v1816
          %v1897 = vpack.c.bf16 %v1825, %v1817
          %v1898 = vpack.c.bf16 %v1826, %v1818
          %v1899 = vpack.c.bf16 %v1827, %v1819
          %v1900 = vpack.c.bf16 %v1828, %v1820
          %v1901 = vpack.c.bf16 %v1837, %v1829
          %v1902 = vpack.c.bf16 %v1838, %v1830
          %v1903 = vpack.c.bf16 %v1839, %v1831
          %v1904 = vpack.c.bf16 %v1840, %v1832
          %v1905 = vpack.c.bf16 %v1841, %v1833
          %v1906 = vpack.c.bf16 %v1842, %v1834
          %v1907 = vpack.c.bf16 %v1843, %v1835
          %v1908 = vpack.c.bf16 %v1844, %v1836
          %v1925 = vunpack.c.l.b16 %v473
          %v1926 = vunpack.c.l.b16 %v474
          %v1927 = vunpack.c.l.b16 %v475
          %v1928 = vunpack.c.l.b16 %v476
          %v1929 = vunpack.c.l.b16 %v477
          %v1930 = vunpack.c.l.b16 %v478
          %v1931 = vunpack.c.l.b16 %v479
          %v1932 = vunpack.c.l.b16 %v480
          %v1933 = vunpack.c.l.b16 %v481
          %v1934 = vunpack.c.l.b16 %v482
          %v1935 = vunpack.c.l.b16 %v483
          %v1936 = vunpack.c.l.b16 %v484
          %v1937 = vunpack.c.l.b16 %v485
          %v1938 = vunpack.c.l.b16 %v486
          %v1939 = vunpack.c.l.b16 %v487
          %v1940 = vunpack.c.l.b16 %v488
          %v1941 = vpack.c.b16 %v1926, %v1925
          %v1942 = vpack.c.b16 %v1928, %v1927
          %v1943 = vpack.c.b16 %v1930, %v1929
          %v1944 = vpack.c.b16 %v1932, %v1931
          %v1945 = vpack.c.b16 %v1934, %v1933
          %v1946 = vpack.c.b16 %v1936, %v1935
          %v1947 = vpack.c.b16 %v1938, %v1937
          %v1948 = vpack.c.b16 %v1940, %v1939
          %1957 = vmatprep.subr.bf16.mxu0 %v1846
          %1958 = vmatpush1.bf16.msra.mxu0 %v1845
          %1959 = vmatprep.subr.bf16.mxu0 %v1854
          %1960 = vmatpush1.bf16.msra.mxu0 %v1853
          %1961 = vmatprep.subr.bf16.mxu0 %v1862
          %1962 = vmatpush1.bf16.msra.mxu0 %v1861
          %1963 = vmatprep.subr.bf16.mxu0 %v1870
          %1964 = vmatpush1.bf16.msra.mxu0 %v1869
          %1965 = vmatprep.subr.bf16.mxu0 %v1878
          %1966 = vmatpush1.bf16.msra.mxu0 %v1877
          %1967 = vmatprep.subr.bf16.mxu0 %v1886
          %1968 = vmatpush1.bf16.msra.mxu0 %v1885
          %1969 = vmatprep.subr.bf16.mxu0 %v1894
          %1970 = vmatpush1.bf16.msra.mxu0 %v1893
          %1971 = vmatprep.subr.bf16.mxu0 %v1902
          %1972 = vmatpush1.bf16.msra.mxu0 %v1901
          %1973 = vmatprep.subr.bf16.mxu0 0
          %1974 = vmatpush1.bf16.msra.mxu0 0
          %1975 = vmatprep.subr.bf16.mxu0 0
          %1976 = vmatpush1.bf16.msra.mxu0 0
          %1977 = vmatprep.subr.bf16.mxu0 0
          %1978 = vmatpush1.bf16.msra.mxu0 0
          %1979 = vmatprep.subr.bf16.mxu0 0
          %1980 = vmatpush1.bf16.msra.mxu0 0
          %1981 = vmatprep.subr.bf16.mxu0 0
          %1982 = vmatpush1.bf16.msra.mxu0 0
          %1983 = vmatprep.subr.bf16.mxu0 0
          %1984 = vmatpush1.bf16.msra.mxu0 0
          %1985 = vmatprep.subr.bf16.mxu0 0
          %1986 = vmatpush1.bf16.msra.mxu0 0
          %1987 = vmatprep.subr.bf16.mxu0 0
          %1988 = vmatpush1.bf16.msra.mxu0 0
          %1989 = vmatprep.mubr.bf16.mxu0 0
          %1990 = vmatmul.mubr.bf16.gmra.mrb[0].mxu0 %v1941
          %v1991 = vpop.f32.mrb[0].mxu0
          %v1992 = vadd.f32 %v652, %v1991
          %v1993 = vpop.f32.mrb[0].mxu0
          %v1994 = vadd.f32 %v652, %v1993
          %v1995 = vpop.f32.mrb[0].mxu0
          %v1996 = vadd.f32 %v657, %v1995
          %v1997 = vpop.f32.mrb[0].mxu0
          %v1998 = vadd.f32 %v657, %v1997
          %1999 = vmatprep.mubr.bf16.mxu0 0
          %2000 = vmatmul.mubr.bf16.gmra.mrb[0].mxu0 %v1942
          %v2001 = vpop.f32.mrb[0].mxu0
          %v2002 = vadd.f32 %v662, %v2001
          %v2003 = vpop.f32.mrb[0].mxu0
          %v2004 = vadd.f32 %v662, %v2003
          %v2005 = vpop.f32.mrb[0].mxu0
          %v2006 = vadd.f32 %v667, %v2005
          %v2007 = vpop.f32.mrb[0].mxu0
          %v2008 = vadd.f32 %v667, %v2007
          %2009 = vmatprep.mubr.bf16.mxu0 0
          %2010 = vmatmul.mubr.bf16.gmra.mrb[0].mxu0 %v1943
          %v2011 = vpop.f32.mrb[0].mxu0
          %v2012 = vadd.f32 %v672, %v2011
          %v2013 = vpop.f32.mrb[0].mxu0
          %v2014 = vadd.f32 %v672, %v2013
          %v2015 = vpop.f32.mrb[0].mxu0
          %v2016 = vadd.f32 %v677, %v2015
          %v2017 = vpop.f32.mrb[0].mxu0
          %v2018 = vadd.f32 %v677, %v2017
          %2019 = vmatprep.mubr.bf16.mxu0 0
          %2020 = vmatmul.mubr.bf16.gmra.mrb[0].mxu0 %v1944
          %v2021 = vpop.f32.mrb[0].mxu0
          %v2022 = vadd.f32 %v682, %v2021
          %v2023 = vpop.f32.mrb[0].mxu0
          %v2024 = vadd.f32 %v682, %v2023
          %v2025 = vpop.f32.mrb[0].mxu0
          %v2026 = vadd.f32 %v687, %v2025
          %v2027 = vpop.f32.mrb[0].mxu0
          %v2028 = vadd.f32 %v687, %v2027
          %2029 = vmatprep.mubr.bf16.mxu0 0
          %2030 = vmatmul.mubr.bf16.gmra.mrb[0].mxu0 %v1945
          %v2031 = vpop.f32.mrb[0].mxu0
          %v2032 = vadd.f32 %v692, %v2031
          %v2033 = vpop.f32.mrb[0].mxu0
          %v2034 = vadd.f32 %v692, %v2033
          %v2035 = vpop.f32.mrb[0].mxu0
          %v2036 = vadd.f32 %v697, %v2035
          %v2037 = vpop.f32.mrb[0].mxu0
          %v2038 = vadd.f32 %v697, %v2037
          %2039 = vmatprep.mubr.bf16.mxu0 0
          %2040 = vmatmul.mubr.bf16.gmra.mrb[0].mxu0 %v1946
          %v2041 = vpop.f32.mrb[0].mxu0
          %v2042 = vadd.f32 %v702, %v2041
          %v2043 = vpop.f32.mrb[0].mxu0
          %v2044 = vadd.f32 %v702, %v2043
          %v2045 = vpop.f32.mrb[0].mxu0
          %v2046 = vadd.f32 %v707, %v2045
          %v2047 = vpop.f32.mrb[0].mxu0
          %v2048 = vadd.f32 %v707, %v2047
          %2049 = vmatprep.mubr.bf16.mxu0 0
          %2050 = vmatmul.mubr.bf16.gmra.mrb[0].mxu0 %v1947
          %v2051 = vpop.f32.mrb[0].mxu0
          %v2052 = vadd.f32 %v712, %v2051
          %v2053 = vpop.f32.mrb[0].mxu0
          %v2054 = vadd.f32 %v712, %v2053
          %v2055 = vpop.f32.mrb[0].mxu0
          %v2056 = vadd.f32 %v717, %v2055
          %v2057 = vpop.f32.mrb[0].mxu0
          %v2058 = vadd.f32 %v717, %v2057
          %2059 = vmatprep.mubr.bf16.mxu0 0
          %2060 = vmatmul.mubr.bf16.gmra.mrb[0].mxu0 %v1948
          %v2061 = vpop.f32.mrb[0].mxu0
          %v2062 = vadd.f32 %v722, %v2061
          %v2063 = vpop.f32.mrb[0].mxu0
          %v2064 = vadd.f32 %v722, %v2063
          %v2065 = vpop.f32.mrb[0].mxu0
          %v2066 = vadd.f32 %v727, %v2065
          %v2067 = vpop.f32.mrb[0].mxu0
          %v2068 = vadd.f32 %v727, %v2067
          %2069 = vdwg.mxu0
          %2070 = vmatprep.subr.bf16.mxu0 %v1848
          %2071 = vmatpush1.bf16.msra.mxu0 %v1847
          %2072 = vmatprep.subr.bf16.mxu0 %v1856
          %2073 = vmatpush1.bf16.msra.mxu0 %v1855
          %2074 = vmatprep.subr.bf16.mxu0 %v1864
          %2075 = vmatpush1.bf16.msra.mxu0 %v1863
          %2076 = vmatprep.subr.bf16.mxu0 %v1872
          %2077 = vmatpush1.bf16.msra.mxu0 %v1871
          %2078 = vmatprep.subr.bf16.mxu0 %v1880
          %2079 = vmatpush1.bf16.msra.mxu0 %v1879
          %2080 = vmatprep.subr.bf16.mxu0 %v1888
          %2081 = vmatpush1.bf16.msra.mxu0 %v1887
          %2082 = vmatprep.subr.bf16.mxu0 %v1896
          %2083 = vmatpush1.bf16.msra.mxu0 %v1895
          %2084 = vmatprep.subr.bf16.mxu0 %v1904
          %2085 = vmatpush1.bf16.msra.mxu0 %v1903
          %2086 = vmatprep.subr.bf16.mxu0 0
          %2087 = vmatpush1.bf16.msra.mxu0 0
          %2088 = vmatprep.subr.bf16.mxu0 0
          %2089 = vmatpush1.bf16.msra.mxu0 0
          %2090 = vmatprep.subr.bf16.mxu0 0
          %2091 = vmatpush1.bf16.msra.mxu0 0
          %2092 = vmatprep.subr.bf16.mxu0 0
          %2093 = vmatpush1.bf16.msra.mxu0 0
          %2094 = vmatprep.subr.bf16.mxu0 0
          %2095 = vmatpush1.bf16.msra.mxu0 0
          %2096 = vmatprep.subr.bf16.mxu0 0
          %2097 = vmatpush1.bf16.msra.mxu0 0
          %2098 = vmatprep.subr.bf16.mxu0 0
          %2099 = vmatpush1.bf16.msra.mxu0 0
          %2100 = vmatprep.subr.bf16.mxu0 0
          %2101 = vmatpush1.bf16.msra.mxu0 0
          %2102 = vmatprep.mubr.bf16.mxu0 0
          %2103 = vmatmul.mubr.bf16.gmra.mrb[0].mxu0 %v1941
          %v2104 = vpop.f32.mrb[0].mxu0
          %v2105 = vadd.f32 %v652, %v2104
          %v2106 = vpop.f32.mrb[0].mxu0
          %v2107 = vadd.f32 %v652, %v2106
          %v2108 = vpop.f32.mrb[0].mxu0
          %v2109 = vadd.f32 %v657, %v2108
          %v2110 = vpop.f32.mrb[0].mxu0
          %v2111 = vadd.f32 %v657, %v2110
          %2112 = vmatprep.mubr.bf16.mxu0 0
          %2113 = vmatmul.mubr.bf16.gmra.mrb[0].mxu0 %v1942
          %v2114 = vpop.f32.mrb[0].mxu0
          %v2115 = vadd.f32 %v662, %v2114
          %v2116 = vpop.f32.mrb[0].mxu0
          %v2117 = vadd.f32 %v662, %v2116
          %v2118 = vpop.f32.mrb[0].mxu0
          %v2119 = vadd.f32 %v667, %v2118
          %v2120 = vpop.f32.mrb[0].mxu0
          %v2121 = vadd.f32 %v667, %v2120
          %2122 = vmatprep.mubr.bf16.mxu0 0
          %2123 = vmatmul.mubr.bf16.gmra.mrb[0].mxu0 %v1943
          %v2124 = vpop.f32.mrb[0].mxu0
          %v2125 = vadd.f32 %v672, %v2124
          %v2126 = vpop.f32.mrb[0].mxu0
          %v2127 = vadd.f32 %v672, %v2126
          %v2128 = vpop.f32.mrb[0].mxu0
          %v2129 = vadd.f32 %v677, %v2128
          %v2130 = vpop.f32.mrb[0].mxu0
          %v2131 = vadd.f32 %v677, %v2130
          %2132 = vmatprep.mubr.bf16.mxu0 0
          %2133 = vmatmul.mubr.bf16.gmra.mrb[0].mxu0 %v1944
          %v2134 = vpop.f32.mrb[0].mxu0
          %v2135 = vadd.f32 %v682, %v2134
          %v2136 = vpop.f32.mrb[0].mxu0
          %v2137 = vadd.f32 %v682, %v2136
          %v2138 = vpop.f32.mrb[0].mxu0
          %v2139 = vadd.f32 %v687, %v2138
          %v2140 = vpop.f32.mrb[0].mxu0
          %v2141 = vadd.f32 %v687, %v2140
          %2142 = vmatprep.mubr.bf16.mxu0 0
          %2143 = vmatmul.mubr.bf16.gmra.mrb[0].mxu0 %v1945
          %v2144 = vpop.f32.mrb[0].mxu0
          %v2145 = vadd.f32 %v692, %v2144
          %v2146 = vpop.f32.mrb[0].mxu0
          %v2147 = vadd.f32 %v692, %v2146
          %v2148 = vpop.f32.mrb[0].mxu0
          %v2149 = vadd.f32 %v697, %v2148
          %v2150 = vpop.f32.mrb[0].mxu0
          %v2151 = vadd.f32 %v697, %v2150
          %2152 = vmatprep.mubr.bf16.mxu0 0
          %2153 = vmatmul.mubr.bf16.gmra.mrb[0].mxu0 %v1946
          %v2154 = vpop.f32.mrb[0].mxu0
          %v2155 = vadd.f32 %v702, %v2154
          %v2156 = vpop.f32.mrb[0].mxu0
          %v2157 = vadd.f32 %v702, %v2156
          %v2158 = vpop.f32.mrb[0].mxu0
          %v2159 = vadd.f32 %v707, %v2158
          %v2160 = vpop.f32.mrb[0].mxu0
          %v2161 = vadd.f32 %v707, %v2160
          %2162 = vmatprep.mubr.bf16.mxu0 0
          %2163 = vmatmul.mubr.bf16.gmra.mrb[0].mxu0 %v1947
          %v2164 = vpop.f32.mrb[0].mxu0
          %v2165 = vadd.f32 %v712, %v2164
          %v2166 = vpop.f32.mrb[0].mxu0
          %v2167 = vadd.f32 %v712, %v2166
          %v2168 = vpop.f32.mrb[0].mxu0
          %v2169 = vadd.f32 %v717, %v2168
          %v2170 = vpop.f32.mrb[0].mxu0
          %v2171 = vadd.f32 %v717, %v2170
          %2172 = vmatprep.mubr.bf16.mxu0 0
          %2173 = vmatmul.mubr.bf16.gmra.mrb[0].mxu0 %v1948
          %v2174 = vpop.f32.mrb[0].mxu0
          %v2175 = vadd.f32 %v722, %v2174
          %v2176 = vpop.f32.mrb[0].mxu0
          %v2177 = vadd.f32 %v722, %v2176
          %v2178 = vpop.f32.mrb[0].mxu0
          %v2179 = vadd.f32 %v727, %v2178
          %v2180 = vpop.f32.mrb[0].mxu0
          %v2181 = vadd.f32 %v727, %v2180
          %2182 = vdwg.mxu0
          %2183 = vmatprep.subr.bf16.mxu0 %v1850
          %2184 = vmatpush1.bf16.msra.mxu0 %v1849
          %2185 = vmatprep.subr.bf16.mxu0 %v1858
          %2186 = vmatpush1.bf16.msra.mxu0 %v1857
          %2187 = vmatprep.subr.bf16.mxu0 %v1866
          %2188 = vmatpush1.bf16.msra.mxu0 %v1865
          %2189 = vmatprep.subr.bf16.mxu0 %v1874
          %2190 = vmatpush1.bf16.msra.mxu0 %v1873
          %2191 = vmatprep.subr.bf16.mxu0 %v1882
          %2192 = vmatpush1.bf16.msra.mxu0 %v1881
          %2193 = vmatprep.subr.bf16.mxu0 %v1890
          %2194 = vmatpush1.bf16.msra.mxu0 %v1889
          %2195 = vmatprep.subr.bf16.mxu0 %v1898
          %2196 = vmatpush1.bf16.msra.mxu0 %v1897
          %2197 = vmatprep.subr.bf16.mxu0 %v1906
          %2198 = vmatpush1.bf16.msra.mxu0 %v1905
          %2199 = vmatprep.subr.bf16.mxu0 0
          %2200 = vmatpush1.bf16.msra.mxu0 0
          %2201 = vmatprep.subr.bf16.mxu0 0
          %2202 = vmatpush1.bf16.msra.mxu0 0
          %2203 = vmatprep.subr.bf16.mxu0 0
          %2204 = vmatpush1.bf16.msra.mxu0 0
          %2205 = vmatprep.subr.bf16.mxu0 0
          %2206 = vmatpush1.bf16.msra.mxu0 0
          %2207 = vmatprep.subr.bf16.mxu0 0
          %2208 = vmatpush1.bf16.msra.mxu0 0
          %2209 = vmatprep.subr.bf16.mxu0 0
          %2210 = vmatpush1.bf16.msra.mxu0 0
          %2211 = vmatprep.subr.bf16.mxu0 0
          %2212 = vmatpush1.bf16.msra.mxu0 0
          %2213 = vmatprep.subr.bf16.mxu0 0
          %2214 = vmatpush1.bf16.msra.mxu0 0
          %2215 = vmatprep.mubr.bf16.mxu0 0
          %2216 = vmatmul.mubr.bf16.gmra.mrb[0].mxu0 %v1941
          %v2217 = vpop.f32.mrb[0].mxu0
          %v2218 = vadd.f32 %v652, %v2217
          %v2219 = vpop.f32.mrb[0].mxu0
          %v2220 = vadd.f32 %v652, %v2219
          %v2221 = vpop.f32.mrb[0].mxu0
          %v2222 = vadd.f32 %v657, %v2221
          %v2223 = vpop.f32.mrb[0].mxu0
          %v2224 = vadd.f32 %v657, %v2223
          %2225 = vmatprep.mubr.bf16.mxu0 0
          %2226 = vmatmul.mubr.bf16.gmra.mrb[0].mxu0 %v1942
          %v2227 = vpop.f32.mrb[0].mxu0
          %v2228 = vadd.f32 %v662, %v2227
          %v2229 = vpop.f32.mrb[0].mxu0
          %v2230 = vadd.f32 %v662, %v2229
          %v2231 = vpop.f32.mrb[0].mxu0
          %v2232 = vadd.f32 %v667, %v2231
          %v2233 = vpop.f32.mrb[0].mxu0
          %v2234 = vadd.f32 %v667, %v2233
          %2235 = vmatprep.mubr.bf16.mxu0 0
          %2236 = vmatmul.mubr.bf16.gmra.mrb[0].mxu0 %v1943
          %v2237 = vpop.f32.mrb[0].mxu0
          %v2238 = vadd.f32 %v672, %v2237
          %v2239 = vpop.f32.mrb[0].mxu0
          %v2240 = vadd.f32 %v672, %v2239
          %v2241 = vpop.f32.mrb[0].mxu0
          %v2242 = vadd.f32 %v677, %v2241
          %v2243 = vpop.f32.mrb[0].mxu0
          %v2244 = vadd.f32 %v677, %v2243
          %2245 = vmatprep.mubr.bf16.mxu0 0
          %2246 = vmatmul.mubr.bf16.gmra.mrb[0].mxu0 %v1944
          %v2247 = vpop.f32.mrb[0].mxu0
          %v2248 = vadd.f32 %v682, %v2247
          %v2249 = vpop.f32.mrb[0].mxu0
          %v2250 = vadd.f32 %v682, %v2249
          %v2251 = vpop.f32.mrb[0].mxu0
          %v2252 = vadd.f32 %v687, %v2251
          %v2253 = vpop.f32.mrb[0].mxu0
          %v2254 = vadd.f32 %v687, %v2253
          %2255 = vmatprep.mubr.bf16.mxu0 0
          %2256 = vmatmul.mubr.bf16.gmra.mrb[0].mxu0 %v1945
          %v2257 = vpop.f32.mrb[0].mxu0
          %v2258 = vadd.f32 %v692, %v2257
          %v2259 = vpop.f32.mrb[0].mxu0
          %v2260 = vadd.f32 %v692, %v2259
          %v2261 = vpop.f32.mrb[0].mxu0
          %v2262 = vadd.f32 %v697, %v2261
          %v2263 = vpop.f32.mrb[0].mxu0
          %v2264 = vadd.f32 %v697, %v2263
          %2265 = vmatprep.mubr.bf16.mxu0 0
          %2266 = vmatmul.mubr.bf16.gmra.mrb[0].mxu0 %v1946
          %v2267 = vpop.f32.mrb[0].mxu0
          %v2268 = vadd.f32 %v702, %v2267
          %v2269 = vpop.f32.mrb[0].mxu0
          %v2270 = vadd.f32 %v702, %v2269
          %v2271 = vpop.f32.mrb[0].mxu0
          %v2272 = vadd.f32 %v707, %v2271
          %v2273 = vpop.f32.mrb[0].mxu0
          %v2274 = vadd.f32 %v707, %v2273
          %2275 = vmatprep.mubr.bf16.mxu0 0
          %2276 = vmatmul.mubr.bf16.gmra.mrb[0].mxu0 %v1947
          %v2277 = vpop.f32.mrb[0].mxu0
          %v2278 = vadd.f32 %v712, %v2277
          %v2279 = vpop.f32.mrb[0].mxu0
          %v2280 = vadd.f32 %v712, %v2279
          %v2281 = vpop.f32.mrb[0].mxu0
          %v2282 = vadd.f32 %v717, %v2281
          %v2283 = vpop.f32.mrb[0].mxu0
          %v2284 = vadd.f32 %v717, %v2283
          %2285 = vmatprep.mubr.bf16.mxu0 0
          %2286 = vmatmul.mubr.bf16.gmra.mrb[0].mxu0 %v1948
          %v2287 = vpop.f32.mrb[0].mxu0
          %v2288 = vadd.f32 %v722, %v2287
          %v2289 = vpop.f32.mrb[0].mxu0
          %v2290 = vadd.f32 %v722, %v2289
          %v2291 = vpop.f32.mrb[0].mxu0
          %v2292 = vadd.f32 %v727, %v2291
          %v2293 = vpop.f32.mrb[0].mxu0
          %v2294 = vadd.f32 %v727, %v2293
          %2295 = vdwg.mxu0
          %2296 = vmatprep.subr.bf16.mxu0 %v1852
          %2297 = vmatpush1.bf16.msra.mxu0 %v1851
          %2298 = vmatprep.subr.bf16.mxu0 %v1860
          %2299 = vmatpush1.bf16.msra.mxu0 %v1859
          %2300 = vmatprep.subr.bf16.mxu0 %v1868
          %2301 = vmatpush1.bf16.msra.mxu0 %v1867
          %2302 = vmatprep.subr.bf16.mxu0 %v1876
          %2303 = vmatpush1.bf16.msra.mxu0 %v1875
          %2304 = vmatprep.subr.bf16.mxu0 %v1884
          %2305 = vmatpush1.bf16.msra.mxu0 %v1883
          %2306 = vmatprep.subr.bf16.mxu0 %v1892
          %2307 = vmatpush1.bf16.msra.mxu0 %v1891
          %2308 = vmatprep.subr.bf16.mxu0 %v1900
          %2309 = vmatpush1.bf16.msra.mxu0 %v1899
          %2310 = vmatprep.subr.bf16.mxu0 %v1908
          %2311 = vmatpush1.bf16.msra.mxu0 %v1907
          %2312 = vmatprep.subr.bf16.mxu0 0
          %2313 = vmatpush1.bf16.msra.mxu0 0
          %2314 = vmatprep.subr.bf16.mxu0 0
          %2315 = vmatpush1.bf16.msra.mxu0 0
          %2316 = vmatprep.subr.bf16.mxu0 0
          %2317 = vmatpush1.bf16.msra.mxu0 0
          %2318 = vmatprep.subr.bf16.mxu0 0
          %2319 = vmatpush1.bf16.msra.mxu0 0
          %2320 = vmatprep.subr.bf16.mxu0 0
          %2321 = vmatpush1.bf16.msra.mxu0 0
          %2322 = vmatprep.subr.bf16.mxu0 0
          %2323 = vmatpush1.bf16.msra.mxu0 0
          %2324 = vmatprep.subr.bf16.mxu0 0
          %2325 = vmatpush1.bf16.msra.mxu0 0
          %2326 = vmatprep.subr.bf16.mxu0 0
          %2327 = vmatpush1.bf16.msra.mxu0 0
          %2328 = vmatprep.mubr.bf16.mxu0 0
          %2329 = vmatmul.mubr.bf16.gmra.mrb[0].mxu0 %v1941
          %v2330 = vpop.f32.mrb[0].mxu0
          %v2331 = vadd.f32 %v652, %v2330
          %v2332 = vpop.f32.mrb[0].mxu0
          %v2333 = vadd.f32 %v652, %v2332
          %v2334 = vpop.f32.mrb[0].mxu0
          %v2335 = vadd.f32 %v657, %v2334
          %v2336 = vpop.f32.mrb[0].mxu0
          %v2337 = vadd.f32 %v657, %v2336
          %2338 = vmatprep.mubr.bf16.mxu0 0
          %2339 = vmatmul.mubr.bf16.gmra.mrb[0].mxu0 %v1942
          %v2340 = vpop.f32.mrb[0].mxu0
          %v2341 = vadd.f32 %v662, %v2340
          %v2342 = vpop.f32.mrb[0].mxu0
          %v2343 = vadd.f32 %v662, %v2342
          %v2344 = vpop.f32.mrb[0].mxu0
          %v2345 = vadd.f32 %v667, %v2344
          %v2346 = vpop.f32.mrb[0].mxu0
          %v2347 = vadd.f32 %v667, %v2346
          %2348 = vmatprep.mubr.bf16.mxu0 0
          %2349 = vmatmul.mubr.bf16.gmra.mrb[0].mxu0 %v1943
          %v2350 = vpop.f32.mrb[0].mxu0
          %v2351 = vadd.f32 %v672, %v2350
          %v2352 = vpop.f32.mrb[0].mxu0
          %v2353 = vadd.f32 %v672, %v2352
          %v2354 = vpop.f32.mrb[0].mxu0
          %v2355 = vadd.f32 %v677, %v2354
          %v2356 = vpop.f32.mrb[0].mxu0
          %v2357 = vadd.f32 %v677, %v2356
          %2358 = vmatprep.mubr.bf16.mxu0 0
          %2359 = vmatmul.mubr.bf16.gmra.mrb[0].mxu0 %v1944
          %v2360 = vpop.f32.mrb[0].mxu0
          %v2361 = vadd.f32 %v682, %v2360
          %v2362 = vpop.f32.mrb[0].mxu0
          %v2363 = vadd.f32 %v682, %v2362
          %v2364 = vpop.f32.mrb[0].mxu0
          %v2365 = vadd.f32 %v687, %v2364
          %v2366 = vpop.f32.mrb[0].mxu0
          %v2367 = vadd.f32 %v687, %v2366
          %2368 = vmatprep.mubr.bf16.mxu0 0
          %2369 = vmatmul.mubr.bf16.gmra.mrb[0].mxu0 %v1945
          %v2370 = vpop.f32.mrb[0].mxu0
          %v2371 = vadd.f32 %v692, %v2370
          %v2372 = vpop.f32.mrb[0].mxu0
          %v2373 = vadd.f32 %v692, %v2372
          %v2374 = vpop.f32.mrb[0].mxu0
          %v2375 = vadd.f32 %v697, %v2374
          %v2376 = vpop.f32.mrb[0].mxu0
          %v2377 = vadd.f32 %v697, %v2376
          %2378 = vmatprep.mubr.bf16.mxu0 0
          %2379 = vmatmul.mubr.bf16.gmra.mrb[0].mxu0 %v1946
          %v2380 = vpop.f32.mrb[0].mxu0
          %v2381 = vadd.f32 %v702, %v2380
          %v2382 = vpop.f32.mrb[0].mxu0
          %v2383 = vadd.f32 %v702, %v2382
          %v2384 = vpop.f32.mrb[0].mxu0
          %v2385 = vadd.f32 %v707, %v2384
          %v2386 = vpop.f32.mrb[0].mxu0
          %v2387 = vadd.f32 %v707, %v2386
          %2388 = vmatprep.mubr.bf16.mxu0 0
          %2389 = vmatmul.mubr.bf16.gmra.mrb[0].mxu0 %v1947
          %v2390 = vpop.f32.mrb[0].mxu0
          %v2391 = vadd.f32 %v712, %v2390
          %v2392 = vpop.f32.mrb[0].mxu0
          %v2393 = vadd.f32 %v712, %v2392
          %v2394 = vpop.f32.mrb[0].mxu0
          %v2395 = vadd.f32 %v717, %v2394
          %v2396 = vpop.f32.mrb[0].mxu0
          %v2397 = vadd.f32 %v717, %v2396
          %2398 = vmatprep.mubr.bf16.mxu0 0
          %2399 = vmatmul.mubr.bf16.gmra.mrb[0].mxu0 %v1948
          %v2400 = vpop.f32.mrb[0].mxu0
          %v2401 = vadd.f32 %v722, %v2400
          %v2402 = vpop.f32.mrb[0].mxu0
          %v2403 = vadd.f32 %v722, %v2402
          %v2404 = vpop.f32.mrb[0].mxu0
          %v2405 = vadd.f32 %v727, %v2404
          %v2406 = vpop.f32.mrb[0].mxu0
          %v2407 = vadd.f32 %v727, %v2406
          %2408 = vdwg.mxu0
          %v2409 = vmax.f32 %v1992, 0.0
          %v2410 = vmax.f32 %v1994, 0.0
          %v2411 = vmax.f32 %v2105, 0.0
          %v2412 = vmax.f32 %v2107, 0.0
          %v2413 = vmax.f32 %v2218, 0.0
          %v2414 = vmax.f32 %v2220, 0.0
          %v2415 = vmax.f32 %v2331, 0.0
          %v2416 = vmax.f32 %v2333, 0.0
          %v2417 = vmax.f32 %v1996, 0.0
          %v2418 = vmax.f32 %v1998, 0.0
          %v2419 = vmax.f32 %v2109, 0.0
          %v2420 = vmax.f32 %v2111, 0.0
          %v2421 = vmax.f32 %v2222, 0.0
          %v2422 = vmax.f32 %v2224, 0.0
          %v2423 = vmax.f32 %v2335, 0.0
          %v2424 = vmax.f32 %v2337, 0.0
          %v2425 = vmax.f32 %v2002, 0.0
          %v2426 = vmax.f32 %v2004, 0.0
          %v2427 = vmax.f32 %v2115, 0.0
          %v2428 = vmax.f32 %v2117, 0.0
          %v2429 = vmax.f32 %v2228, 0.0
          %v2430 = vmax.f32 %v2230, 0.0
          %v2431 = vmax.f32 %v2341, 0.0
          %v2432 = vmax.f32 %v2343, 0.0
          %v2433 = vmax.f32 %v2006, 0.0
          %v2434 = vmax.f32 %v2008, 0.0
          %v2435 = vmax.f32 %v2119, 0.0
          %v2436 = vmax.f32 %v2121, 0.0
          %v2437 = vmax.f32 %v2232, 0.0
          %v2438 = vmax.f32 %v2234, 0.0
          %v2439 = vmax.f32 %v2345, 0.0
          %v2440 = vmax.f32 %v2347, 0.0
          %v2441 = vmax.f32 %v2012, 0.0
          %v2442 = vmax.f32 %v2014, 0.0
          %v2443 = vmax.f32 %v2125, 0.0
          %v2444 = vmax.f32 %v2127, 0.0
          %v2445 = vmax.f32 %v2238, 0.0
          %v2446 = vmax.f32 %v2240, 0.0
          %v2447 = vmax.f32 %v2351, 0.0
          %v2448 = vmax.f32 %v2353, 0.0
          %v2449 = vmax.f32 %v2016, 0.0
          %v2450 = vmax.f32 %v2018, 0.0
          %v2451 = vmax.f32 %v2129, 0.0
          %v2452 = vmax.f32 %v2131, 0.0
          %v2453 = vmax.f32 %v2242, 0.0
          %v2454 = vmax.f32 %v2244, 0.0
          %v2455 = vmax.f32 %v2355, 0.0
          %v2456 = vmax.f32 %v2357, 0.0
          %v2457 = vmax.f32 %v2022, 0.0
          %v2458 = vmax.f32 %v2024, 0.0
          %v2459 = vmax.f32 %v2135, 0.0
          %v2460 = vmax.f32 %v2137, 0.0
          %v2461 = vmax.f32 %v2248, 0.0
          %v2462 = vmax.f32 %v2250, 0.0
          %v2463 = vmax.f32 %v2361, 0.0
          %v2464 = vmax.f32 %v2363, 0.0
          %v2465 = vmax.f32 %v2026, 0.0
          %v2466 = vmax.f32 %v2028, 0.0
          %v2467 = vmax.f32 %v2139, 0.0
          %v2468 = vmax.f32 %v2141, 0.0
          %v2469 = vmax.f32 %v2252, 0.0
          %v2470 = vmax.f32 %v2254, 0.0
          %v2471 = vmax.f32 %v2365, 0.0
          %v2472 = vmax.f32 %v2367, 0.0
          %v2473 = vmax.f32 %v2032, 0.0
          %v2474 = vmax.f32 %v2034, 0.0
          %v2475 = vmax.f32 %v2145, 0.0
          %v2476 = vmax.f32 %v2147, 0.0
          %v2477 = vmax.f32 %v2258, 0.0
          %v2478 = vmax.f32 %v2260, 0.0
          %v2479 = vmax.f32 %v2371, 0.0
          %v2480 = vmax.f32 %v2373, 0.0
          %v2481 = vmax.f32 %v2036, 0.0
          %v2482 = vmax.f32 %v2038, 0.0
          %v2483 = vmax.f32 %v2149, 0.0
          %v2484 = vmax.f32 %v2151, 0.0
          %v2485 = vmax.f32 %v2262, 0.0
          %v2486 = vmax.f32 %v2264, 0.0
          %v2487 = vmax.f32 %v2375, 0.0
          %v2488 = vmax.f32 %v2377, 0.0
          %v2489 = vmax.f32 %v2042, 0.0
          %v2490 = vmax.f32 %v2044, 0.0
          %v2491 = vmax.f32 %v2155, 0.0
          %v2492 = vmax.f32 %v2157, 0.0
          %v2493 = vmax.f32 %v2268, 0.0
          %v2494 = vmax.f32 %v2270, 0.0
          %v2495 = vmax.f32 %v2381, 0.0
          %v2496 = vmax.f32 %v2383, 0.0
          %v2497 = vmax.f32 %v2046, 0.0
          %v2498 = vmax.f32 %v2048, 0.0
          %v2499 = vmax.f32 %v2159, 0.0
          %v2500 = vmax.f32 %v2161, 0.0
          %v2501 = vmax.f32 %v2272, 0.0
          %v2502 = vmax.f32 %v2274, 0.0
          %v2503 = vmax.f32 %v2385, 0.0
          %v2504 = vmax.f32 %v2387, 0.0
          %v2505 = vmax.f32 %v2052, 0.0
          %v2506 = vmax.f32 %v2054, 0.0
          %v2507 = vmax.f32 %v2165, 0.0
          %v2508 = vmax.f32 %v2167, 0.0
          %v2509 = vmax.f32 %v2278, 0.0
          %v2510 = vmax.f32 %v2280, 0.0
          %v2511 = vmax.f32 %v2391, 0.0
          %v2512 = vmax.f32 %v2393, 0.0
          %v2513 = vmax.f32 %v2056, 0.0
          %v2514 = vmax.f32 %v2058, 0.0
          %v2515 = vmax.f32 %v2169, 0.0
          %v2516 = vmax.f32 %v2171, 0.0
          %v2517 = vmax.f32 %v2282, 0.0
          %v2518 = vmax.f32 %v2284, 0.0
          %v2519 = vmax.f32 %v2395, 0.0
          %v2520 = vmax.f32 %v2397, 0.0
          %v2521 = vmax.f32 %v2062, 0.0
          %v2522 = vmax.f32 %v2064, 0.0
          %v2523 = vmax.f32 %v2175, 0.0
          %v2524 = vmax.f32 %v2177, 0.0
          %v2525 = vmax.f32 %v2288, 0.0
          %v2526 = vmax.f32 %v2290, 0.0
          %v2527 = vmax.f32 %v2401, 0.0
          %v2528 = vmax.f32 %v2403, 0.0
          %v2529 = vmax.f32 %v2066, 0.0
          %v2530 = vmax.f32 %v2068, 0.0
          %v2531 = vmax.f32 %v2179, 0.0
          %v2532 = vmax.f32 %v2181, 0.0
          %v2533 = vmax.f32 %v2292, 0.0
          %v2534 = vmax.f32 %v2294, 0.0
          %v2535 = vmax.f32 %v2405, 0.0
          %v2536 = vmax.f32 %v2407, 0.0
          %v2537 = vmax.f32 %v2409, %v2410
          %v2538 = vmax.f32 %v2417, %v2418
          %v2539 = vmax.f32 %v2425, %v2426
          %v2540 = vmax.f32 %v2433, %v2434
          %v2541 = vmax.f32 %v2441, %v2442
          %v2542 = vmax.f32 %v2449, %v2450
          %v2543 = vmax.f32 %v2457, %v2458
          %v2544 = vmax.f32 %v2465, %v2466
          %v2545 = vmax.f32 %v2473, %v2474
          %v2546 = vmax.f32 %v2481, %v2482
          %v2547 = vmax.f32 %v2489, %v2490
          %v2548 = vmax.f32 %v2497, %v2498
          %v2549 = vmax.f32 %v2505, %v2506
          %v2550 = vmax.f32 %v2513, %v2514
          %v2551 = vmax.f32 %v2521, %v2522
          %v2552 = vmax.f32 %v2529, %v2530
          %v2553 = vmax.f32 %v2537, %v2411
          %v2554 = vmax.f32 %v2538, %v2419
          %v2555 = vmax.f32 %v2539, %v2427
          %v2556 = vmax.f32 %v2540, %v2435
          %v2557 = vmax.f32 %v2541, %v2443
          %v2558 = vmax.f32 %v2542, %v2451
          %v2559 = vmax.f32 %v2543, %v2459
          %v2560 = vmax.f32 %v2544, %v2467
          %v2561 = vmax.f32 %v2545, %v2475
          %v2562 = vmax.f32 %v2546, %v2483
          %v2563 = vmax.f32 %v2547, %v2491
          %v2564 = vmax.f32 %v2548, %v2499
          %v2565 = vmax.f32 %v2549, %v2507
          %v2566 = vmax.f32 %v2550, %v2515
          %v2567 = vmax.f32 %v2551, %v2523
          %v2568 = vmax.f32 %v2552, %v2531
          %v2569 = vmax.f32 %v2553, %v2412
          %v2570 = vmax.f32 %v2554, %v2420
          %v2571 = vmax.f32 %v2555, %v2428
          %v2572 = vmax.f32 %v2556, %v2436
          %v2573 = vmax.f32 %v2557, %v2444
          %v2574 = vmax.f32 %v2558, %v2452
          %v2575 = vmax.f32 %v2559, %v2460
          %v2576 = vmax.f32 %v2560, %v2468
          %v2577 = vmax.f32 %v2561, %v2476
          %v2578 = vmax.f32 %v2562, %v2484
          %v2579 = vmax.f32 %v2563, %v2492
          %v2580 = vmax.f32 %v2564, %v2500
          %v2581 = vmax.f32 %v2565, %v2508
          %v2582 = vmax.f32 %v2566, %v2516
          %v2583 = vmax.f32 %v2567, %v2524
          %v2584 = vmax.f32 %v2568, %v2532
          %v2585 = vmax.f32 %v2569, %v2413
          %v2586 = vmax.f32 %v2570, %v2421
          %v2587 = vmax.f32 %v2571, %v2429
          %v2588 = vmax.f32 %v2572, %v2437
          %v2589 = vmax.f32 %v2573, %v2445
          %v2590 = vmax.f32 %v2574, %v2453
          %v2591 = vmax.f32 %v2575, %v2461
          %v2592 = vmax.f32 %v2576, %v2469
          %v2593 = vmax.f32 %v2577, %v2477
          %v2594 = vmax.f32 %v2578, %v2485
          %v2595 = vmax.f32 %v2579, %v2493
          %v2596 = vmax.f32 %v2580, %v2501
          %v2597 = vmax.f32 %v2581, %v2509
          %v2598 = vmax.f32 %v2582, %v2517
          %v2599 = vmax.f32 %v2583, %v2525
          %v2600 = vmax.f32 %v2584, %v2533
          %v2601 = vmax.f32 %v2585, %v2414
          %v2602 = vmax.f32 %v2586, %v2422
          %v2603 = vmax.f32 %v2587, %v2430
          %v2604 = vmax.f32 %v2588, %v2438
          %v2605 = vmax.f32 %v2589, %v2446
          %v2606 = vmax.f32 %v2590, %v2454
          %v2607 = vmax.f32 %v2591, %v2462
          %v2608 = vmax.f32 %v2592, %v2470
          %v2609 = vmax.f32 %v2593, %v2478
          %v2610 = vmax.f32 %v2594, %v2486
          %v2611 = vmax.f32 %v2595, %v2494
          %v2612 = vmax.f32 %v2596, %v2502
          %v2613 = vmax.f32 %v2597, %v2510
          %v2614 = vmax.f32 %v2598, %v2518
          %v2615 = vmax.f32 %v2599, %v2526
          %v2616 = vmax.f32 %v2600, %v2534
          %v2617 = vmax.f32 %v2601, %v2415
          %v2618 = vmax.f32 %v2602, %v2423
          %v2619 = vmax.f32 %v2603, %v2431
          %v2620 = vmax.f32 %v2604, %v2439
          %v2621 = vmax.f32 %v2605, %v2447
          %v2622 = vmax.f32 %v2606, %v2455
          %v2623 = vmax.f32 %v2607, %v2463
          %v2624 = vmax.f32 %v2608, %v2471
          %v2625 = vmax.f32 %v2609, %v2479
          %v2626 = vmax.f32 %v2610, %v2487
          %v2627 = vmax.f32 %v2611, %v2495
          %v2628 = vmax.f32 %v2612, %v2503
          %v2629 = vmax.f32 %v2613, %v2511
          %v2630 = vmax.f32 %v2614, %v2519
          %v2631 = vmax.f32 %v2615, %v2527
          %v2632 = vmax.f32 %v2616, %v2535
          %v2633 = vmax.f32 %v2617, %v2416
          %v2634 = vmax.f32 %v2618, %v2424
          %v2635 = vmax.f32 %v2619, %v2432
          %v2636 = vmax.f32 %v2620, %v2440
          %v2637 = vmax.f32 %v2621, %v2448
          %v2638 = vmax.f32 %v2622, %v2456
          %v2639 = vmax.f32 %v2623, %v2464
          %v2640 = vmax.f32 %v2624, %v2472
          %v2641 = vmax.f32 %v2625, %v2480
          %v2642 = vmax.f32 %v2626, %v2488
          %v2643 = vmax.f32 %v2627, %v2496
          %v2644 = vmax.f32 %v2628, %v2504
          %v2645 = vmax.f32 %v2629, %v2512
          %v2646 = vmax.f32 %v2630, %v2520
          %v2647 = vmax.f32 %v2631, %v2528
          %v2648 = vmax.f32 %v2632, %v2536
          %s2649 = smul.u32 %s730, 128
          %s2650 = scalar_lea.vmem [#allocation2], %s2649
          %v2651 = vld [vmem:[%s2650] sm:$0xff]
          %v2652 = vld [vmem:[%s2650 + $0x8] sm:$0xff]
          %v2653 = vld [vmem:[%s2650 + $0x10] sm:$0xff]
          %v2654 = vld [vmem:[%s2650 + $0x18] sm:$0xff]
          %v2655 = vld [vmem:[%s2650 + $0x20] sm:$0xff]
          %v2656 = vld [vmem:[%s2650 + $0x28] sm:$0xff]
          %v2657 = vld [vmem:[%s2650 + $0x30] sm:$0xff]
          %v2658 = vld [vmem:[%s2650 + $0x38] sm:$0xff]
          %v2659 = vld [vmem:[%s2650 + $0x40] sm:$0xff]
          %v2660 = vld [vmem:[%s2650 + $0x48] sm:$0xff]
          %v2661 = vld [vmem:[%s2650 + $0x50] sm:$0xff]
          %v2662 = vld [vmem:[%s2650 + $0x58] sm:$0xff]
          %v2663 = vld [vmem:[%s2650 + $0x60] sm:$0xff]
          %v2664 = vld [vmem:[%s2650 + $0x68] sm:$0xff]
          %v2665 = vld [vmem:[%s2650 + $0x70] sm:$0xff]
          %v2666 = vld [vmem:[%s2650 + $0x78] sm:$0xff]
          %v2667 = vmax.f32 %v2651, %v2633
          %v2668 = vmax.f32 %v2652, %v2634
          %v2669 = vmax.f32 %v2653, %v2635
          %v2670 = vmax.f32 %v2654, %v2636
          %v2671 = vmax.f32 %v2655, %v2637
          %v2672 = vmax.f32 %v2656, %v2638
          %v2673 = vmax.f32 %v2657, %v2639
          %v2674 = vmax.f32 %v2658, %v2640
          %v2675 = vmax.f32 %v2659, %v2641
          %v2676 = vmax.f32 %v2660, %v2642
          %v2677 = vmax.f32 %v2661, %v2643
          %v2678 = vmax.f32 %v2662, %v2644
          %v2679 = vmax.f32 %v2663, %v2645
          %v2680 = vmax.f32 %v2664, %v2646
          %v2681 = vmax.f32 %v2665, %v2647
          %v2682 = vmax.f32 %v2666, %v2648
          %2683 = vst [vmem:[%s2650] sm:$0xff] %v2667
          %2684 = vst [vmem:[%s2650 + $0x8] sm:$0xff] %v2668
          %2685 = vst [vmem:[%s2650 + $0x10] sm:$0xff] %v2669
          %2686 = vst [vmem:[%s2650 + $0x18] sm:$0xff] %v2670
          %2687 = vst [vmem:[%s2650 + $0x20] sm:$0xff] %v2671
          %2688 = vst [vmem:[%s2650 + $0x28] sm:$0xff] %v2672
          %2689 = vst [vmem:[%s2650 + $0x30] sm:$0xff] %v2673
          %2690 = vst [vmem:[%s2650 + $0x38] sm:$0xff] %v2674
          %2691 = vst [vmem:[%s2650 + $0x40] sm:$0xff] %v2675
          %2692 = vst [vmem:[%s2650 + $0x48] sm:$0xff] %v2676
          %2693 = vst [vmem:[%s2650 + $0x50] sm:$0xff] %v2677
          %2694 = vst [vmem:[%s2650 + $0x58] sm:$0xff] %v2678
          %2695 = vst [vmem:[%s2650 + $0x60] sm:$0xff] %v2679
          %2696 = vst [vmem:[%s2650 + $0x68] sm:$0xff] %v2680
          %2697 = vst [vmem:[%s2650 + $0x70] sm:$0xff] %v2681
          %2698 = vst [vmem:[%s2650 + $0x78] sm:$0xff] %v2682
        $region61: #{tpu_custom_call.1} parent=47 // loop_footer
          %s734 = sadd.s32 1, %s730
        $region62: #{tpu_custom_call.1} parent=47 // loop_footer_branch
          %729 = sbr.rel target = $region58
        $region63: #{tpu_custom_call.1} parent=47 // loop_exit
          _
        %p2699 = scmp.eq.s32.totalorder %s29, 1
        // Predicated region
        $region64: #{tpu_custom_call.1} parent=47 // pred_check
          %p2700 = pneg %p2699
        $region65: #{tpu_custom_call.1} parent=47 // pred_check_branch
          %2702 = sbr.rel (%p2700) target = $region67
        $region66: #{tpu_custom_call.1} parent=47 // pred_region
          %v2703 = vld [vmem:[#allocation2] sm:$0xff]
          %v2704 = vld [vmem:[#allocation2 + $0x8] sm:$0xff]
          %v2705 = vld [vmem:[#allocation2 + $0x10] sm:$0xff]
          %v2706 = vld [vmem:[#allocation2 + $0x18] sm:$0xff]
          %v2707 = vld [vmem:[#allocation2 + $0x20] sm:$0xff]
          %v2708 = vld [vmem:[#allocation2 + $0x28] sm:$0xff]
          %v2709 = vld [vmem:[#allocation2 + $0x30] sm:$0xff]
          %v2710 = vld [vmem:[#allocation2 + $0x38] sm:$0xff]
          %v2711 = vld [vmem:[#allocation2 + $0x40] sm:$0xff]
          %v2712 = vld [vmem:[#allocation2 + $0x48] sm:$0xff]
          %v2713 = vld [vmem:[#allocation2 + $0x50] sm:$0xff]
          %v2714 = vld [vmem:[#allocation2 + $0x58] sm:$0xff]
          %v2715 = vld [vmem:[#allocation2 + $0x60] sm:$0xff]
          %v2716 = vld [vmem:[#allocation2 + $0x68] sm:$0xff]
          %v2717 = vld [vmem:[#allocation2 + $0x70] sm:$0xff]
          %v2718 = vld [vmem:[#allocation2 + $0x78] sm:$0xff]
          %v2719 = vld [vmem:[#allocation2 + $0x80] sm:$0xff]
          %v2720 = vld [vmem:[#allocation2 + $0x88] sm:$0xff]
          %v2721 = vld [vmem:[#allocation2 + $0x90] sm:$0xff]
          %v2722 = vld [vmem:[#allocation2 + $0x98] sm:$0xff]
          %v2723 = vld [vmem:[#allocation2 + $0xa0] sm:$0xff]
          %v2724 = vld [vmem:[#allocation2 + $0xa8] sm:$0xff]
          %v2725 = vld [vmem:[#allocation2 + $0xb0] sm:$0xff]
          %v2726 = vld [vmem:[#allocation2 + $0xb8] sm:$0xff]
          %v2727 = vld [vmem:[#allocation2 + $0xc0] sm:$0xff]
          %v2728 = vld [vmem:[#allocation2 + $0xc8] sm:$0xff]
          %v2729 = vld [vmem:[#allocation2 + $0xd0] sm:$0xff]
          %v2730 = vld [vmem:[#allocation2 + $0xd8] sm:$0xff]
          %v2731 = vld [vmem:[#allocation2 + $0xe0] sm:$0xff]
          %v2732 = vld [vmem:[#allocation2 + $0xe8] sm:$0xff]
          %v2733 = vld [vmem:[#allocation2 + $0xf0] sm:$0xff]
          %v2734 = vld [vmem:[#allocation2 + $0xf8] sm:$0xff]
          %v2735 = vld [vmem:[#allocation2 + $0x100] sm:$0xff]
          %v2736 = vld [vmem:[#allocation2 + $0x108] sm:$0xff]
          %v2737 = vld [vmem:[#allocation2 + $0x110] sm:$0xff]
          %v2738 = vld [vmem:[#allocation2 + $0x118] sm:$0xff]
          %v2739 = vld [vmem:[#allocation2 + $0x120] sm:$0xff]
          %v2740 = vld [vmem:[#allocation2 + $0x128] sm:$0xff]
          %v2741 = vld [vmem:[#allocation2 + $0x130] sm:$0xff]
          %v2742 = vld [vmem:[#allocation2 + $0x138] sm:$0xff]
          %v2743 = vld [vmem:[#allocation2 + $0x140] sm:$0xff]
          %v2744 = vld [vmem:[#allocation2 + $0x148] sm:$0xff]
          %v2745 = vld [vmem:[#allocation2 + $0x150] sm:$0xff]
          %v2746 = vld [vmem:[#allocation2 + $0x158] sm:$0xff]
          %v2747 = vld [vmem:[#allocation2 + $0x160] sm:$0xff]
          %v2748 = vld [vmem:[#allocation2 + $0x168] sm:$0xff]
          %v2749 = vld [vmem:[#allocation2 + $0x170] sm:$0xff]
          %v2750 = vld [vmem:[#allocation2 + $0x178] sm:$0xff]
          %v2751 = vld [vmem:[#allocation2 + $0x180] sm:$0xff]
          %v2752 = vld [vmem:[#allocation2 + $0x188] sm:$0xff]
          %v2753 = vld [vmem:[#allocation2 + $0x190] sm:$0xff]
          %v2754 = vld [vmem:[#allocation2 + $0x198] sm:$0xff]
          %v2755 = vld [vmem:[#allocation2 + $0x1a0] sm:$0xff]
          %v2756 = vld [vmem:[#allocation2 + $0x1a8] sm:$0xff]
          %v2757 = vld [vmem:[#allocation2 + $0x1b0] sm:$0xff]
          %v2758 = vld [vmem:[#allocation2 + $0x1b8] sm:$0xff]
          %v2759 = vld [vmem:[#allocation2 + $0x1c0] sm:$0xff]
          %v2760 = vld [vmem:[#allocation2 + $0x1c8] sm:$0xff]
          %v2761 = vld [vmem:[#allocation2 + $0x1d0] sm:$0xff]
          %v2762 = vld [vmem:[#allocation2 + $0x1d8] sm:$0xff]
          %v2763 = vld [vmem:[#allocation2 + $0x1e0] sm:$0xff]
          %v2764 = vld [vmem:[#allocation2 + $0x1e8] sm:$0xff]
          %v2765 = vld [vmem:[#allocation2 + $0x1f0] sm:$0xff]
          %v2766 = vld [vmem:[#allocation2 + $0x1f8] sm:$0xff]
          %v2767 = vld [vmem:[#allocation2 + $0x200] sm:$0xff]
          %v2768 = vld [vmem:[#allocation2 + $0x208] sm:$0xff]
          %v2769 = vld [vmem:[#allocation2 + $0x210] sm:$0xff]
          %v2770 = vld [vmem:[#allocation2 + $0x218] sm:$0xff]
          %v2771 = vld [vmem:[#allocation2 + $0x220] sm:$0xff]
          %v2772 = vld [vmem:[#allocation2 + $0x228] sm:$0xff]
          %v2773 = vld [vmem:[#allocation2 + $0x230] sm:$0xff]
          %v2774 = vld [vmem:[#allocation2 + $0x238] sm:$0xff]
          %v2775 = vld [vmem:[#allocation2 + $0x240] sm:$0xff]
          %v2776 = vld [vmem:[#allocation2 + $0x248] sm:$0xff]
          %v2777 = vld [vmem:[#allocation2 + $0x250] sm:$0xff]
          %v2778 = vld [vmem:[#allocation2 + $0x258] sm:$0xff]
          %v2779 = vld [vmem:[#allocation2 + $0x260] sm:$0xff]
          %v2780 = vld [vmem:[#allocation2 + $0x268] sm:$0xff]
          %v2781 = vld [vmem:[#allocation2 + $0x270] sm:$0xff]
          %v2782 = vld [vmem:[#allocation2 + $0x278] sm:$0xff]
          %v2783 = vld [vmem:[#allocation2 + $0x280] sm:$0xff]
          %v2784 = vld [vmem:[#allocation2 + $0x288] sm:$0xff]
          %v2785 = vld [vmem:[#allocation2 + $0x290] sm:$0xff]
          %v2786 = vld [vmem:[#allocation2 + $0x298] sm:$0xff]
          %v2787 = vld [vmem:[#allocation2 + $0x2a0] sm:$0xff]
          %v2788 = vld [vmem:[#allocation2 + $0x2a8] sm:$0xff]
          %v2789 = vld [vmem:[#allocation2 + $0x2b0] sm:$0xff]
          %v2790 = vld [vmem:[#allocation2 + $0x2b8] sm:$0xff]
          %v2791 = vld [vmem:[#allocation2 + $0x2c0] sm:$0xff]
          %v2792 = vld [vmem:[#allocation2 + $0x2c8] sm:$0xff]
          %v2793 = vld [vmem:[#allocation2 + $0x2d0] sm:$0xff]
          %v2794 = vld [vmem:[#allocation2 + $0x2d8] sm:$0xff]
          %v2795 = vld [vmem:[#allocation2 + $0x2e0] sm:$0xff]
          %v2796 = vld [vmem:[#allocation2 + $0x2e8] sm:$0xff]
          %v2797 = vld [vmem:[#allocation2 + $0x2f0] sm:$0xff]
          %v2798 = vld [vmem:[#allocation2 + $0x2f8] sm:$0xff]
          %v2799 = vld [vmem:[#allocation2 + $0x300] sm:$0xff]
          %v2800 = vld [vmem:[#allocation2 + $0x308] sm:$0xff]
          %v2801 = vld [vmem:[#allocation2 + $0x310] sm:$0xff]
          %v2802 = vld [vmem:[#allocation2 + $0x318] sm:$0xff]
          %v2803 = vld [vmem:[#allocation2 + $0x320] sm:$0xff]
          %v2804 = vld [vmem:[#allocation2 + $0x328] sm:$0xff]
          %v2805 = vld [vmem:[#allocation2 + $0x330] sm:$0xff]
          %v2806 = vld [vmem:[#allocation2 + $0x338] sm:$0xff]
          %v2807 = vld [vmem:[#allocation2 + $0x340] sm:$0xff]
          %v2808 = vld [vmem:[#allocation2 + $0x348] sm:$0xff]
          %v2809 = vld [vmem:[#allocation2 + $0x350] sm:$0xff]
          %v2810 = vld [vmem:[#allocation2 + $0x358] sm:$0xff]
          %v2811 = vld [vmem:[#allocation2 + $0x360] sm:$0xff]
          %v2812 = vld [vmem:[#allocation2 + $0x368] sm:$0xff]
          %v2813 = vld [vmem:[#allocation2 + $0x370] sm:$0xff]
          %v2814 = vld [vmem:[#allocation2 + $0x378] sm:$0xff]
          %v2815 = vld [vmem:[#allocation2 + $0x380] sm:$0xff]
          %v2816 = vld [vmem:[#allocation2 + $0x388] sm:$0xff]
          %v2817 = vld [vmem:[#allocation2 + $0x390] sm:$0xff]
          %v2818 = vld [vmem:[#allocation2 + $0x398] sm:$0xff]
          %v2819 = vld [vmem:[#allocation2 + $0x3a0] sm:$0xff]
          %v2820 = vld [vmem:[#allocation2 + $0x3a8] sm:$0xff]
          %v2821 = vld [vmem:[#allocation2 + $0x3b0] sm:$0xff]
          %v2822 = vld [vmem:[#allocation2 + $0x3b8] sm:$0xff]
          %v2823 = vld [vmem:[#allocation2 + $0x3c0] sm:$0xff]
          %v2824 = vld [vmem:[#allocation2 + $0x3c8] sm:$0xff]
          %v2825 = vld [vmem:[#allocation2 + $0x3d0] sm:$0xff]
          %v2826 = vld [vmem:[#allocation2 + $0x3d8] sm:$0xff]
          %v2827 = vld [vmem:[#allocation2 + $0x3e0] sm:$0xff]
          %v2828 = vld [vmem:[#allocation2 + $0x3e8] sm:$0xff]
          %v2829 = vld [vmem:[#allocation2 + $0x3f0] sm:$0xff]
          %v2830 = vld [vmem:[#allocation2 + $0x3f8] sm:$0xff]
          %2831 = vmax.xlane.f32.xlu0 %v2703
          %v2832 = vpop.xlane.xlu0 %2831
          %2833 = vmax.xlane.f32.xlu0 %v2704
          %v2834 = vpop.xlane.xlu0 %2833
          %2835 = vmax.xlane.f32.xlu0 %v2705
          %v2836 = vpop.xlane.xlu0 %2835
          %2837 = vmax.xlane.f32.xlu0 %v2706
          %v2838 = vpop.xlane.xlu0 %2837
          %2839 = vmax.xlane.f32.xlu0 %v2707
          %v2840 = vpop.xlane.xlu0 %2839
          %2841 = vmax.xlane.f32.xlu0 %v2708
          %v2842 = vpop.xlane.xlu0 %2841
          %2843 = vmax.xlane.f32.xlu0 %v2709
          %v2844 = vpop.xlane.xlu0 %2843
          %2845 = vmax.xlane.f32.xlu0 %v2710
          %v2846 = vpop.xlane.xlu0 %2845
          %2847 = vmax.xlane.f32.xlu0 %v2711
          %v2848 = vpop.xlane.xlu0 %2847
          %2849 = vmax.xlane.f32.xlu0 %v2712
          %v2850 = vpop.xlane.xlu0 %2849
          %2851 = vmax.xlane.f32.xlu0 %v2713
          %v2852 = vpop.xlane.xlu0 %2851
          %2853 = vmax.xlane.f32.xlu0 %v2714
          %v2854 = vpop.xlane.xlu0 %2853
          %2855 = vmax.xlane.f32.xlu0 %v2715
          %v2856 = vpop.xlane.xlu0 %2855
          %2857 = vmax.xlane.f32.xlu0 %v2716
          %v2858 = vpop.xlane.xlu0 %2857
          %2859 = vmax.xlane.f32.xlu0 %v2717
          %v2860 = vpop.xlane.xlu0 %2859
          %2861 = vmax.xlane.f32.xlu0 %v2718
          %v2862 = vpop.xlane.xlu0 %2861
          %2863 = vmax.xlane.f32.xlu0 %v2719
          %v2864 = vpop.xlane.xlu0 %2863
          %2865 = vmax.xlane.f32.xlu0 %v2720
          %v2866 = vpop.xlane.xlu0 %2865
          %2867 = vmax.xlane.f32.xlu0 %v2721
          %v2868 = vpop.xlane.xlu0 %2867
          %2869 = vmax.xlane.f32.xlu0 %v2722
          %v2870 = vpop.xlane.xlu0 %2869
          %2871 = vmax.xlane.f32.xlu0 %v2723
          %v2872 = vpop.xlane.xlu0 %2871
          %2873 = vmax.xlane.f32.xlu0 %v2724
          %v2874 = vpop.xlane.xlu0 %2873
          %2875 = vmax.xlane.f32.xlu0 %v2725
          %v2876 = vpop.xlane.xlu0 %2875
          %2877 = vmax.xlane.f32.xlu0 %v2726
          %v2878 = vpop.xlane.xlu0 %2877
          %2879 = vmax.xlane.f32.xlu0 %v2727
          %v2880 = vpop.xlane.xlu0 %2879
          %2881 = vmax.xlane.f32.xlu0 %v2728
          %v2882 = vpop.xlane.xlu0 %2881
          %2883 = vmax.xlane.f32.xlu0 %v2729
          %v2884 = vpop.xlane.xlu0 %2883
          %2885 = vmax.xlane.f32.xlu0 %v2730
          %v2886 = vpop.xlane.xlu0 %2885
          %2887 = vmax.xlane.f32.xlu0 %v2731
          %v2888 = vpop.xlane.xlu0 %2887
          %2889 = vmax.xlane.f32.xlu0 %v2732
          %v2890 = vpop.xlane.xlu0 %2889
          %2891 = vmax.xlane.f32.xlu0 %v2733
          %v2892 = vpop.xlane.xlu0 %2891
          %2893 = vmax.xlane.f32.xlu0 %v2734
          %v2894 = vpop.xlane.xlu0 %2893
          %2895 = vmax.xlane.f32.xlu0 %v2735
          %v2896 = vpop.xlane.xlu0 %2895
          %2897 = vmax.xlane.f32.xlu0 %v2736
          %v2898 = vpop.xlane.xlu0 %2897
          %2899 = vmax.xlane.f32.xlu0 %v2737
          %v2900 = vpop.xlane.xlu0 %2899
          %2901 = vmax.xlane.f32.xlu0 %v2738
          %v2902 = vpop.xlane.xlu0 %2901
          %2903 = vmax.xlane.f32.xlu0 %v2739
          %v2904 = vpop.xlane.xlu0 %2903
          %2905 = vmax.xlane.f32.xlu0 %v2740
          %v2906 = vpop.xlane.xlu0 %2905
          %2907 = vmax.xlane.f32.xlu0 %v2741
          %v2908 = vpop.xlane.xlu0 %2907
          %2909 = vmax.xlane.f32.xlu0 %v2742
          %v2910 = vpop.xlane.xlu0 %2909
          %2911 = vmax.xlane.f32.xlu0 %v2743
          %v2912 = vpop.xlane.xlu0 %2911
          %2913 = vmax.xlane.f32.xlu0 %v2744
          %v2914 = vpop.xlane.xlu0 %2913
          %2915 = vmax.xlane.f32.xlu0 %v2745
          %v2916 = vpop.xlane.xlu0 %2915
          %2917 = vmax.xlane.f32.xlu0 %v2746
          %v2918 = vpop.xlane.xlu0 %2917
          %2919 = vmax.xlane.f32.xlu0 %v2747
          %v2920 = vpop.xlane.xlu0 %2919
          %2921 = vmax.xlane.f32.xlu0 %v2748
          %v2922 = vpop.xlane.xlu0 %2921
          %2923 = vmax.xlane.f32.xlu0 %v2749
          %v2924 = vpop.xlane.xlu0 %2923
          %2925 = vmax.xlane.f32.xlu0 %v2750
          %v2926 = vpop.xlane.xlu0 %2925
          %2927 = vmax.xlane.f32.xlu0 %v2751
          %v2928 = vpop.xlane.xlu0 %2927
          %2929 = vmax.xlane.f32.xlu0 %v2752
          %v2930 = vpop.xlane.xlu0 %2929
          %2931 = vmax.xlane.f32.xlu0 %v2753
          %v2932 = vpop.xlane.xlu0 %2931
          %2933 = vmax.xlane.f32.xlu0 %v2754
          %v2934 = vpop.xlane.xlu0 %2933
          %2935 = vmax.xlane.f32.xlu0 %v2755
          %v2936 = vpop.xlane.xlu0 %2935
          %2937 = vmax.xlane.f32.xlu0 %v2756
          %v2938 = vpop.xlane.xlu0 %2937
          %2939 = vmax.xlane.f32.xlu0 %v2757
          %v2940 = vpop.xlane.xlu0 %2939
          %2941 = vmax.xlane.f32.xlu0 %v2758
          %v2942 = vpop.xlane.xlu0 %2941
          %2943 = vmax.xlane.f32.xlu0 %v2759
          %v2944 = vpop.xlane.xlu0 %2943
          %2945 = vmax.xlane.f32.xlu0 %v2760
          %v2946 = vpop.xlane.xlu0 %2945
          %2947 = vmax.xlane.f32.xlu0 %v2761
          %v2948 = vpop.xlane.xlu0 %2947
          %2949 = vmax.xlane.f32.xlu0 %v2762
          %v2950 = vpop.xlane.xlu0 %2949
          %2951 = vmax.xlane.f32.xlu0 %v2763
          %v2952 = vpop.xlane.xlu0 %2951
          %2953 = vmax.xlane.f32.xlu0 %v2764
          %v2954 = vpop.xlane.xlu0 %2953
          %2955 = vmax.xlane.f32.xlu0 %v2765
          %v2956 = vpop.xlane.xlu0 %2955
          %2957 = vmax.xlane.f32.xlu0 %v2766
          %v2958 = vpop.xlane.xlu0 %2957
          %2959 = vmax.xlane.f32.xlu0 %v2767
          %v2960 = vpop.xlane.xlu0 %2959
          %2961 = vmax.xlane.f32.xlu0 %v2768
          %v2962 = vpop.xlane.xlu0 %2961
          %2963 = vmax.xlane.f32.xlu0 %v2769
          %v2964 = vpop.xlane.xlu0 %2963
          %2965 = vmax.xlane.f32.xlu0 %v2770
          %v2966 = vpop.xlane.xlu0 %2965
          %2967 = vmax.xlane.f32.xlu0 %v2771
          %v2968 = vpop.xlane.xlu0 %2967
          %2969 = vmax.xlane.f32.xlu0 %v2772
          %v2970 = vpop.xlane.xlu0 %2969
          %2971 = vmax.xlane.f32.xlu0 %v2773
          %v2972 = vpop.xlane.xlu0 %2971
          %2973 = vmax.xlane.f32.xlu0 %v2774
          %v2974 = vpop.xlane.xlu0 %2973
          %2975 = vmax.xlane.f32.xlu0 %v2775
          %v2976 = vpop.xlane.xlu0 %2975
          %2977 = vmax.xlane.f32.xlu0 %v2776
          %v2978 = vpop.xlane.xlu0 %2977
          %2979 = vmax.xlane.f32.xlu0 %v2777
          %v2980 = vpop.xlane.xlu0 %2979
          %2981 = vmax.xlane.f32.xlu0 %v2778
          %v2982 = vpop.xlane.xlu0 %2981
          %2983 = vmax.xlane.f32.xlu0 %v2779
          %v2984 = vpop.xlane.xlu0 %2983
          %2985 = vmax.xlane.f32.xlu0 %v2780
          %v2986 = vpop.xlane.xlu0 %2985
          %2987 = vmax.xlane.f32.xlu0 %v2781
          %v2988 = vpop.xlane.xlu0 %2987
          %2989 = vmax.xlane.f32.xlu0 %v2782
          %v2990 = vpop.xlane.xlu0 %2989
          %2991 = vmax.xlane.f32.xlu0 %v2783
          %v2992 = vpop.xlane.xlu0 %2991
          %2993 = vmax.xlane.f32.xlu0 %v2784
          %v2994 = vpop.xlane.xlu0 %2993
          %2995 = vmax.xlane.f32.xlu0 %v2785
          %v2996 = vpop.xlane.xlu0 %2995
          %2997 = vmax.xlane.f32.xlu0 %v2786
          %v2998 = vpop.xlane.xlu0 %2997
          %2999 = vmax.xlane.f32.xlu0 %v2787
          %v3000 = vpop.xlane.xlu0 %2999
          %3001 = vmax.xlane.f32.xlu0 %v2788
          %v3002 = vpop.xlane.xlu0 %3001
          %3003 = vmax.xlane.f32.xlu0 %v2789
          %v3004 = vpop.xlane.xlu0 %3003
          %3005 = vmax.xlane.f32.xlu0 %v2790
          %v3006 = vpop.xlane.xlu0 %3005
          %3007 = vmax.xlane.f32.xlu0 %v2791
          %v3008 = vpop.xlane.xlu0 %3007
          %3009 = vmax.xlane.f32.xlu0 %v2792
          %v3010 = vpop.xlane.xlu0 %3009
          %3011 = vmax.xlane.f32.xlu0 %v2793
          %v3012 = vpop.xlane.xlu0 %3011
          %3013 = vmax.xlane.f32.xlu0 %v2794
          %v3014 = vpop.xlane.xlu0 %3013
          %3015 = vmax.xlane.f32.xlu0 %v2795
          %v3016 = vpop.xlane.xlu0 %3015
          %3017 = vmax.xlane.f32.xlu0 %v2796
          %v3018 = vpop.xlane.xlu0 %3017
          %3019 = vmax.xlane.f32.xlu0 %v2797
          %v3020 = vpop.xlane.xlu0 %3019
          %3021 = vmax.xlane.f32.xlu0 %v2798
          %v3022 = vpop.xlane.xlu0 %3021
          %3023 = vmax.xlane.f32.xlu0 %v2799
          %v3024 = vpop.xlane.xlu0 %3023
          %3025 = vmax.xlane.f32.xlu0 %v2800
          %v3026 = vpop.xlane.xlu0 %3025
          %3027 = vmax.xlane.f32.xlu0 %v2801
          %v3028 = vpop.xlane.xlu0 %3027
          %3029 = vmax.xlane.f32.xlu0 %v2802
          %v3030 = vpop.xlane.xlu0 %3029
          %3031 = vmax.xlane.f32.xlu0 %v2803
          %v3032 = vpop.xlane.xlu0 %3031
          %3033 = vmax.xlane.f32.xlu0 %v2804
          %v3034 = vpop.xlane.xlu0 %3033
          %3035 = vmax.xlane.f32.xlu0 %v2805
          %v3036 = vpop.xlane.xlu0 %3035
          %3037 = vmax.xlane.f32.xlu0 %v2806
          %v3038 = vpop.xlane.xlu0 %3037
          %3039 = vmax.xlane.f32.xlu0 %v2807
          %v3040 = vpop.xlane.xlu0 %3039
          %3041 = vmax.xlane.f32.xlu0 %v2808
          %v3042 = vpop.xlane.xlu0 %3041
          %3043 = vmax.xlane.f32.xlu0 %v2809
          %v3044 = vpop.xlane.xlu0 %3043
          %3045 = vmax.xlane.f32.xlu0 %v2810
          %v3046 = vpop.xlane.xlu0 %3045
          %3047 = vmax.xlane.f32.xlu0 %v2811
          %v3048 = vpop.xlane.xlu0 %3047
          %3049 = vmax.xlane.f32.xlu0 %v2812
          %v3050 = vpop.xlane.xlu0 %3049
          %3051 = vmax.xlane.f32.xlu0 %v2813
          %v3052 = vpop.xlane.xlu0 %3051
          %3053 = vmax.xlane.f32.xlu0 %v2814
          %v3054 = vpop.xlane.xlu0 %3053
          %3055 = vmax.xlane.f32.xlu0 %v2815
          %v3056 = vpop.xlane.xlu0 %3055
          %3057 = vmax.xlane.f32.xlu0 %v2816
          %v3058 = vpop.xlane.xlu0 %3057
          %3059 = vmax.xlane.f32.xlu0 %v2817
          %v3060 = vpop.xlane.xlu0 %3059
          %3061 = vmax.xlane.f32.xlu0 %v2818
          %v3062 = vpop.xlane.xlu0 %3061
          %3063 = vmax.xlane.f32.xlu0 %v2819
          %v3064 = vpop.xlane.xlu0 %3063
          %3065 = vmax.xlane.f32.xlu0 %v2820
          %v3066 = vpop.xlane.xlu0 %3065
          %3067 = vmax.xlane.f32.xlu0 %v2821
          %v3068 = vpop.xlane.xlu0 %3067
          %3069 = vmax.xlane.f32.xlu0 %v2822
          %v3070 = vpop.xlane.xlu0 %3069
          %3071 = vmax.xlane.f32.xlu0 %v2823
          %v3072 = vpop.xlane.xlu0 %3071
          %3073 = vmax.xlane.f32.xlu0 %v2824
          %v3074 = vpop.xlane.xlu0 %3073
          %3075 = vmax.xlane.f32.xlu0 %v2825
          %v3076 = vpop.xlane.xlu0 %3075
          %3077 = vmax.xlane.f32.xlu0 %v2826
          %v3078 = vpop.xlane.xlu0 %3077
          %3079 = vmax.xlane.f32.xlu0 %v2827
          %v3080 = vpop.xlane.xlu0 %3079
          %3081 = vmax.xlane.f32.xlu0 %v2828
          %v3082 = vpop.xlane.xlu0 %3081
          %3083 = vmax.xlane.f32.xlu0 %v2829
          %v3084 = vpop.xlane.xlu0 %3083
          %3085 = vmax.xlane.f32.xlu0 %v2830
          %v3086 = vpop.xlane.xlu0 %3085
          %v3215 = vlaneseq
          %v3216 = vand.u32 %v3215, 127
          %v3217 = vlaneseq
          %v3218 = vshrl.u32 %v3217, 7
          %v3219 = vsub.s32 %v3216, %v3218
          %v3220 = vrot.slane %v2832, %v3219
          %v3221 = vadd.s32 %v3216, 4294967288
          %v3222 = vlaneseq
          %v3223 = vshrl.u32 %v3222, 7
          %v3224 = vsub.s32 %v3221, %v3223
          %v3225 = vrot.slane %v2834, %v3224
          %vm3226 = vcmask 130112
          %v3227 = vsel %vm3226, %v3225, %v3220
          %v3228 = vadd.s32 %v3216, 4294967280
          %v3229 = vlaneseq
          %v3230 = vshrl.u32 %v3229, 7
          %v3231 = vsub.s32 %v3228, %v3230
          %v3232 = vrot.slane %v2836, %v3231
          %vm3233 = vcmask 195712
          %v3234 = vsel %vm3233, %v3232, %v3227
          %v3235 = vadd.s32 %v3216, 4294967272
          %v3236 = vlaneseq
          %v3237 = vshrl.u32 %v3236, 7
          %v3238 = vsub.s32 %v3235, %v3237
          %v3239 = vrot.slane %v2838, %v3238
          %vm3240 = vcmask 261312
          %v3241 = vsel %vm3240, %v3239, %v3234
          %v3242 = vadd.s32 %v3216, 4294967264
          %v3243 = vlaneseq
          %v3244 = vshrl.u32 %v3243, 7
          %v3245 = vsub.s32 %v3242, %v3244
          %v3246 = vrot.slane %v2840, %v3245
          %vm3247 = vcmask 326912
          %v3248 = vsel %vm3247, %v3246, %v3241
          %v3249 = vadd.s32 %v3216, 4294967256
          %v3250 = vlaneseq
          %v3251 = vshrl.u32 %v3250, 7
          %v3252 = vsub.s32 %v3249, %v3251
          %v3253 = vrot.slane %v2842, %v3252
          %vm3254 = vcmask 392512
          %v3255 = vsel %vm3254, %v3253, %v3248
          %v3256 = vadd.s32 %v3216, 4294967248
          %v3257 = vlaneseq
          %v3258 = vshrl.u32 %v3257, 7
          %v3259 = vsub.s32 %v3256, %v3258
          %v3260 = vrot.slane %v2844, %v3259
          %vm3261 = vcmask 458112
          %v3262 = vsel %vm3261, %v3260, %v3255
          %v3263 = vadd.s32 %v3216, 4294967240
          %v3264 = vlaneseq
          %v3265 = vshrl.u32 %v3264, 7
          %v3266 = vsub.s32 %v3263, %v3265
          %v3267 = vrot.slane %v2846, %v3266
          %vm3268 = vcmask 523712
          %v3269 = vsel %vm3268, %v3267, %v3262
          %v3270 = vadd.s32 %v3216, 4294967232
          %v3271 = vlaneseq
          %v3272 = vshrl.u32 %v3271, 7
          %v3273 = vsub.s32 %v3270, %v3272
          %v3274 = vrot.slane %v2848, %v3273
          %vm3275 = vcmask 589312
          %v3276 = vsel %vm3275, %v3274, %v3269
          %v3277 = vadd.s32 %v3216, 4294967224
          %v3278 = vlaneseq
          %v3279 = vshrl.u32 %v3278, 7
          %v3280 = vsub.s32 %v3277, %v3279
          %v3281 = vrot.slane %v2850, %v3280
          %vm3282 = vcmask 654912
          %v3283 = vsel %vm3282, %v3281, %v3276
          %v3284 = vadd.s32 %v3216, 4294967216
          %v3285 = vlaneseq
          %v3286 = vshrl.u32 %v3285, 7
          %v3287 = vsub.s32 %v3284, %v3286
          %v3288 = vrot.slane %v2852, %v3287
          %vm3289 = vcmask 720512
          %v3290 = vsel %vm3289, %v3288, %v3283
          %v3291 = vadd.s32 %v3216, 4294967208
          %v3292 = vlaneseq
          %v3293 = vshrl.u32 %v3292, 7
          %v3294 = vsub.s32 %v3291, %v3293
          %v3295 = vrot.slane %v2854, %v3294
          %vm3296 = vcmask 786112
          %v3297 = vsel %vm3296, %v3295, %v3290
          %v3298 = vadd.s32 %v3216, 4294967200
          %v3299 = vlaneseq
          %v3300 = vshrl.u32 %v3299, 7
          %v3301 = vsub.s32 %v3298, %v3300
          %v3302 = vrot.slane %v2856, %v3301
          %vm3303 = vcmask 851712
          %v3304 = vsel %vm3303, %v3302, %v3297
          %v3305 = vadd.s32 %v3216, 4294967192
          %v3306 = vlaneseq
          %v3307 = vshrl.u32 %v3306, 7
          %v3308 = vsub.s32 %v3305, %v3307
          %v3309 = vrot.slane %v2858, %v3308
          %vm3310 = vcmask 917312
          %v3311 = vsel %vm3310, %v3309, %v3304
          %v3312 = vadd.s32 %v3216, 4294967184
          %v3313 = vlaneseq
          %v3314 = vshrl.u32 %v3313, 7
          %v3315 = vsub.s32 %v3312, %v3314
          %v3316 = vrot.slane %v2860, %v3315
          %vm3317 = vcmask 982912
          %v3318 = vsel %vm3317, %v3316, %v3311
          %v3319 = vadd.s32 %v3216, 4294967176
          %v3320 = vlaneseq
          %v3321 = vshrl.u32 %v3320, 7
          %v3322 = vsub.s32 %v3319, %v3321
          %v3323 = vrot.slane %v2862, %v3322
          %vm3324 = vcmask 1048512
          %v3325 = vsel %vm3324, %v3323, %v3318
          %v3326 = vlaneseq
          %v3327 = vshrl.u32 %v3326, 7
          %v3328 = vsub.s32 %v3216, %v3327
          %v3329 = vrot.slane %v2864, %v3328
          %v3330 = vlaneseq
          %v3331 = vshrl.u32 %v3330, 7
          %v3332 = vsub.s32 %v3221, %v3331
          %v3333 = vrot.slane %v2866, %v3332
          %v3334 = vsel %vm3226, %v3333, %v3329
          %v3335 = vlaneseq
          %v3336 = vshrl.u32 %v3335, 7
          %v3337 = vsub.s32 %v3228, %v3336
          %v3338 = vrot.slane %v2868, %v3337
          %v3339 = vsel %vm3233, %v3338, %v3334
          %v3340 = vlaneseq
          %v3341 = vshrl.u32 %v3340, 7
          %v3342 = vsub.s32 %v3235, %v3341
          %v3343 = vrot.slane %v2870, %v3342
          %v3344 = vsel %vm3240, %v3343, %v3339
          %v3345 = vlaneseq
          %v3346 = vshrl.u32 %v3345, 7
          %v3347 = vsub.s32 %v3242, %v3346
          %v3348 = vrot.slane %v2872, %v3347
          %v3349 = vsel %vm3247, %v3348, %v3344
          %v3350 = vlaneseq
          %v3351 = vshrl.u32 %v3350, 7
          %v3352 = vsub.s32 %v3249, %v3351
          %v3353 = vrot.slane %v2874, %v3352
          %v3354 = vsel %vm3254, %v3353, %v3349
          %v3355 = vlaneseq
          %v3356 = vshrl.u32 %v3355, 7
          %v3357 = vsub.s32 %v3256, %v3356
          %v3358 = vrot.slane %v2876, %v3357
          %v3359 = vsel %vm3261, %v3358, %v3354
          %v3360 = vlaneseq
          %v3361 = vshrl.u32 %v3360, 7
          %v3362 = vsub.s32 %v3263, %v3361
          %v3363 = vrot.slane %v2878, %v3362
          %v3364 = vsel %vm3268, %v3363, %v3359
          %v3365 = vlaneseq
          %v3366 = vshrl.u32 %v3365, 7
          %v3367 = vsub.s32 %v3270, %v3366
          %v3368 = vrot.slane %v2880, %v3367
          %v3369 = vsel %vm3275, %v3368, %v3364
          %v3370 = vlaneseq
          %v3371 = vshrl.u32 %v3370, 7
          %v3372 = vsub.s32 %v3277, %v3371
          %v3373 = vrot.slane %v2882, %v3372
          %v3374 = vsel %vm3282, %v3373, %v3369
          %v3375 = vlaneseq
          %v3376 = vshrl.u32 %v3375, 7
          %v3377 = vsub.s32 %v3284, %v3376
          %v3378 = vrot.slane %v2884, %v3377
          %v3379 = vsel %vm3289, %v3378, %v3374
          %v3380 = vlaneseq
          %v3381 = vshrl.u32 %v3380, 7
          %v3382 = vsub.s32 %v3291, %v3381
          %v3383 = vrot.slane %v2886, %v3382
          %v3384 = vsel %vm3296, %v3383, %v3379
          %v3385 = vlaneseq
          %v3386 = vshrl.u32 %v3385, 7
          %v3387 = vsub.s32 %v3298, %v3386
          %v3388 = vrot.slane %v2888, %v3387
          %v3389 = vsel %vm3303, %v3388, %v3384
          %v3390 = vlaneseq
          %v3391 = vshrl.u32 %v3390, 7
          %v3392 = vsub.s32 %v3305, %v3391
          %v3393 = vrot.slane %v2890, %v3392
          %v3394 = vsel %vm3310, %v3393, %v3389
          %v3395 = vlaneseq
          %v3396 = vshrl.u32 %v3395, 7
          %v3397 = vsub.s32 %v3312, %v3396
          %v3398 = vrot.slane %v2892, %v3397
          %v3399 = vsel %vm3317, %v3398, %v3394
          %v3400 = vlaneseq
          %v3401 = vshrl.u32 %v3400, 7
          %v3402 = vsub.s32 %v3319, %v3401
          %v3403 = vrot.slane %v2894, %v3402
          %v3404 = vsel %vm3324, %v3403, %v3399
          %v3405 = vlaneseq
          %v3406 = vshrl.u32 %v3405, 7
          %v3407 = vsub.s32 %v3216, %v3406
          %v3408 = vrot.slane %v2896, %v3407
          %v3409 = vlaneseq
          %v3410 = vshrl.u32 %v3409, 7
          %v3411 = vsub.s32 %v3221, %v3410
          %v3412 = vrot.slane %v2898, %v3411
          %v3413 = vsel %vm3226, %v3412, %v3408
          %v3414 = vlaneseq
          %v3415 = vshrl.u32 %v3414, 7
          %v3416 = vsub.s32 %v3228, %v3415
          %v3417 = vrot.slane %v2900, %v3416
          %v3418 = vsel %vm3233, %v3417, %v3413
          %v3419 = vlaneseq
          %v3420 = vshrl.u32 %v3419, 7
          %v3421 = vsub.s32 %v3235, %v3420
          %v3422 = vrot.slane %v2902, %v3421
          %v3423 = vsel %vm3240, %v3422, %v3418
          %v3424 = vlaneseq
          %v3425 = vshrl.u32 %v3424, 7
          %v3426 = vsub.s32 %v3242, %v3425
          %v3427 = vrot.slane %v2904, %v3426
          %v3428 = vsel %vm3247, %v3427, %v3423
          %v3429 = vlaneseq
          %v3430 = vshrl.u32 %v3429, 7
          %v3431 = vsub.s32 %v3249, %v3430
          %v3432 = vrot.slane %v2906, %v3431
          %v3433 = vsel %vm3254, %v3432, %v3428
          %v3434 = vlaneseq
          %v3435 = vshrl.u32 %v3434, 7
          %v3436 = vsub.s32 %v3256, %v3435
          %v3437 = vrot.slane %v2908, %v3436
          %v3438 = vsel %vm3261, %v3437, %v3433
          %v3439 = vlaneseq
          %v3440 = vshrl.u32 %v3439, 7
          %v3441 = vsub.s32 %v3263, %v3440
          %v3442 = vrot.slane %v2910, %v3441
          %v3443 = vsel %vm3268, %v3442, %v3438
          %v3444 = vlaneseq
          %v3445 = vshrl.u32 %v3444, 7
          %v3446 = vsub.s32 %v3270, %v3445
          %v3447 = vrot.slane %v2912, %v3446
          %v3448 = vsel %vm3275, %v3447, %v3443
          %v3449 = vlaneseq
          %v3450 = vshrl.u32 %v3449, 7
          %v3451 = vsub.s32 %v3277, %v3450
          %v3452 = vrot.slane %v2914, %v3451
          %v3453 = vsel %vm3282, %v3452, %v3448
          %v3454 = vlaneseq
          %v3455 = vshrl.u32 %v3454, 7
          %v3456 = vsub.s32 %v3284, %v3455
          %v3457 = vrot.slane %v2916, %v3456
          %v3458 = vsel %vm3289, %v3457, %v3453
          %v3459 = vlaneseq
          %v3460 = vshrl.u32 %v3459, 7
          %v3461 = vsub.s32 %v3291, %v3460
          %v3462 = vrot.slane %v2918, %v3461
          %v3463 = vsel %vm3296, %v3462, %v3458
          %v3464 = vlaneseq
          %v3465 = vshrl.u32 %v3464, 7
          %v3466 = vsub.s32 %v3298, %v3465
          %v3467 = vrot.slane %v2920, %v3466
          %v3468 = vsel %vm3303, %v3467, %v3463
          %v3469 = vlaneseq
          %v3470 = vshrl.u32 %v3469, 7
          %v3471 = vsub.s32 %v3305, %v3470
          %v3472 = vrot.slane %v2922, %v3471
          %v3473 = vsel %vm3310, %v3472, %v3468
          %v3474 = vlaneseq
          %v3475 = vshrl.u32 %v3474, 7
          %v3476 = vsub.s32 %v3312, %v3475
          %v3477 = vrot.slane %v2924, %v3476
          %v3478 = vsel %vm3317, %v3477, %v3473
          %v3479 = vlaneseq
          %v3480 = vshrl.u32 %v3479, 7
          %v3481 = vsub.s32 %v3319, %v3480
          %v3482 = vrot.slane %v2926, %v3481
          %v3483 = vsel %vm3324, %v3482, %v3478
          %v3484 = vlaneseq
          %v3485 = vshrl.u32 %v3484, 7
          %v3486 = vsub.s32 %v3216, %v3485
          %v3487 = vrot.slane %v2928, %v3486
          %v3488 = vlaneseq
          %v3489 = vshrl.u32 %v3488, 7
          %v3490 = vsub.s32 %v3221, %v3489
          %v3491 = vrot.slane %v2930, %v3490
          %v3492 = vsel %vm3226, %v3491, %v3487
          %v3493 = vlaneseq
          %v3494 = vshrl.u32 %v3493, 7
          %v3495 = vsub.s32 %v3228, %v3494
          %v3496 = vrot.slane %v2932, %v3495
          %v3497 = vsel %vm3233, %v3496, %v3492
          %v3498 = vlaneseq
          %v3499 = vshrl.u32 %v3498, 7
          %v3500 = vsub.s32 %v3235, %v3499
          %v3501 = vrot.slane %v2934, %v3500
          %v3502 = vsel %vm3240, %v3501, %v3497
          %v3503 = vlaneseq
          %v3504 = vshrl.u32 %v3503, 7
          %v3505 = vsub.s32 %v3242, %v3504
          %v3506 = vrot.slane %v2936, %v3505
          %v3507 = vsel %vm3247, %v3506, %v3502
          %v3508 = vlaneseq
          %v3509 = vshrl.u32 %v3508, 7
          %v3510 = vsub.s32 %v3249, %v3509
          %v3511 = vrot.slane %v2938, %v3510
          %v3512 = vsel %vm3254, %v3511, %v3507
          %v3513 = vlaneseq
          %v3514 = vshrl.u32 %v3513, 7
          %v3515 = vsub.s32 %v3256, %v3514
          %v3516 = vrot.slane %v2940, %v3515
          %v3517 = vsel %vm3261, %v3516, %v3512
          %v3518 = vlaneseq
          %v3519 = vshrl.u32 %v3518, 7
          %v3520 = vsub.s32 %v3263, %v3519
          %v3521 = vrot.slane %v2942, %v3520
          %v3522 = vsel %vm3268, %v3521, %v3517
          %v3523 = vlaneseq
          %v3524 = vshrl.u32 %v3523, 7
          %v3525 = vsub.s32 %v3270, %v3524
          %v3526 = vrot.slane %v2944, %v3525
          %v3527 = vsel %vm3275, %v3526, %v3522
          %v3528 = vlaneseq
          %v3529 = vshrl.u32 %v3528, 7
          %v3530 = vsub.s32 %v3277, %v3529
          %v3531 = vrot.slane %v2946, %v3530
          %v3532 = vsel %vm3282, %v3531, %v3527
          %v3533 = vlaneseq
          %v3534 = vshrl.u32 %v3533, 7
          %v3535 = vsub.s32 %v3284, %v3534
          %v3536 = vrot.slane %v2948, %v3535
          %v3537 = vsel %vm3289, %v3536, %v3532
          %v3538 = vlaneseq
          %v3539 = vshrl.u32 %v3538, 7
          %v3540 = vsub.s32 %v3291, %v3539
          %v3541 = vrot.slane %v2950, %v3540
          %v3542 = vsel %vm3296, %v3541, %v3537
          %v3543 = vlaneseq
          %v3544 = vshrl.u32 %v3543, 7
          %v3545 = vsub.s32 %v3298, %v3544
          %v3546 = vrot.slane %v2952, %v3545
          %v3547 = vsel %vm3303, %v3546, %v3542
          %v3548 = vlaneseq
          %v3549 = vshrl.u32 %v3548, 7
          %v3550 = vsub.s32 %v3305, %v3549
          %v3551 = vrot.slane %v2954, %v3550
          %v3552 = vsel %vm3310, %v3551, %v3547
          %v3553 = vlaneseq
          %v3554 = vshrl.u32 %v3553, 7
          %v3555 = vsub.s32 %v3312, %v3554
          %v3556 = vrot.slane %v2956, %v3555
          %v3557 = vsel %vm3317, %v3556, %v3552
          %v3558 = vlaneseq
          %v3559 = vshrl.u32 %v3558, 7
          %v3560 = vsub.s32 %v3319, %v3559
          %v3561 = vrot.slane %v2958, %v3560
          %v3562 = vsel %vm3324, %v3561, %v3557
          %v3563 = vlaneseq
          %v3564 = vshrl.u32 %v3563, 7
          %v3565 = vsub.s32 %v3216, %v3564
          %v3566 = vrot.slane %v2960, %v3565
          %v3567 = vlaneseq
          %v3568 = vshrl.u32 %v3567, 7
          %v3569 = vsub.s32 %v3221, %v3568
          %v3570 = vrot.slane %v2962, %v3569
          %v3571 = vsel %vm3226, %v3570, %v3566
          %v3572 = vlaneseq
          %v3573 = vshrl.u32 %v3572, 7
          %v3574 = vsub.s32 %v3228, %v3573
          %v3575 = vrot.slane %v2964, %v3574
          %v3576 = vsel %vm3233, %v3575, %v3571
          %v3577 = vlaneseq
          %v3578 = vshrl.u32 %v3577, 7
          %v3579 = vsub.s32 %v3235, %v3578
          %v3580 = vrot.slane %v2966, %v3579
          %v3581 = vsel %vm3240, %v3580, %v3576
          %v3582 = vlaneseq
          %v3583 = vshrl.u32 %v3582, 7
          %v3584 = vsub.s32 %v3242, %v3583
          %v3585 = vrot.slane %v2968, %v3584
          %v3586 = vsel %vm3247, %v3585, %v3581
          %v3587 = vlaneseq
          %v3588 = vshrl.u32 %v3587, 7
          %v3589 = vsub.s32 %v3249, %v3588
          %v3590 = vrot.slane %v2970, %v3589
          %v3591 = vsel %vm3254, %v3590, %v3586
          %v3592 = vlaneseq
          %v3593 = vshrl.u32 %v3592, 7
          %v3594 = vsub.s32 %v3256, %v3593
          %v3595 = vrot.slane %v2972, %v3594
          %v3596 = vsel %vm3261, %v3595, %v3591
          %v3597 = vlaneseq
          %v3598 = vshrl.u32 %v3597, 7
          %v3599 = vsub.s32 %v3263, %v3598
          %v3600 = vrot.slane %v2974, %v3599
          %v3601 = vsel %vm3268, %v3600, %v3596
          %v3602 = vlaneseq
          %v3603 = vshrl.u32 %v3602, 7
          %v3604 = vsub.s32 %v3270, %v3603
          %v3605 = vrot.slane %v2976, %v3604
          %v3606 = vsel %vm3275, %v3605, %v3601
          %v3607 = vlaneseq
          %v3608 = vshrl.u32 %v3607, 7
          %v3609 = vsub.s32 %v3277, %v3608
          %v3610 = vrot.slane %v2978, %v3609
          %v3611 = vsel %vm3282, %v3610, %v3606
          %v3612 = vlaneseq
          %v3613 = vshrl.u32 %v3612, 7
          %v3614 = vsub.s32 %v3284, %v3613
          %v3615 = vrot.slane %v2980, %v3614
          %v3616 = vsel %vm3289, %v3615, %v3611
          %v3617 = vlaneseq
          %v3618 = vshrl.u32 %v3617, 7
          %v3619 = vsub.s32 %v3291, %v3618
          %v3620 = vrot.slane %v2982, %v3619
          %v3621 = vsel %vm3296, %v3620, %v3616
          %v3622 = vlaneseq
          %v3623 = vshrl.u32 %v3622, 7
          %v3624 = vsub.s32 %v3298, %v3623
          %v3625 = vrot.slane %v2984, %v3624
          %v3626 = vsel %vm3303, %v3625, %v3621
          %v3627 = vlaneseq
          %v3628 = vshrl.u32 %v3627, 7
          %v3629 = vsub.s32 %v3305, %v3628
          %v3630 = vrot.slane %v2986, %v3629
          %v3631 = vsel %vm3310, %v3630, %v3626
          %v3632 = vlaneseq
          %v3633 = vshrl.u32 %v3632, 7
          %v3634 = vsub.s32 %v3312, %v3633
          %v3635 = vrot.slane %v2988, %v3634
          %v3636 = vsel %vm3317, %v3635, %v3631
          %v3637 = vlaneseq
          %v3638 = vshrl.u32 %v3637, 7
          %v3639 = vsub.s32 %v3319, %v3638
          %v3640 = vrot.slane %v2990, %v3639
          %v3641 = vsel %vm3324, %v3640, %v3636
          %v3642 = vlaneseq
          %v3643 = vshrl.u32 %v3642, 7
          %v3644 = vsub.s32 %v3216, %v3643
          %v3645 = vrot.slane %v2992, %v3644
          %v3646 = vlaneseq
          %v3647 = vshrl.u32 %v3646, 7
          %v3648 = vsub.s32 %v3221, %v3647
          %v3649 = vrot.slane %v2994, %v3648
          %v3650 = vsel %vm3226, %v3649, %v3645
          %v3651 = vlaneseq
          %v3652 = vshrl.u32 %v3651, 7
          %v3653 = vsub.s32 %v3228, %v3652
          %v3654 = vrot.slane %v2996, %v3653
          %v3655 = vsel %vm3233, %v3654, %v3650
          %v3656 = vlaneseq
          %v3657 = vshrl.u32 %v3656, 7
          %v3658 = vsub.s32 %v3235, %v3657
          %v3659 = vrot.slane %v2998, %v3658
          %v3660 = vsel %vm3240, %v3659, %v3655
          %v3661 = vlaneseq
          %v3662 = vshrl.u32 %v3661, 7
          %v3663 = vsub.s32 %v3242, %v3662
          %v3664 = vrot.slane %v3000, %v3663
          %v3665 = vsel %vm3247, %v3664, %v3660
          %v3666 = vlaneseq
          %v3667 = vshrl.u32 %v3666, 7
          %v3668 = vsub.s32 %v3249, %v3667
          %v3669 = vrot.slane %v3002, %v3668
          %v3670 = vsel %vm3254, %v3669, %v3665
          %v3671 = vlaneseq
          %v3672 = vshrl.u32 %v3671, 7
          %v3673 = vsub.s32 %v3256, %v3672
          %v3674 = vrot.slane %v3004, %v3673
          %v3675 = vsel %vm3261, %v3674, %v3670
          %v3676 = vlaneseq
          %v3677 = vshrl.u32 %v3676, 7
          %v3678 = vsub.s32 %v3263, %v3677
          %v3679 = vrot.slane %v3006, %v3678
          %v3680 = vsel %vm3268, %v3679, %v3675
          %v3681 = vlaneseq
          %v3682 = vshrl.u32 %v3681, 7
          %v3683 = vsub.s32 %v3270, %v3682
          %v3684 = vrot.slane %v3008, %v3683
          %v3685 = vsel %vm3275, %v3684, %v3680
          %v3686 = vlaneseq
          %v3687 = vshrl.u32 %v3686, 7
          %v3688 = vsub.s32 %v3277, %v3687
          %v3689 = vrot.slane %v3010, %v3688
          %v3690 = vsel %vm3282, %v3689, %v3685
          %v3691 = vlaneseq
          %v3692 = vshrl.u32 %v3691, 7
          %v3693 = vsub.s32 %v3284, %v3692
          %v3694 = vrot.slane %v3012, %v3693
          %v3695 = vsel %vm3289, %v3694, %v3690
          %v3696 = vlaneseq
          %v3697 = vshrl.u32 %v3696, 7
          %v3698 = vsub.s32 %v3291, %v3697
          %v3699 = vrot.slane %v3014, %v3698
          %v3700 = vsel %vm3296, %v3699, %v3695
          %v3701 = vlaneseq
          %v3702 = vshrl.u32 %v3701, 7
          %v3703 = vsub.s32 %v3298, %v3702
          %v3704 = vrot.slane %v3016, %v3703
          %v3705 = vsel %vm3303, %v3704, %v3700
          %v3706 = vlaneseq
          %v3707 = vshrl.u32 %v3706, 7
          %v3708 = vsub.s32 %v3305, %v3707
          %v3709 = vrot.slane %v3018, %v3708
          %v3710 = vsel %vm3310, %v3709, %v3705
          %v3711 = vlaneseq
          %v3712 = vshrl.u32 %v3711, 7
          %v3713 = vsub.s32 %v3312, %v3712
          %v3714 = vrot.slane %v3020, %v3713
          %v3715 = vsel %vm3317, %v3714, %v3710
          %v3716 = vlaneseq
          %v3717 = vshrl.u32 %v3716, 7
          %v3718 = vsub.s32 %v3319, %v3717
          %v3719 = vrot.slane %v3022, %v3718
          %v3720 = vsel %vm3324, %v3719, %v3715
          %v3721 = vlaneseq
          %v3722 = vshrl.u32 %v3721, 7
          %v3723 = vsub.s32 %v3216, %v3722
          %v3724 = vrot.slane %v3024, %v3723
          %v3725 = vlaneseq
          %v3726 = vshrl.u32 %v3725, 7
          %v3727 = vsub.s32 %v3221, %v3726
          %v3728 = vrot.slane %v3026, %v3727
          %v3729 = vsel %vm3226, %v3728, %v3724
          %v3730 = vlaneseq
          %v3731 = vshrl.u32 %v3730, 7
          %v3732 = vsub.s32 %v3228, %v3731
          %v3733 = vrot.slane %v3028, %v3732
          %v3734 = vsel %vm3233, %v3733, %v3729
          %v3735 = vlaneseq
          %v3736 = vshrl.u32 %v3735, 7
          %v3737 = vsub.s32 %v3235, %v3736
          %v3738 = vrot.slane %v3030, %v3737
          %v3739 = vsel %vm3240, %v3738, %v3734
          %v3740 = vlaneseq
          %v3741 = vshrl.u32 %v3740, 7
          %v3742 = vsub.s32 %v3242, %v3741
          %v3743 = vrot.slane %v3032, %v3742
          %v3744 = vsel %vm3247, %v3743, %v3739
          %v3745 = vlaneseq
          %v3746 = vshrl.u32 %v3745, 7
          %v3747 = vsub.s32 %v3249, %v3746
          %v3748 = vrot.slane %v3034, %v3747
          %v3749 = vsel %vm3254, %v3748, %v3744
          %v3750 = vlaneseq
          %v3751 = vshrl.u32 %v3750, 7
          %v3752 = vsub.s32 %v3256, %v3751
          %v3753 = vrot.slane %v3036, %v3752
          %v3754 = vsel %vm3261, %v3753, %v3749
          %v3755 = vlaneseq
          %v3756 = vshrl.u32 %v3755, 7
          %v3757 = vsub.s32 %v3263, %v3756
          %v3758 = vrot.slane %v3038, %v3757
          %v3759 = vsel %vm3268, %v3758, %v3754
          %v3760 = vlaneseq
          %v3761 = vshrl.u32 %v3760, 7
          %v3762 = vsub.s32 %v3270, %v3761
          %v3763 = vrot.slane %v3040, %v3762
          %v3764 = vsel %vm3275, %v3763, %v3759
          %v3765 = vlaneseq
          %v3766 = vshrl.u32 %v3765, 7
          %v3767 = vsub.s32 %v3277, %v3766
          %v3768 = vrot.slane %v3042, %v3767
          %v3769 = vsel %vm3282, %v3768, %v3764
          %v3770 = vlaneseq
          %v3771 = vshrl.u32 %v3770, 7
          %v3772 = vsub.s32 %v3284, %v3771
          %v3773 = vrot.slane %v3044, %v3772
          %v3774 = vsel %vm3289, %v3773, %v3769
          %v3775 = vlaneseq
          %v3776 = vshrl.u32 %v3775, 7
          %v3777 = vsub.s32 %v3291, %v3776
          %v3778 = vrot.slane %v3046, %v3777
          %v3779 = vsel %vm3296, %v3778, %v3774
          %v3780 = vlaneseq
          %v3781 = vshrl.u32 %v3780, 7
          %v3782 = vsub.s32 %v3298, %v3781
          %v3783 = vrot.slane %v3048, %v3782
          %v3784 = vsel %vm3303, %v3783, %v3779
          %v3785 = vlaneseq
          %v3786 = vshrl.u32 %v3785, 7
          %v3787 = vsub.s32 %v3305, %v3786
          %v3788 = vrot.slane %v3050, %v3787
          %v3789 = vsel %vm3310, %v3788, %v3784
          %v3790 = vlaneseq
          %v3791 = vshrl.u32 %v3790, 7
          %v3792 = vsub.s32 %v3312, %v3791
          %v3793 = vrot.slane %v3052, %v3792
          %v3794 = vsel %vm3317, %v3793, %v3789
          %v3795 = vlaneseq
          %v3796 = vshrl.u32 %v3795, 7
          %v3797 = vsub.s32 %v3319, %v3796
          %v3798 = vrot.slane %v3054, %v3797
          %v3799 = vsel %vm3324, %v3798, %v3794
          %v3800 = vlaneseq
          %v3801 = vshrl.u32 %v3800, 7
          %v3802 = vsub.s32 %v3216, %v3801
          %v3803 = vrot.slane %v3056, %v3802
          %v3804 = vlaneseq
          %v3805 = vshrl.u32 %v3804, 7
          %v3806 = vsub.s32 %v3221, %v3805
          %v3807 = vrot.slane %v3058, %v3806
          %v3808 = vsel %vm3226, %v3807, %v3803
          %v3809 = vlaneseq
          %v3810 = vshrl.u32 %v3809, 7
          %v3811 = vsub.s32 %v3228, %v3810
          %v3812 = vrot.slane %v3060, %v3811
          %v3813 = vsel %vm3233, %v3812, %v3808
          %v3814 = vlaneseq
          %v3815 = vshrl.u32 %v3814, 7
          %v3816 = vsub.s32 %v3235, %v3815
          %v3817 = vrot.slane %v3062, %v3816
          %v3818 = vsel %vm3240, %v3817, %v3813
          %v3819 = vlaneseq
          %v3820 = vshrl.u32 %v3819, 7
          %v3821 = vsub.s32 %v3242, %v3820
          %v3822 = vrot.slane %v3064, %v3821
          %v3823 = vsel %vm3247, %v3822, %v3818
          %v3824 = vlaneseq
          %v3825 = vshrl.u32 %v3824, 7
          %v3826 = vsub.s32 %v3249, %v3825
          %v3827 = vrot.slane %v3066, %v3826
          %v3828 = vsel %vm3254, %v3827, %v3823
          %v3829 = vlaneseq
          %v3830 = vshrl.u32 %v3829, 7
          %v3831 = vsub.s32 %v3256, %v3830
          %v3832 = vrot.slane %v3068, %v3831
          %v3833 = vsel %vm3261, %v3832, %v3828
          %v3834 = vlaneseq
          %v3835 = vshrl.u32 %v3834, 7
          %v3836 = vsub.s32 %v3263, %v3835
          %v3837 = vrot.slane %v3070, %v3836
          %v3838 = vsel %vm3268, %v3837, %v3833
          %v3839 = vlaneseq
          %v3840 = vshrl.u32 %v3839, 7
          %v3841 = vsub.s32 %v3270, %v3840
          %v3842 = vrot.slane %v3072, %v3841
          %v3843 = vsel %vm3275, %v3842, %v3838
          %v3844 = vlaneseq
          %v3845 = vshrl.u32 %v3844, 7
          %v3846 = vsub.s32 %v3277, %v3845
          %v3847 = vrot.slane %v3074, %v3846
          %v3848 = vsel %vm3282, %v3847, %v3843
          %v3849 = vlaneseq
          %v3850 = vshrl.u32 %v3849, 7
          %v3851 = vsub.s32 %v3284, %v3850
          %v3852 = vrot.slane %v3076, %v3851
          %v3853 = vsel %vm3289, %v3852, %v3848
          %v3854 = vlaneseq
          %v3855 = vshrl.u32 %v3854, 7
          %v3856 = vsub.s32 %v3291, %v3855
          %v3857 = vrot.slane %v3078, %v3856
          %v3858 = vsel %vm3296, %v3857, %v3853
          %v3859 = vlaneseq
          %v3860 = vshrl.u32 %v3859, 7
          %v3861 = vsub.s32 %v3298, %v3860
          %v3862 = vrot.slane %v3080, %v3861
          %v3863 = vsel %vm3303, %v3862, %v3858
          %v3864 = vlaneseq
          %v3865 = vshrl.u32 %v3864, 7
          %v3866 = vsub.s32 %v3305, %v3865
          %v3867 = vrot.slane %v3082, %v3866
          %v3868 = vsel %vm3310, %v3867, %v3863
          %v3869 = vlaneseq
          %v3870 = vshrl.u32 %v3869, 7
          %v3871 = vsub.s32 %v3312, %v3870
          %v3872 = vrot.slane %v3084, %v3871
          %v3873 = vsel %vm3317, %v3872, %v3868
          %v3874 = vlaneseq
          %v3875 = vshrl.u32 %v3874, 7
          %v3876 = vsub.s32 %v3319, %v3875
          %v3877 = vrot.slane %v3086, %v3876
          %v3878 = vsel %vm3324, %v3877, %v3873
          %vm3879 = vcmask 1041409
          %v3880 = vsel %vm3879, %v3404, %v3325
          %vm3881 = vcmask 1042434
          %v3882 = vsel %vm3881, %v3483, %v3880
          %vm3883 = vcmask 1043459
          %v3884 = vsel %vm3883, %v3562, %v3882
          %vm3885 = vcmask 1044484
          %v3886 = vsel %vm3885, %v3641, %v3884
          %vm3887 = vcmask 1045509
          %v3888 = vsel %vm3887, %v3720, %v3886
          %vm3889 = vcmask 1046534
          %v3890 = vsel %vm3889, %v3799, %v3888
          %vm3891 = vcmask 1047559
          %v3892 = vsel %vm3891, %v3878, %v3890
          %3894 = vst [vmem:[%s313] sm:$0xff] %v3892
        $region67: #{tpu_custom_call.1} parent=47 // pred_fallthru
          _
        %s3895 = sand.u32 %s198, 1
        %s3896 = scalar_lea.sflag [#allocation5], %s3895
        %s3897 = sand.u32 %s198, 1
        %s3898 = smul.addr %s3897, 8
        %s3899 = scalar_lea.vmem [#allocation6], %s3898
        // Predicated region
        $region68: #{tpu_custom_call.1} parent=47 // pred_check
          %p3900 = pneg %p208
        $region69: #{tpu_custom_call.1} parent=47 // pred_check_branch
          %3902 = sbr.rel (%p3900) target = $region71
        $region70: #{tpu_custom_call.1} parent=47 // pred_region
          %s3904 = ssub.s32 128, 128
          %3905 = vsyncadd %s3896, %s3904
          %s3906 = smul.addr %s28, 128
          %s3907 = scalar_lea.hbm %s7, %s3906
          %s3909 = sshll.u32 %s3899, 4
          %s3910 = int_to_ptr.vmem [resolvable:$true] %s3909
          %3912 = dma.vmem_to_hbm [thread:$0]  %s3910, 128, %s3907, %s3896
        $region71: #{tpu_custom_call.1} parent=47 // pred_fallthru
          _
      $region48: #{tpu_custom_call.1} parent=5 // pred_fallthru
        _
      %p3913 = scmp.le.s32.totalorder 2, %s19
      // Predicated region
      $region72: #{tpu_custom_call.1} parent=5 // pred_check
        %p3914 = pneg %p3913
      $region73: #{tpu_custom_call.1} parent=5 // pred_check_branch
        %3916 = sbr.rel (%p3914) target = $region75
      $region74: #{tpu_custom_call.1} parent=5 // pred_region
        %s3917 = ssub.s32 %s19, 2
        // Predicated region
        $region76: #{tpu_custom_call.1} parent=74 // pred_check
          %p3918 = pneg %p214
        $region77: #{tpu_custom_call.1} parent=74 // pred_check_branch
          %3920 = sbr.rel (%p3918) target = $region79
        $region78: #{tpu_custom_call.1} parent=74 // pred_region
          %s3921 = sand.u32 %s199, 1
          %s3922 = scalar_lea.sflag [#allocation5], %s3921
          %s3923 = sand.u32 %s199, 1
          %s3924 = smul.addr %s3923, 8
          %s3925 = scalar_lea.vmem [#allocation6], %s3924
          %3926 = dma.done %s3922, 128
        $region79: #{tpu_custom_call.1} parent=74 // pred_fallthru
          _
      $region75: #{tpu_custom_call.1} parent=5 // pred_fallthru
        _
    $region6: #{tpu_custom_call.1} parent=1 // loop_footer
      %s23 = sadd.s32 1, %s19
    $region7: #{tpu_custom_call.1} parent=1 // loop_footer_branch
      %18 = sbr.rel target = $region3
    $region8: #{tpu_custom_call.1} parent=1 // loop_exit
      _
    %3927 = vsyncpa [#allocation4], 1
    %s3928 = scalar_lea.sflag [#allocation4], 1
    %3929 = vsyncpa %s3928, 1
    %3930 = vsyncpa [#allocation5], 1
    %s3931 = scalar_lea.sflag [#allocation5], 1
    %3932 = vsyncpa %s3931, 1

</llo_original>
